<compile_context>
chip_gen: v7x
topology: tpu7x:2x2x1
jax: 0.10.0
libtpu: 0.0.40
codegen_flags: <defaults>
</compile_context>

<pallas_src>
import jax
import jax.numpy as jnp
from jax.experimental import pallas as pl
from jax.experimental.pallas import tpu as pltpu


# ----------------------------------------------------------------------------- kernel
def decoder_kernel(hflat_ref, yt_ref, wbig_ref, scal_ref, out_ref):
    BW, E = hflat_ref.shape
    Wn = yt_ref.shape[0]
    B = BW // Wn
    D = E                         # module requires encoder_size == decoder_size
    G = 4 * D                     # packed LSTM gate width

    # ---- hoisted parameter loads (static slices of the single packed matrix) ----
    w_comb = wbig_ref[0:D, :]                      # (D, G+E)  [Whh i|f|g|o | Ww_h]
    wu     = wbig_ref[D:2 * D, 0:E]                # (E, E)    linear_u weight
    ww_c   = wbig_ref[D:2 * D, E:2 * E]            # (D, E)    linear_w, c part
    r0 = 2 * D
    bu   = wbig_ref[r0:r0 + 1, 0:E]                # (1, E)
    bw   = wbig_ref[r0:r0 + 1, E:2 * E]            # (1, E)
    wv   = wbig_ref[r0:r0 + 1, 2 * E:3 * E]        # (1, D)    linear_v weight
    wpc  = wbig_ref[r0:r0 + 1, 3 * E:4 * E]        # (1, D)    linear_p (context part)
    wy_h = wbig_ref[r0:r0 + 1, 4 * E:5 * E]        # (1, D)    linear_y, h part
    wih  = wbig_ref[r0 + 1:r0 + 2, 0:G]            # (1, 4D)   LSTM W_ih (packed gates)
    wy_c = wbig_ref[r0 + 1:r0 + 2, G:G + E]        # (1, D)    linear_y, c part
    bl   = wbig_ref[r0 + 2:r0 + 3, 0:G]            # (1, 4D)   b_ih + b_hh (packed gates)

    wp0 = scal_ref[0]                              # linear_p weight on y_prev (scalar)
    bp  = scal_ref[1]                              # linear_p bias             (scalar)
    by  = scal_ref[2]                              # linear_y bias             (scalar)

    # ---- prologue: one MXU call for linear_u over the whole batch-major slab ----
    h_flat = hflat_ref[...]                                               # (B*W, E)
    u_flat = jnp.dot(h_flat, wu, preferred_element_type=jnp.float32) + bu # (B*W, E)

    # batch-major 3-D views via W-row (sublane-aligned for W % 8 == 0) slices
    h_bm = jnp.stack([h_flat[b * Wn:(b + 1) * Wn, :] for b in range(B)], axis=0)  # (B,W,E)
    u_bm = jnp.stack([u_flat[b * Wn:(b + 1) * Wn, :] for b in range(B)], axis=0)  # (B,W,E)

    # hoisted broadcast of the linear_v weight (JAX does not CSE broadcast_in_dim)
    wv_b = jnp.broadcast_to(wv[None, :, :], (B, Wn, E))                            # (B,W,E)

    def step(i, carry):
        h, c = carry                                                     # (B,D), (B,D)

        # ---- fused per-step MXU: 2 dots instead of 6 ----
        hw = jnp.dot(h, w_comb, preferred_element_type=jnp.float32)     # (B, G+E)
        cw = jnp.dot(c, ww_c, preferred_element_type=jnp.float32)       # (B, E)
        gates_h = hw[:, 0:G]                                            # (B, 4D)
        w_out = hw[:, G:G + E] + cw + bw                                # (B, E)

        # ---- temporal attention over the window (batch-major) ----
        t = jnp.tanh(w_out[:, None, :] + u_bm)                          # (B,W,E)
        scores = jnp.sum(t * wv_b, axis=-1)                             # (B,W)
        m = jnp.max(scores, axis=-1, keepdims=True)
        e = jnp.exp(scores - m)
        denom = jnp.sum(e, axis=-1, keepdims=True)
        beta = e * pl.reciprocal(denom, approx=True)                    # softmax over W
        context = jnp.sum(beta[:, :, None] * h_bm, axis=1)              # (B,E)

        # ---- y_tilde = linear_p(cat(y_prev, context)) ----
        y_prev = yt_ref[i - 1]                                          # (B,1)
        y_tilde = (y_prev * wp0
                   + jnp.sum(context * wpc, axis=1, keepdims=True)
                   + bp)                                                # (B,1)

        # ---- one LSTM step, gates packed in a single 4D-wide lane block ----
        gates = gates_h + y_tilde * wih + bl                            # (B, 4D)
        i_g = jax.nn.sigmoid(gates[:, 0 * D:1 * D])
        f_g = jax.nn.sigmoid(gates[:, 1 * D:2 * D])
        g_g = jnp.tanh(gates[:, 2 * D:3 * D])
        o_g = jax.nn.sigmoid(gates[:, 3 * D:4 * D])
        c_new = f_g * c + i_g * g_g
        h_new = o_g * jnp.tanh(c_new)
        return h_new, c_new

    h0 = jnp.zeros((B, D), jnp.float32)
    c0 = jnp.zeros((B, D), jnp.float32)
    steps = Wn - 1
    # Full unroll only for small windows; cap otherwise to keep vreg pressure bounded.
    unroll = max(1, steps) if steps <= 8 else 4
    h_last, c_last = jax.lax.fori_loop(1, Wn, step, (h0, c0), unroll=unroll)

    # linear_y(cat(h, c)) with Wy pre-split (no lane concat)
    out_ref[...] = (jnp.sum(h_last * wy_h + c_last * wy_c, axis=1, keepdims=True) + by)


# ----------------------------------------------------------------------------- wrapper
def decoder_forward(params, x, h_encoder, y):
    """Mirrors Decoder.forward(x, h_encoder, y); returns shape (batch,)."""
    window, batch = x.shape[0], x.shape[1]
    assert h_encoder.shape[0] == window and h_encoder.shape[1] == batch
    E = h_encoder.shape[2]
    D = params['Whh'].shape[0]
    assert E == D, "module (like the PyTorch original) requires encoder_size == decoder_size"
    G = 4 * D
    WC = G + E                                # packed-weight lane width

    f32 = jnp.float32
    # batch-major flat encoder slab: row b*W + w == h_encoder[w, b, :]
    h_flat = jnp.transpose(h_encoder, (1, 0, 2)).reshape(batch * window, E).astype(f32)
    yt = jnp.transpose(y, (1, 0))[:, :, None].astype(f32)                # (W, B, 1)

    def pad_row(row):                          # (1, w) -> (1, WC)
        return jnp.pad(row, ((0, 0), (0, WC - row.shape[1])))

    Whh = params['Whh'].astype(f32)            # (D, 4D) gate order i,f,g,o
    Ww = params['Ww'].astype(f32)              # (2D, E)
    Wu = params['Wu'].astype(f32)              # (E, E)
    Wy = params['Wy'].astype(f32)              # (2D, 1)

    # ---- single packed parameter matrix: (2D + 3, 4D + E) ----
    # TODO(synk): for v6e/v7x, store the matrix rows as bf16 (dots keep f32 accumulate)
    #             to halve weight DMA/VMEM once sizes grow; kept f32 at toy sizes.
    w_big = jnp.concatenate([
        jnp.concatenate([Whh, Ww[:D, :]], axis=1),                               # (D, WC)
        jnp.concatenate([Wu, Ww[D:, :], jnp.zeros((D, WC - 2 * E), f32)], axis=1),  # (D, WC)
        pad_row(jnp.concatenate([params['bu'], params['bw'],
                                 params['Wv'].T, params['Wp'][1:, :].T,
                                 Wy[:D, :].T], axis=1)),                         # (1, WC)
        pad_row(jnp.concatenate([params['Wih'], Wy[D:, :].T], axis=1)),          # (1, WC)
        pad_row(params['bih'] + params['bhh']),                                  # (1, WC)
    ], axis=0).astype(f32)

    # ---- true scalars go to SMEM ----
    scalars = jnp.array([params['Wp'][0, 0], params['bp'][0, 0], params['by'][0, 0]],
                        dtype=f32)                                               # (3,)

    # ---- advisory cost estimate ----
    steps = window - 1
    flops = int(2 * window * batch * E * E                     # linear_u
                + steps * (2 * batch * D * (G + E)             # fused h dot
                           + 2 * batch * D * E                 # c dot
                           + 10 * window * batch * E           # attention elementwise
                           + 20 * batch * D))                  # gate/state elementwise
    transcendentals = int(steps * (window * batch * E          # tanh(w_out + u)
                                   + window * batch            # exp (softmax)
                                   + 6 * batch * D))           # gate sigmoids / tanh
    bytes_accessed = int(4 * (h_flat.size + yt.size + w_big.size + scalars.size + batch))
    cost = pl.CostEstimate(flops=flops, transcendentals=transcendentals,
                           bytes_accessed=bytes_accessed)

    vmem = pl.BlockSpec(memory_space=pltpu.MemorySpace.VMEM)
    smem = pl.BlockSpec(memory_space=pltpu.MemorySpace.SMEM)
    out = pl.pallas_call(
        decoder_kernel,
        out_shape=jax.ShapeDtypeStruct((batch, 1), f32),
        in_specs=[vmem, vmem, vmem, smem],
        out_specs=vmem,
        cost_estimate=cost,
    )(h_flat, yt, w_big, scalars)
    return out[:, 0]


# ----------------------------------------------------------------------------- pure-JAX reference
def decoder_reference(params, x, h_encoder, y):
    window, batch = x.shape[0], x.shape[1]
    D = params['Whh'].shape[0]
    h = jnp.zeros((batch, D), jnp.float32)
    c = jnp.zeros((batch, D), jnp.float32)
    u_out = jnp.einsum('wbe,ef->wbf', h_encoder, params['Wu']) + params['bu']
    for i in range(1, window):
        y_prev = y[:, i - 1]
        w_out = jnp.concatenate([h, c], axis=1) @ params['Ww'] + params['bw']
        v_out = jnp.einsum('wbe,eo->wbo', jnp.tanh(w_out[None] + u_out),
                           params['Wv'])[:, :, 0]
        beta = jax.nn.softmax(v_out, axis=0)
        context = jnp.sum(beta[:, :, None] * h_encoder, axis=0)
        y_tilde = (jnp.concatenate([y_prev[:, None], context], axis=1)
                   @ params['Wp'] + params['bp'])
        gates = (y_tilde @ params['Wih'] + params['bih']
                 + h @ params['Whh'] + params['bhh'])
        i_g = jax.nn.sigmoid(gates[:, 0 * D:1 * D])
        f_g = jax.nn.sigmoid(gates[:, 1 * D:2 * D])
        g_g = jnp.tanh(gates[:, 2 * D:3 * D])
        o_g = jax.nn.sigmoid(gates[:, 3 * D:4 * D])
        c = f_g * c + i_g * g_g
        h = o_g * jnp.tanh(c)
    return (jnp.concatenate([h, c], axis=1) @ params['Wy'] + params['by'])[:, 0]


# ----------------------------------------------------------------------------- params
def init_params(key, encoder_size, decoder_size):
    E, D = encoder_size, decoder_size
    ks = jax.random.split(key, 13)

    def u(k, shape, fan_in):
        bound = 1.0 / jnp.sqrt(jnp.float32(fan_in))
        return jax.random.uniform(k, shape, jnp.float32, -bound, bound)

    return dict(
        Wu=u(ks[0], (E, E), E),            bu=u(ks[1], (1, E), E),
        Ww=u(ks[2], (2 * D, E), 2 * D),    bw=u(ks[3], (1, E), 2 * D),
        Wv=u(ks[4], (D, 1), D),
        Wp=u(ks[5], (D + 1, 1), D + 1),    bp=u(ks[6], (1, 1), D + 1),
        Wih=u(ks[7], (1, 4 * D), D),       bih=u(ks[8], (1, 4 * D), D),
        Whh=u(ks[9], (D, 4 * D), D),       bhh=u(ks[10], (1, 4 * D), D),
        Wy=u(ks[11], (2 * D, 1), 2 * D),   by=u(ks[12], (1, 1), 2 * D),
    )


# ----------------------------------------------------------------------------- main
if __name__ == "__main__":
    encoder_size = 32
    decoder_size = 32     # module requires encoder_size == decoder_size (see note above)
    window = 8
    batch = 2

    key = jax.random.PRNGKey(0)
    kp, kx, kh, ky = jax.random.split(key, 4)
    params = init_params(kp, encoder_size, decoder_size)

    x = jax.random.normal(kx, (window, batch, 1), jnp.float32)          # only sizes used
    h_encoder = jax.random.normal(kh, (window, batch, encoder_size), jnp.float32)
    y = jax.random.normal(ky, (batch, window), jnp.float32)

    out = decoder_forward(params, x, h_encoder, y)
    out = jax.block_until_ready(out)

    ref = decoder_reference(params, x, h_encoder, y)
    assert out.shape == (batch,)
    # tolerance reflects default-precision (bf16-pass) MXU matmuls in both paths plus the
    # approximate softmax reciprocal compounded over the window-1 serial recurrence steps
    assert jnp.allclose(out, ref, atol=5e-3, rtol=5e-3), (out, ref)

    print("KERNEL_OK")
</pallas_src>

<mosaic_0001>
module attributes {stable_mosaic.version = 11 : i64} {
  func.func @decoder_kernel(%arg0: memref<16x32xf32, #tpu.memory_space<vmem>>, %arg1: memref<8x2x1xf32, #tpu.memory_space<vmem>>, %arg2: memref<67x160xf32, #tpu.memory_space<vmem>>, %arg3: memref<3xf32, #tpu.memory_space<smem>>, %arg4: memref<2x1xf32, #tpu.memory_space<vmem>>) attributes {dimension_semantics = [], scalar_prefetch = 0 : i64, scratch_operands = 0 : i64, tpu.core_type = #tpu.core_type<tc>} {
    %c0 = arith.constant 0 : index
    %c0_0 = arith.constant 0 : index
    %0 = vector.load %arg2[%c0, %c0_0] : memref<67x160xf32, #tpu.memory_space<vmem>>, vector<32x160xf32>
    %c32 = arith.constant 32 : index
    %c0_1 = arith.constant 0 : index
    %1 = vector.load %arg2[%c32, %c0_1] : memref<67x160xf32, #tpu.memory_space<vmem>>, vector<32x32xf32>
    %c32_2 = arith.constant 32 : index
    %c32_3 = arith.constant 32 : index
    %2 = vector.load %arg2[%c32_2, %c32_3] : memref<67x160xf32, #tpu.memory_space<vmem>>, vector<32x32xf32>
    %c64 = arith.constant 64 : index
    %c0_4 = arith.constant 0 : index
    %3 = vector.load %arg2[%c64, %c0_4] : memref<67x160xf32, #tpu.memory_space<vmem>>, vector<1x32xf32>
    %c64_5 = arith.constant 64 : index
    %c32_6 = arith.constant 32 : index
    %4 = vector.load %arg2[%c64_5, %c32_6] : memref<67x160xf32, #tpu.memory_space<vmem>>, vector<1x32xf32>
    %c64_7 = arith.constant 64 : index
    %c64_8 = arith.constant 64 : index
    %5 = vector.load %arg2[%c64_7, %c64_8] : memref<67x160xf32, #tpu.memory_space<vmem>>, vector<1x32xf32>
    %c64_9 = arith.constant 64 : index
    %c96 = arith.constant 96 : index
    %6 = vector.load %arg2[%c64_9, %c96] : memref<67x160xf32, #tpu.memory_space<vmem>>, vector<1x32xf32>
    %c64_10 = arith.constant 64 : index
    %c128 = arith.constant 128 : index
    %7 = vector.load %arg2[%c64_10, %c128] : memref<67x160xf32, #tpu.memory_space<vmem>>, vector<1x32xf32>
    %c65 = arith.constant 65 : index
    %c0_11 = arith.constant 0 : index
    %8 = vector.load %arg2[%c65, %c0_11] : memref<67x160xf32, #tpu.memory_space<vmem>>, vector<1x128xf32>
    %c65_12 = arith.constant 65 : index
    %c128_13 = arith.constant 128 : index
    %9 = vector.load %arg2[%c65_12, %c128_13] : memref<67x160xf32, #tpu.memory_space<vmem>>, vector<1x32xf32>
    %c66 = arith.constant 66 : index
    %c0_14 = arith.constant 0 : index
    %10 = vector.load %arg2[%c66, %c0_14] : memref<67x160xf32, #tpu.memory_space<vmem>>, vector<1x128xf32>
    %c0_15 = arith.constant 0 : index
    %11 = memref.load %arg3[%c0_15] : memref<3xf32, #tpu.memory_space<smem>>
    %c1 = arith.constant 1 : index
    %12 = memref.load %arg3[%c1] : memref<3xf32, #tpu.memory_space<smem>>
    %c2 = arith.constant 2 : index
    %13 = memref.load %arg3[%c2] : memref<3xf32, #tpu.memory_space<smem>>
    %c0_16 = arith.constant 0 : index
    %c0_17 = arith.constant 0 : index
    %14 = vector.load %arg0[%c0_16, %c0_17] : memref<16x32xf32, #tpu.memory_space<vmem>>, vector<16x32xf32>
    %cst = arith.constant dense<0.000000e+00> : vector<16x32xf32>
    %15 = tpu.matmul %14, %1, %cst {dimension_numbers = #tpu.dot_dimension_numbers<[1], [0], [0], [1], [0, 0, 1, 1], [], []>} : vector<16x32xf32>, vector<32x32xf32>, vector<16x32xf32> -> vector<16x32xf32>
    %16 = vector.broadcast %3 : vector<1x32xf32> to vector<16x32xf32>
    %17 = arith.addf %15, %16 : vector<16x32xf32>
    %18 = vector.extract_strided_slice %14 {offsets = [0, 0], sizes = [8, 32], strides = [1, 1]} : vector<16x32xf32> to vector<8x32xf32>
    %19 = vector.extract_strided_slice %14 {offsets = [8, 0], sizes = [8, 32], strides = [1, 1]} : vector<16x32xf32> to vector<8x32xf32>
    %20 = vector.shape_cast %18 : vector<8x32xf32> to vector<1x8x32xf32>
    %21 = vector.shape_cast %19 : vector<8x32xf32> to vector<1x8x32xf32>
    %22 = tpu.concatenate %20, %21 in 0 : vector<1x8x32xf32>, vector<1x8x32xf32> -> vector<2x8x32xf32>
    %23 = vector.extract_strided_slice %17 {offsets = [0, 0], sizes = [8, 32], strides = [1, 1]} : vector<16x32xf32> to vector<8x32xf32>
    %24 = vector.extract_strided_slice %17 {offsets = [8, 0], sizes = [8, 32], strides = [1, 1]} : vector<16x32xf32> to vector<8x32xf32>
    %25 = vector.shape_cast %23 : vector<8x32xf32> to vector<1x8x32xf32>
    %26 = vector.shape_cast %24 : vector<8x32xf32> to vector<1x8x32xf32>
    %27 = tpu.concatenate %25, %26 in 0 : vector<1x8x32xf32>, vector<1x8x32xf32> -> vector<2x8x32xf32>
    %28 = vector.shape_cast %5 : vector<1x32xf32> to vector<1x1x32xf32>
    %29 = vector.shape_cast %28 : vector<1x1x32xf32> to vector<1x1x32xf32>
    %30 = vector.broadcast %29 : vector<1x1x32xf32> to vector<2x8x32xf32>
    %cst_18 = arith.constant 0.000000e+00 : f32
    %31 = vector.broadcast %cst_18 : f32 to vector<2x32xf32>
    %cst_19 = arith.constant 0.000000e+00 : f32
    %32 = vector.broadcast %cst_19 : f32 to vector<2x32xf32>
    %c1_i32 = arith.constant 1 : i32
    %cst_20 = arith.constant dense<0.000000e+00> : vector<2x160xf32>
    %33 = tpu.matmul %31, %0, %cst_20 {dimension_numbers = #tpu.dot_dimension_numbers<[1], [0], [0], [1], [0, 0, 1, 1], [], []>} : vector<2x32xf32>, vector<32x160xf32>, vector<2x160xf32> -> vector<2x160xf32>
    %cst_21 = arith.constant dense<0.000000e+00> : vector<2x32xf32>
    %34 = tpu.matmul %32, %2, %cst_21 {dimension_numbers = #tpu.dot_dimension_numbers<[1], [0], [0], [1], [0, 0, 1, 1], [], []>} : vector<2x32xf32>, vector<32x32xf32>, vector<2x32xf32> -> vector<2x32xf32>
    %35 = vector.extract_strided_slice %33 {offsets = [0, 0], sizes = [2, 128], strides = [1, 1]} : vector<2x160xf32> to vector<2x128xf32>
    %36 = vector.extract_strided_slice %33 {offsets = [0, 128], sizes = [2, 32], strides = [1, 1]} : vector<2x160xf32> to vector<2x32xf32>
    %37 = arith.addf %36, %34 : vector<2x32xf32>
    %38 = vector.broadcast %4 : vector<1x32xf32> to vector<2x32xf32>
    %39 = arith.addf %37, %38 : vector<2x32xf32>
    %40 = vector.shape_cast %39 : vector<2x32xf32> to vector<2x1x32xf32>
    %41 = vector.broadcast %40 : vector<2x1x32xf32> to vector<2x8x32xf32>
    %42 = arith.addf %41, %27 : vector<2x8x32xf32>
    %43 = math.tanh %42 : vector<2x8x32xf32>
    %44 = arith.mulf %43, %30 : vector<2x8x32xf32>
    %cst_22 = arith.constant dense<0.000000e+00> : vector<2x8xf32>
    %45 = vector.multi_reduction <add>, %44, %cst_22 [2] : vector<2x8x32xf32> to vector<2x8xf32>
    %cst_23 = arith.constant dense<0xFF800000> : vector<2xf32>
    %46 = vector.multi_reduction <maximumf>, %45, %cst_23 [1] : vector<2x8xf32> to vector<2xf32>
    %47 = vector.shape_cast %46 : vector<2xf32> to vector<2x1xf32>
    %48 = vector.broadcast %47 : vector<2x1xf32> to vector<2x8xf32>
    %49 = arith.subf %45, %48 : vector<2x8xf32>
    %50 = math.exp %49 : vector<2x8xf32>
    %cst_24 = arith.constant dense<0.000000e+00> : vector<2xf32>
    %51 = vector.multi_reduction <add>, %50, %cst_24 [1] : vector<2x8xf32> to vector<2xf32>
    %52 = vector.shape_cast %51 : vector<2xf32> to vector<2x1xf32>
    %53 = tpu.reciprocal %52 {approx = true} : vector<2x1xf32> -> vector<2x1xf32>
    %54 = vector.broadcast %53 : vector<2x1xf32> to vector<2x8xf32>
    %55 = arith.mulf %50, %54 : vector<2x8xf32>
    %56 = vector.shape_cast %55 : vector<2x8xf32> to vector<2x8x1xf32>
    %57 = vector.broadcast %56 : vector<2x8x1xf32> to vector<2x8x32xf32>
    %58 = arith.mulf %57, %22 : vector<2x8x32xf32>
    %cst_25 = arith.constant dense<0.000000e+00> : vector<2x32xf32>
    %59 = vector.multi_reduction <add>, %58, %cst_25 [1] : vector<2x8x32xf32> to vector<2x32xf32>
    %c1_i32_26 = arith.constant 1 : i32
    %60 = arith.subi %c1_i32, %c1_i32_26 : i32
    %61 = arith.index_cast %60 : i32 to index
    %c0_27 = arith.constant 0 : index
    %c0_28 = arith.constant 0 : index
    %62 = vector.load %arg1[%61, %c0_27, %c0_28] : memref<8x2x1xf32, #tpu.memory_space<vmem>>, vector<1x2x1xf32>
    %63 = vector.shape_cast %62 : vector<1x2x1xf32> to vector<2x1xf32>
    %64 = vector.broadcast %11 : f32 to vector<2x1xf32>
    %65 = arith.mulf %63, %64 : vector<2x1xf32>
    %66 = vector.broadcast %6 : vector<1x32xf32> to vector<2x32xf32>
    %67 = arith.mulf %59, %66 : vector<2x32xf32>
    %cst_29 = arith.constant dense<0.000000e+00> : vector<2xf32>
    %68 = vector.multi_reduction <add>, %67, %cst_29 [1] : vector<2x32xf32> to vector<2xf32>
    %69 = vector.shape_cast %68 : vector<2xf32> to vector<2x1xf32>
    %70 = arith.addf %65, %69 : vector<2x1xf32>
    %71 = vector.broadcast %12 : f32 to vector<2x1xf32>
    %72 = arith.addf %70, %71 : vector<2x1xf32>
    %73 = vector.broadcast %72 : vector<2x1xf32> to vector<2x128xf32>
    %74 = vector.broadcast %8 : vector<1x128xf32> to vector<2x128xf32>
    %75 = arith.mulf %73, %74 : vector<2x128xf32>
    %76 = arith.addf %35, %75 : vector<2x128xf32>
    %77 = vector.broadcast %10 : vector<1x128xf32> to vector<2x128xf32>
    %78 = arith.addf %76, %77 : vector<2x128xf32>
    %79 = vector.extract_strided_slice %78 {offsets = [0, 0], sizes = [2, 32], strides = [1, 1]} : vector<2x128xf32> to vector<2x32xf32>
    %80 = arith.negf %79 : vector<2x32xf32>
    %81 = math.exp %80 : vector<2x32xf32>
    %cst_30 = arith.constant 1.000000e+00 : f32
    %82 = vector.broadcast %cst_30 : f32 to vector<2x32xf32>
    %83 = arith.addf %82, %81 : vector<2x32xf32>
    %84 = arith.divf %82, %83 : vector<2x32xf32>
    %85 = vector.extract_strided_slice %78 {offsets = [0, 32], sizes = [2, 32], strides = [1, 1]} : vector<2x128xf32> to vector<2x32xf32>
    %86 = arith.negf %85 : vector<2x32xf32>
    %87 = math.exp %86 : vector<2x32xf32>
    %cst_31 = arith.constant 1.000000e+00 : f32
    %88 = vector.broadcast %cst_31 : f32 to vector<2x32xf32>
    %89 = arith.addf %88, %87 : vector<2x32xf32>
    %90 = arith.divf %88, %89 : vector<2x32xf32>
    %91 = vector.extract_strided_slice %78 {offsets = [0, 64], sizes = [2, 32], strides = [1, 1]} : vector<2x128xf32> to vector<2x32xf32>
    %92 = math.tanh %91 : vector<2x32xf32>
    %93 = vector.extract_strided_slice %78 {offsets = [0, 96], sizes = [2, 32], strides = [1, 1]} : vector<2x128xf32> to vector<2x32xf32>
    %94 = arith.negf %93 : vector<2x32xf32>
    %95 = math.exp %94 : vector<2x32xf32>
    %cst_32 = arith.constant 1.000000e+00 : f32
    %96 = vector.broadcast %cst_32 : f32 to vector<2x32xf32>
    %97 = arith.addf %96, %95 : vector<2x32xf32>
    %98 = arith.divf %96, %97 : vector<2x32xf32>
    %99 = arith.mulf %90, %32 : vector<2x32xf32>
    %100 = arith.mulf %84, %92 : vector<2x32xf32>
    %101 = arith.addf %99, %100 : vector<2x32xf32>
    %102 = math.tanh %101 : vector<2x32xf32>
    %103 = arith.mulf %98, %102 : vector<2x32xf32>
    %c2_i32 = arith.constant 2 : i32
    %cst_33 = arith.constant dense<0.000000e+00> : vector<2x160xf32>
    %104 = tpu.matmul %103, %0, %cst_33 {dimension_numbers = #tpu.dot_dimension_numbers<[1], [0], [0], [1], [0, 0, 1, 1], [], []>} : vector<2x32xf32>, vector<32x160xf32>, vector<2x160xf32> -> vector<2x160xf32>
    %cst_34 = arith.constant dense<0.000000e+00> : vector<2x32xf32>
    %105 = tpu.matmul %101, %2, %cst_34 {dimension_numbers = #tpu.dot_dimension_numbers<[1], [0], [0], [1], [0, 0, 1, 1], [], []>} : vector<2x32xf32>, vector<32x32xf32>, vector<2x32xf32> -> vector<2x32xf32>
    %106 = vector.extract_strided_slice %104 {offsets = [0, 0], sizes = [2, 128], strides = [1, 1]} : vector<2x160xf32> to vector<2x128xf32>
    %107 = vector.extract_strided_slice %104 {offsets = [0, 128], sizes = [2, 32], strides = [1, 1]} : vector<2x160xf32> to vector<2x32xf32>
    %108 = arith.addf %107, %105 : vector<2x32xf32>
    %109 = vector.broadcast %4 : vector<1x32xf32> to vector<2x32xf32>
    %110 = arith.addf %108, %109 : vector<2x32xf32>
    %111 = vector.shape_cast %110 : vector<2x32xf32> to vector<2x1x32xf32>
    %112 = vector.broadcast %111 : vector<2x1x32xf32> to vector<2x8x32xf32>
    %113 = arith.addf %112, %27 : vector<2x8x32xf32>
    %114 = math.tanh %113 : vector<2x8x32xf32>
    %115 = arith.mulf %114, %30 : vector<2x8x32xf32>
    %cst_35 = arith.constant dense<0.000000e+00> : vector<2x8xf32>
    %116 = vector.multi_reduction <add>, %115, %cst_35 [2] : vector<2x8x32xf32> to vector<2x8xf32>
    %cst_36 = arith.constant dense<0xFF800000> : vector<2xf32>
    %117 = vector.multi_reduction <maximumf>, %116, %cst_36 [1] : vector<2x8xf32> to vector<2xf32>
    %118 = vector.shape_cast %117 : vector<2xf32> to vector<2x1xf32>
    %119 = vector.broadcast %118 : vector<2x1xf32> to vector<2x8xf32>
    %120 = arith.subf %116, %119 : vector<2x8xf32>
    %121 = math.exp %120 : vector<2x8xf32>
    %cst_37 = arith.constant dense<0.000000e+00> : vector<2xf32>
    %122 = vector.multi_reduction <add>, %121, %cst_37 [1] : vector<2x8xf32> to vector<2xf32>
    %123 = vector.shape_cast %122 : vector<2xf32> to vector<2x1xf32>
    %124 = tpu.reciprocal %123 {approx = true} : vector<2x1xf32> -> vector<2x1xf32>
    %125 = vector.broadcast %124 : vector<2x1xf32> to vector<2x8xf32>
    %126 = arith.mulf %121, %125 : vector<2x8xf32>
    %127 = vector.shape_cast %126 : vector<2x8xf32> to vector<2x8x1xf32>
    %128 = vector.broadcast %127 : vector<2x8x1xf32> to vector<2x8x32xf32>
    %129 = arith.mulf %128, %22 : vector<2x8x32xf32>
    %cst_38 = arith.constant dense<0.000000e+00> : vector<2x32xf32>
    %130 = vector.multi_reduction <add>, %129, %cst_38 [1] : vector<2x8x32xf32> to vector<2x32xf32>
    %c1_i32_39 = arith.constant 1 : i32
    %131 = arith.subi %c2_i32, %c1_i32_39 : i32
    %132 = arith.index_cast %131 : i32 to index
    %c0_40 = arith.constant 0 : index
    %c0_41 = arith.constant 0 : index
    %133 = vector.load %arg1[%132, %c0_40, %c0_41] : memref<8x2x1xf32, #tpu.memory_space<vmem>>, vector<1x2x1xf32>
    %134 = vector.shape_cast %133 : vector<1x2x1xf32> to vector<2x1xf32>
    %135 = vector.broadcast %11 : f32 to vector<2x1xf32>
    %136 = arith.mulf %134, %135 : vector<2x1xf32>
    %137 = vector.broadcast %6 : vector<1x32xf32> to vector<2x32xf32>
    %138 = arith.mulf %130, %137 : vector<2x32xf32>
    %cst_42 = arith.constant dense<0.000000e+00> : vector<2xf32>
    %139 = vector.multi_reduction <add>, %138, %cst_42 [1] : vector<2x32xf32> to vector<2xf32>
    %140 = vector.shape_cast %139 : vector<2xf32> to vector<2x1xf32>
    %141 = arith.addf %136, %140 : vector<2x1xf32>
    %142 = vector.broadcast %12 : f32 to vector<2x1xf32>
    %143 = arith.addf %141, %142 : vector<2x1xf32>
    %144 = vector.broadcast %143 : vector<2x1xf32> to vector<2x128xf32>
    %145 = vector.broadcast %8 : vector<1x128xf32> to vector<2x128xf32>
    %146 = arith.mulf %144, %145 : vector<2x128xf32>
    %147 = arith.addf %106, %146 : vector<2x128xf32>
    %148 = vector.broadcast %10 : vector<1x128xf32> to vector<2x128xf32>
    %149 = arith.addf %147, %148 : vector<2x128xf32>
    %150 = vector.extract_strided_slice %149 {offsets = [0, 0], sizes = [2, 32], strides = [1, 1]} : vector<2x128xf32> to vector<2x32xf32>
    %151 = arith.negf %150 : vector<2x32xf32>
    %152 = math.exp %151 : vector<2x32xf32>
    %cst_43 = arith.constant 1.000000e+00 : f32
    %153 = vector.broadcast %cst_43 : f32 to vector<2x32xf32>
    %154 = arith.addf %153, %152 : vector<2x32xf32>
    %155 = arith.divf %153, %154 : vector<2x32xf32>
    %156 = vector.extract_strided_slice %149 {offsets = [0, 32], sizes = [2, 32], strides = [1, 1]} : vector<2x128xf32> to vector<2x32xf32>
    %157 = arith.negf %156 : vector<2x32xf32>
    %158 = math.exp %157 : vector<2x32xf32>
    %cst_44 = arith.constant 1.000000e+00 : f32
    %159 = vector.broadcast %cst_44 : f32 to vector<2x32xf32>
    %160 = arith.addf %159, %158 : vector<2x32xf32>
    %161 = arith.divf %159, %160 : vector<2x32xf32>
    %162 = vector.extract_strided_slice %149 {offsets = [0, 64], sizes = [2, 32], strides = [1, 1]} : vector<2x128xf32> to vector<2x32xf32>
    %163 = math.tanh %162 : vector<2x32xf32>
    %164 = vector.extract_strided_slice %149 {offsets = [0, 96], sizes = [2, 32], strides = [1, 1]} : vector<2x128xf32> to vector<2x32xf32>
    %165 = arith.negf %164 : vector<2x32xf32>
    %166 = math.exp %165 : vector<2x32xf32>
    %cst_45 = arith.constant 1.000000e+00 : f32
    %167 = vector.broadcast %cst_45 : f32 to vector<2x32xf32>
    %168 = arith.addf %167, %166 : vector<2x32xf32>
    %169 = arith.divf %167, %168 : vector<2x32xf32>
    %170 = arith.mulf %161, %101 : vector<2x32xf32>
    %171 = arith.mulf %155, %163 : vector<2x32xf32>
    %172 = arith.addf %170, %171 : vector<2x32xf32>
    %173 = math.tanh %172 : vector<2x32xf32>
    %174 = arith.mulf %169, %173 : vector<2x32xf32>
    %c3_i32 = arith.constant 3 : i32
    %cst_46 = arith.constant dense<0.000000e+00> : vector<2x160xf32>
    %175 = tpu.matmul %174, %0, %cst_46 {dimension_numbers = #tpu.dot_dimension_numbers<[1], [0], [0], [1], [0, 0, 1, 1], [], []>} : vector<2x32xf32>, vector<32x160xf32>, vector<2x160xf32> -> vector<2x160xf32>
    %cst_47 = arith.constant dense<0.000000e+00> : vector<2x32xf32>
    %176 = tpu.matmul %172, %2, %cst_47 {dimension_numbers = #tpu.dot_dimension_numbers<[1], [0], [0], [1], [0, 0, 1, 1], [], []>} : vector<2x32xf32>, vector<32x32xf32>, vector<2x32xf32> -> vector<2x32xf32>
    %177 = vector.extract_strided_slice %175 {offsets = [0, 0], sizes = [2, 128], strides = [1, 1]} : vector<2x160xf32> to vector<2x128xf32>
    %178 = vector.extract_strided_slice %175 {offsets = [0, 128], sizes = [2, 32], strides = [1, 1]} : vector<2x160xf32> to vector<2x32xf32>
    %179 = arith.addf %178, %176 : vector<2x32xf32>
    %180 = vector.broadcast %4 : vector<1x32xf32> to vector<2x32xf32>
    %181 = arith.addf %179, %180 : vector<2x32xf32>
    %182 = vector.shape_cast %181 : vector<2x32xf32> to vector<2x1x32xf32>
    %183 = vector.broadcast %182 : vector<2x1x32xf32> to vector<2x8x32xf32>
    %184 = arith.addf %183, %27 : vector<2x8x32xf32>
    %185 = math.tanh %184 : vector<2x8x32xf32>
    %186 = arith.mulf %185, %30 : vector<2x8x32xf32>
    %cst_48 = arith.constant dense<0.000000e+00> : vector<2x8xf32>
    %187 = vector.multi_reduction <add>, %186, %cst_48 [2] : vector<2x8x32xf32> to vector<2x8xf32>
    %cst_49 = arith.constant dense<0xFF800000> : vector<2xf32>
    %188 = vector.multi_reduction <maximumf>, %187, %cst_49 [1] : vector<2x8xf32> to vector<2xf32>
    %189 = vector.shape_cast %188 : vector<2xf32> to vector<2x1xf32>
    %190 = vector.broadcast %189 : vector<2x1xf32> to vector<2x8xf32>
    %191 = arith.subf %187, %190 : vector<2x8xf32>
    %192 = math.exp %191 : vector<2x8xf32>
    %cst_50 = arith.constant dense<0.000000e+00> : vector<2xf32>
    %193 = vector.multi_reduction <add>, %192, %cst_50 [1] : vector<2x8xf32> to vector<2xf32>
    %194 = vector.shape_cast %193 : vector<2xf32> to vector<2x1xf32>
    %195 = tpu.reciprocal %194 {approx = true} : vector<2x1xf32> -> vector<2x1xf32>
    %196 = vector.broadcast %195 : vector<2x1xf32> to vector<2x8xf32>
    %197 = arith.mulf %192, %196 : vector<2x8xf32>
    %198 = vector.shape_cast %197 : vector<2x8xf32> to vector<2x8x1xf32>
    %199 = vector.broadcast %198 : vector<2x8x1xf32> to vector<2x8x32xf32>
    %200 = arith.mulf %199, %22 : vector<2x8x32xf32>
    %cst_51 = arith.constant dense<0.000000e+00> : vector<2x32xf32>
    %201 = vector.multi_reduction <add>, %200, %cst_51 [1] : vector<2x8x32xf32> to vector<2x32xf32>
    %c1_i32_52 = arith.constant 1 : i32
    %202 = arith.subi %c3_i32, %c1_i32_52 : i32
    %203 = arith.index_cast %202 : i32 to index
    %c0_53 = arith.constant 0 : index
    %c0_54 = arith.constant 0 : index
    %204 = vector.load %arg1[%203, %c0_53, %c0_54] : memref<8x2x1xf32, #tpu.memory_space<vmem>>, vector<1x2x1xf32>
    %205 = vector.shape_cast %204 : vector<1x2x1xf32> to vector<2x1xf32>
    %206 = vector.broadcast %11 : f32 to vector<2x1xf32>
    %207 = arith.mulf %205, %206 : vector<2x1xf32>
    %208 = vector.broadcast %6 : vector<1x32xf32> to vector<2x32xf32>
    %209 = arith.mulf %201, %208 : vector<2x32xf32>
    %cst_55 = arith.constant dense<0.000000e+00> : vector<2xf32>
    %210 = vector.multi_reduction <add>, %209, %cst_55 [1] : vector<2x32xf32> to vector<2xf32>
    %211 = vector.shape_cast %210 : vector<2xf32> to vector<2x1xf32>
    %212 = arith.addf %207, %211 : vector<2x1xf32>
    %213 = vector.broadcast %12 : f32 to vector<2x1xf32>
    %214 = arith.addf %212, %213 : vector<2x1xf32>
    %215 = vector.broadcast %214 : vector<2x1xf32> to vector<2x128xf32>
    %216 = vector.broadcast %8 : vector<1x128xf32> to vector<2x128xf32>
    %217 = arith.mulf %215, %216 : vector<2x128xf32>
    %218 = arith.addf %177, %217 : vector<2x128xf32>
    %219 = vector.broadcast %10 : vector<1x128xf32> to vector<2x128xf32>
    %220 = arith.addf %218, %219 : vector<2x128xf32>
    %221 = vector.extract_strided_slice %220 {offsets = [0, 0], sizes = [2, 32], strides = [1, 1]} : vector<2x128xf32> to vector<2x32xf32>
    %222 = arith.negf %221 : vector<2x32xf32>
    %223 = math.exp %222 : vector<2x32xf32>
    %cst_56 = arith.constant 1.000000e+00 : f32
    %224 = vector.broadcast %cst_56 : f32 to vector<2x32xf32>
    %225 = arith.addf %224, %223 : vector<2x32xf32>
    %226 = arith.divf %224, %225 : vector<2x32xf32>
    %227 = vector.extract_strided_slice %220 {offsets = [0, 32], sizes = [2, 32], strides = [1, 1]} : vector<2x128xf32> to vector<2x32xf32>
    %228 = arith.negf %227 : vector<2x32xf32>
    %229 = math.exp %228 : vector<2x32xf32>
    %cst_57 = arith.constant 1.000000e+00 : f32
    %230 = vector.broadcast %cst_57 : f32 to vector<2x32xf32>
    %231 = arith.addf %230, %229 : vector<2x32xf32>
    %232 = arith.divf %230, %231 : vector<2x32xf32>
    %233 = vector.extract_strided_slice %220 {offsets = [0, 64], sizes = [2, 32], strides = [1, 1]} : vector<2x128xf32> to vector<2x32xf32>
    %234 = math.tanh %233 : vector<2x32xf32>
    %235 = vector.extract_strided_slice %220 {offsets = [0, 96], sizes = [2, 32], strides = [1, 1]} : vector<2x128xf32> to vector<2x32xf32>
    %236 = arith.negf %235 : vector<2x32xf32>
    %237 = math.exp %236 : vector<2x32xf32>
    %cst_58 = arith.constant 1.000000e+00 : f32
    %238 = vector.broadcast %cst_58 : f32 to vector<2x32xf32>
    %239 = arith.addf %238, %237 : vector<2x32xf32>
    %240 = arith.divf %238, %239 : vector<2x32xf32>
    %241 = arith.mulf %232, %172 : vector<2x32xf32>
    %242 = arith.mulf %226, %234 : vector<2x32xf32>
    %243 = arith.addf %241, %242 : vector<2x32xf32>
    %244 = math.tanh %243 : vector<2x32xf32>
    %245 = arith.mulf %240, %244 : vector<2x32xf32>
    %c4_i32 = arith.constant 4 : i32
    %cst_59 = arith.constant dense<0.000000e+00> : vector<2x160xf32>
    %246 = tpu.matmul %245, %0, %cst_59 {dimension_numbers = #tpu.dot_dimension_numbers<[1], [0], [0], [1], [0, 0, 1, 1], [], []>} : vector<2x32xf32>, vector<32x160xf32>, vector<2x160xf32> -> vector<2x160xf32>
    %cst_60 = arith.constant dense<0.000000e+00> : vector<2x32xf32>
    %247 = tpu.matmul %243, %2, %cst_60 {dimension_numbers = #tpu.dot_dimension_numbers<[1], [0], [0], [1], [0, 0, 1, 1], [], []>} : vector<2x32xf32>, vector<32x32xf32>, vector<2x32xf32> -> vector<2x32xf32>
    %248 = vector.extract_strided_slice %246 {offsets = [0, 0], sizes = [2, 128], strides = [1, 1]} : vector<2x160xf32> to vector<2x128xf32>
    %249 = vector.extract_strided_slice %246 {offsets = [0, 128], sizes = [2, 32], strides = [1, 1]} : vector<2x160xf32> to vector<2x32xf32>
    %250 = arith.addf %249, %247 : vector<2x32xf32>
    %251 = vector.broadcast %4 : vector<1x32xf32> to vector<2x32xf32>
    %252 = arith.addf %250, %251 : vector<2x32xf32>
    %253 = vector.shape_cast %252 : vector<2x32xf32> to vector<2x1x32xf32>
    %254 = vector.broadcast %253 : vector<2x1x32xf32> to vector<2x8x32xf32>
    %255 = arith.addf %254, %27 : vector<2x8x32xf32>
    %256 = math.tanh %255 : vector<2x8x32xf32>
    %257 = arith.mulf %256, %30 : vector<2x8x32xf32>
    %cst_61 = arith.constant dense<0.000000e+00> : vector<2x8xf32>
    %258 = vector.multi_reduction <add>, %257, %cst_61 [2] : vector<2x8x32xf32> to vector<2x8xf32>
    %cst_62 = arith.constant dense<0xFF800000> : vector<2xf32>
    %259 = vector.multi_reduction <maximumf>, %258, %cst_62 [1] : vector<2x8xf32> to vector<2xf32>
    %260 = vector.shape_cast %259 : vector<2xf32> to vector<2x1xf32>
    %261 = vector.broadcast %260 : vector<2x1xf32> to vector<2x8xf32>
    %262 = arith.subf %258, %261 : vector<2x8xf32>
    %263 = math.exp %262 : vector<2x8xf32>
    %cst_63 = arith.constant dense<0.000000e+00> : vector<2xf32>
    %264 = vector.multi_reduction <add>, %263, %cst_63 [1] : vector<2x8xf32> to vector<2xf32>
    %265 = vector.shape_cast %264 : vector<2xf32> to vector<2x1xf32>
    %266 = tpu.reciprocal %265 {approx = true} : vector<2x1xf32> -> vector<2x1xf32>
    %267 = vector.broadcast %266 : vector<2x1xf32> to vector<2x8xf32>
    %268 = arith.mulf %263, %267 : vector<2x8xf32>
    %269 = vector.shape_cast %268 : vector<2x8xf32> to vector<2x8x1xf32>
    %270 = vector.broadcast %269 : vector<2x8x1xf32> to vector<2x8x32xf32>
    %271 = arith.mulf %270, %22 : vector<2x8x32xf32>
    %cst_64 = arith.constant dense<0.000000e+00> : vector<2x32xf32>
    %272 = vector.multi_reduction <add>, %271, %cst_64 [1] : vector<2x8x32xf32> to vector<2x32xf32>
    %c1_i32_65 = arith.constant 1 : i32
    %273 = arith.subi %c4_i32, %c1_i32_65 : i32
    %274 = arith.index_cast %273 : i32 to index
    %c0_66 = arith.constant 0 : index
    %c0_67 = arith.constant 0 : index
    %275 = vector.load %arg1[%274, %c0_66, %c0_67] : memref<8x2x1xf32, #tpu.memory_space<vmem>>, vector<1x2x1xf32>
    %276 = vector.shape_cast %275 : vector<1x2x1xf32> to vector<2x1xf32>
    %277 = vector.broadcast %11 : f32 to vector<2x1xf32>
    %278 = arith.mulf %276, %277 : vector<2x1xf32>
    %279 = vector.broadcast %6 : vector<1x32xf32> to vector<2x32xf32>
    %280 = arith.mulf %272, %279 : vector<2x32xf32>
    %cst_68 = arith.constant dense<0.000000e+00> : vector<2xf32>
    %281 = vector.multi_reduction <add>, %280, %cst_68 [1] : vector<2x32xf32> to vector<2xf32>
    %282 = vector.shape_cast %281 : vector<2xf32> to vector<2x1xf32>
    %283 = arith.addf %278, %282 : vector<2x1xf32>
    %284 = vector.broadcast %12 : f32 to vector<2x1xf32>
    %285 = arith.addf %283, %284 : vector<2x1xf32>
    %286 = vector.broadcast %285 : vector<2x1xf32> to vector<2x128xf32>
    %287 = vector.broadcast %8 : vector<1x128xf32> to vector<2x128xf32>
    %288 = arith.mulf %286, %287 : vector<2x128xf32>
    %289 = arith.addf %248, %288 : vector<2x128xf32>
    %290 = vector.broadcast %10 : vector<1x128xf32> to vector<2x128xf32>
    %291 = arith.addf %289, %290 : vector<2x128xf32>
    %292 = vector.extract_strided_slice %291 {offsets = [0, 0], sizes = [2, 32], strides = [1, 1]} : vector<2x128xf32> to vector<2x32xf32>
    %293 = arith.negf %292 : vector<2x32xf32>
    %294 = math.exp %293 : vector<2x32xf32>
    %cst_69 = arith.constant 1.000000e+00 : f32
    %295 = vector.broadcast %cst_69 : f32 to vector<2x32xf32>
    %296 = arith.addf %295, %294 : vector<2x32xf32>
    %297 = arith.divf %295, %296 : vector<2x32xf32>
    %298 = vector.extract_strided_slice %291 {offsets = [0, 32], sizes = [2, 32], strides = [1, 1]} : vector<2x128xf32> to vector<2x32xf32>
    %299 = arith.negf %298 : vector<2x32xf32>
    %300 = math.exp %299 : vector<2x32xf32>
    %cst_70 = arith.constant 1.000000e+00 : f32
    %301 = vector.broadcast %cst_70 : f32 to vector<2x32xf32>
    %302 = arith.addf %301, %300 : vector<2x32xf32>
    %303 = arith.divf %301, %302 : vector<2x32xf32>
    %304 = vector.extract_strided_slice %291 {offsets = [0, 64], sizes = [2, 32], strides = [1, 1]} : vector<2x128xf32> to vector<2x32xf32>
    %305 = math.tanh %304 : vector<2x32xf32>
    %306 = vector.extract_strided_slice %291 {offsets = [0, 96], sizes = [2, 32], strides = [1, 1]} : vector<2x128xf32> to vector<2x32xf32>
    %307 = arith.negf %306 : vector<2x32xf32>
    %308 = math.exp %307 : vector<2x32xf32>
    %cst_71 = arith.constant 1.000000e+00 : f32
    %309 = vector.broadcast %cst_71 : f32 to vector<2x32xf32>
    %310 = arith.addf %309, %308 : vector<2x32xf32>
    %311 = arith.divf %309, %310 : vector<2x32xf32>
    %312 = arith.mulf %303, %243 : vector<2x32xf32>
    %313 = arith.mulf %297, %305 : vector<2x32xf32>
    %314 = arith.addf %312, %313 : vector<2x32xf32>
    %315 = math.tanh %314 : vector<2x32xf32>
    %316 = arith.mulf %311, %315 : vector<2x32xf32>
    %c5_i32 = arith.constant 5 : i32
    %cst_72 = arith.constant dense<0.000000e+00> : vector<2x160xf32>
    %317 = tpu.matmul %316, %0, %cst_72 {dimension_numbers = #tpu.dot_dimension_numbers<[1], [0], [0], [1], [0, 0, 1, 1], [], []>} : vector<2x32xf32>, vector<32x160xf32>, vector<2x160xf32> -> vector<2x160xf32>
    %cst_73 = arith.constant dense<0.000000e+00> : vector<2x32xf32>
    %318 = tpu.matmul %314, %2, %cst_73 {dimension_numbers = #tpu.dot_dimension_numbers<[1], [0], [0], [1], [0, 0, 1, 1], [], []>} : vector<2x32xf32>, vector<32x32xf32>, vector<2x32xf32> -> vector<2x32xf32>
    %319 = vector.extract_strided_slice %317 {offsets = [0, 0], sizes = [2, 128], strides = [1, 1]} : vector<2x160xf32> to vector<2x128xf32>
    %320 = vector.extract_strided_slice %317 {offsets = [0, 128], sizes = [2, 32], strides = [1, 1]} : vector<2x160xf32> to vector<2x32xf32>
    %321 = arith.addf %320, %318 : vector<2x32xf32>
    %322 = vector.broadcast %4 : vector<1x32xf32> to vector<2x32xf32>
    %323 = arith.addf %321, %322 : vector<2x32xf32>
    %324 = vector.shape_cast %323 : vector<2x32xf32> to vector<2x1x32xf32>
    %325 = vector.broadcast %324 : vector<2x1x32xf32> to vector<2x8x32xf32>
    %326 = arith.addf %325, %27 : vector<2x8x32xf32>
    %327 = math.tanh %326 : vector<2x8x32xf32>
    %328 = arith.mulf %327, %30 : vector<2x8x32xf32>
    %cst_74 = arith.constant dense<0.000000e+00> : vector<2x8xf32>
    %329 = vector.multi_reduction <add>, %328, %cst_74 [2] : vector<2x8x32xf32> to vector<2x8xf32>
    %cst_75 = arith.constant dense<0xFF800000> : vector<2xf32>
    %330 = vector.multi_reduction <maximumf>, %329, %cst_75 [1] : vector<2x8xf32> to vector<2xf32>
    %331 = vector.shape_cast %330 : vector<2xf32> to vector<2x1xf32>
    %332 = vector.broadcast %331 : vector<2x1xf32> to vector<2x8xf32>
    %333 = arith.subf %329, %332 : vector<2x8xf32>
    %334 = math.exp %333 : vector<2x8xf32>
    %cst_76 = arith.constant dense<0.000000e+00> : vector<2xf32>
    %335 = vector.multi_reduction <add>, %334, %cst_76 [1] : vector<2x8xf32> to vector<2xf32>
    %336 = vector.shape_cast %335 : vector<2xf32> to vector<2x1xf32>
    %337 = tpu.reciprocal %336 {approx = true} : vector<2x1xf32> -> vector<2x1xf32>
    %338 = vector.broadcast %337 : vector<2x1xf32> to vector<2x8xf32>
    %339 = arith.mulf %334, %338 : vector<2x8xf32>
    %340 = vector.shape_cast %339 : vector<2x8xf32> to vector<2x8x1xf32>
    %341 = vector.broadcast %340 : vector<2x8x1xf32> to vector<2x8x32xf32>
    %342 = arith.mulf %341, %22 : vector<2x8x32xf32>
    %cst_77 = arith.constant dense<0.000000e+00> : vector<2x32xf32>
    %343 = vector.multi_reduction <add>, %342, %cst_77 [1] : vector<2x8x32xf32> to vector<2x32xf32>
    %c1_i32_78 = arith.constant 1 : i32
    %344 = arith.subi %c5_i32, %c1_i32_78 : i32
    %345 = arith.index_cast %344 : i32 to index
    %c0_79 = arith.constant 0 : index
    %c0_80 = arith.constant 0 : index
    %346 = vector.load %arg1[%345, %c0_79, %c0_80] : memref<8x2x1xf32, #tpu.memory_space<vmem>>, vector<1x2x1xf32>
    %347 = vector.shape_cast %346 : vector<1x2x1xf32> to vector<2x1xf32>
    %348 = vector.broadcast %11 : f32 to vector<2x1xf32>
    %349 = arith.mulf %347, %348 : vector<2x1xf32>
    %350 = vector.broadcast %6 : vector<1x32xf32> to vector<2x32xf32>
    %351 = arith.mulf %343, %350 : vector<2x32xf32>
    %cst_81 = arith.constant dense<0.000000e+00> : vector<2xf32>
    %352 = vector.multi_reduction <add>, %351, %cst_81 [1] : vector<2x32xf32> to vector<2xf32>
    %353 = vector.shape_cast %352 : vector<2xf32> to vector<2x1xf32>
    %354 = arith.addf %349, %353 : vector<2x1xf32>
    %355 = vector.broadcast %12 : f32 to vector<2x1xf32>
    %356 = arith.addf %354, %355 : vector<2x1xf32>
    %357 = vector.broadcast %356 : vector<2x1xf32> to vector<2x128xf32>
    %358 = vector.broadcast %8 : vector<1x128xf32> to vector<2x128xf32>
    %359 = arith.mulf %357, %358 : vector<2x128xf32>
    %360 = arith.addf %319, %359 : vector<2x128xf32>
    %361 = vector.broadcast %10 : vector<1x128xf32> to vector<2x128xf32>
    %362 = arith.addf %360, %361 : vector<2x128xf32>
    %363 = vector.extract_strided_slice %362 {offsets = [0, 0], sizes = [2, 32], strides = [1, 1]} : vector<2x128xf32> to vector<2x32xf32>
    %364 = arith.negf %363 : vector<2x32xf32>
    %365 = math.exp %364 : vector<2x32xf32>
    %cst_82 = arith.constant 1.000000e+00 : f32
    %366 = vector.broadcast %cst_82 : f32 to vector<2x32xf32>
    %367 = arith.addf %366, %365 : vector<2x32xf32>
    %368 = arith.divf %366, %367 : vector<2x32xf32>
    %369 = vector.extract_strided_slice %362 {offsets = [0, 32], sizes = [2, 32], strides = [1, 1]} : vector<2x128xf32> to vector<2x32xf32>
    %370 = arith.negf %369 : vector<2x32xf32>
    %371 = math.exp %370 : vector<2x32xf32>
    %cst_83 = arith.constant 1.000000e+00 : f32
    %372 = vector.broadcast %cst_83 : f32 to vector<2x32xf32>
    %373 = arith.addf %372, %371 : vector<2x32xf32>
    %374 = arith.divf %372, %373 : vector<2x32xf32>
    %375 = vector.extract_strided_slice %362 {offsets = [0, 64], sizes = [2, 32], strides = [1, 1]} : vector<2x128xf32> to vector<2x32xf32>
    %376 = math.tanh %375 : vector<2x32xf32>
    %377 = vector.extract_strided_slice %362 {offsets = [0, 96], sizes = [2, 32], strides = [1, 1]} : vector<2x128xf32> to vector<2x32xf32>
    %378 = arith.negf %377 : vector<2x32xf32>
    %379 = math.exp %378 : vector<2x32xf32>
    %cst_84 = arith.constant 1.000000e+00 : f32
    %380 = vector.broadcast %cst_84 : f32 to vector<2x32xf32>
    %381 = arith.addf %380, %379 : vector<2x32xf32>
    %382 = arith.divf %380, %381 : vector<2x32xf32>
    %383 = arith.mulf %374, %314 : vector<2x32xf32>
    %384 = arith.mulf %368, %376 : vector<2x32xf32>
    %385 = arith.addf %383, %384 : vector<2x32xf32>
    %386 = math.tanh %385 : vector<2x32xf32>
    %387 = arith.mulf %382, %386 : vector<2x32xf32>
    %c6_i32 = arith.constant 6 : i32
    %cst_85 = arith.constant dense<0.000000e+00> : vector<2x160xf32>
    %388 = tpu.matmul %387, %0, %cst_85 {dimension_numbers = #tpu.dot_dimension_numbers<[1], [0], [0], [1], [0, 0, 1, 1], [], []>} : vector<2x32xf32>, vector<32x160xf32>, vector<2x160xf32> -> vector<2x160xf32>
    %cst_86 = arith.constant dense<0.000000e+00> : vector<2x32xf32>
    %389 = tpu.matmul %385, %2, %cst_86 {dimension_numbers = #tpu.dot_dimension_numbers<[1], [0], [0], [1], [0, 0, 1, 1], [], []>} : vector<2x32xf32>, vector<32x32xf32>, vector<2x32xf32> -> vector<2x32xf32>
    %390 = vector.extract_strided_slice %388 {offsets = [0, 0], sizes = [2, 128], strides = [1, 1]} : vector<2x160xf32> to vector<2x128xf32>
    %391 = vector.extract_strided_slice %388 {offsets = [0, 128], sizes = [2, 32], strides = [1, 1]} : vector<2x160xf32> to vector<2x32xf32>
    %392 = arith.addf %391, %389 : vector<2x32xf32>
    %393 = vector.broadcast %4 : vector<1x32xf32> to vector<2x32xf32>
    %394 = arith.addf %392, %393 : vector<2x32xf32>
    %395 = vector.shape_cast %394 : vector<2x32xf32> to vector<2x1x32xf32>
    %396 = vector.broadcast %395 : vector<2x1x32xf32> to vector<2x8x32xf32>
    %397 = arith.addf %396, %27 : vector<2x8x32xf32>
    %398 = math.tanh %397 : vector<2x8x32xf32>
    %399 = arith.mulf %398, %30 : vector<2x8x32xf32>
    %cst_87 = arith.constant dense<0.000000e+00> : vector<2x8xf32>
    %400 = vector.multi_reduction <add>, %399, %cst_87 [2] : vector<2x8x32xf32> to vector<2x8xf32>
    %cst_88 = arith.constant dense<0xFF800000> : vector<2xf32>
    %401 = vector.multi_reduction <maximumf>, %400, %cst_88 [1] : vector<2x8xf32> to vector<2xf32>
    %402 = vector.shape_cast %401 : vector<2xf32> to vector<2x1xf32>
    %403 = vector.broadcast %402 : vector<2x1xf32> to vector<2x8xf32>
    %404 = arith.subf %400, %403 : vector<2x8xf32>
    %405 = math.exp %404 : vector<2x8xf32>
    %cst_89 = arith.constant dense<0.000000e+00> : vector<2xf32>
    %406 = vector.multi_reduction <add>, %405, %cst_89 [1] : vector<2x8xf32> to vector<2xf32>
    %407 = vector.shape_cast %406 : vector<2xf32> to vector<2x1xf32>
    %408 = tpu.reciprocal %407 {approx = true} : vector<2x1xf32> -> vector<2x1xf32>
    %409 = vector.broadcast %408 : vector<2x1xf32> to vector<2x8xf32>
    %410 = arith.mulf %405, %409 : vector<2x8xf32>
    %411 = vector.shape_cast %410 : vector<2x8xf32> to vector<2x8x1xf32>
    %412 = vector.broadcast %411 : vector<2x8x1xf32> to vector<2x8x32xf32>
    %413 = arith.mulf %412, %22 : vector<2x8x32xf32>
    %cst_90 = arith.constant dense<0.000000e+00> : vector<2x32xf32>
    %414 = vector.multi_reduction <add>, %413, %cst_90 [1] : vector<2x8x32xf32> to vector<2x32xf32>
    %c1_i32_91 = arith.constant 1 : i32
    %415 = arith.subi %c6_i32, %c1_i32_91 : i32
    %416 = arith.index_cast %415 : i32 to index
    %c0_92 = arith.constant 0 : index
    %c0_93 = arith.constant 0 : index
    %417 = vector.load %arg1[%416, %c0_92, %c0_93] : memref<8x2x1xf32, #tpu.memory_space<vmem>>, vector<1x2x1xf32>
    %418 = vector.shape_cast %417 : vector<1x2x1xf32> to vector<2x1xf32>
    %419 = vector.broadcast %11 : f32 to vector<2x1xf32>
    %420 = arith.mulf %418, %419 : vector<2x1xf32>
    %421 = vector.broadcast %6 : vector<1x32xf32> to vector<2x32xf32>
    %422 = arith.mulf %414, %421 : vector<2x32xf32>
    %cst_94 = arith.constant dense<0.000000e+00> : vector<2xf32>
    %423 = vector.multi_reduction <add>, %422, %cst_94 [1] : vector<2x32xf32> to vector<2xf32>
    %424 = vector.shape_cast %423 : vector<2xf32> to vector<2x1xf32>
    %425 = arith.addf %420, %424 : vector<2x1xf32>
    %426 = vector.broadcast %12 : f32 to vector<2x1xf32>
    %427 = arith.addf %425, %426 : vector<2x1xf32>
    %428 = vector.broadcast %427 : vector<2x1xf32> to vector<2x128xf32>
    %429 = vector.broadcast %8 : vector<1x128xf32> to vector<2x128xf32>
    %430 = arith.mulf %428, %429 : vector<2x128xf32>
    %431 = arith.addf %390, %430 : vector<2x128xf32>
    %432 = vector.broadcast %10 : vector<1x128xf32> to vector<2x128xf32>
    %433 = arith.addf %431, %432 : vector<2x128xf32>
    %434 = vector.extract_strided_slice %433 {offsets = [0, 0], sizes = [2, 32], strides = [1, 1]} : vector<2x128xf32> to vector<2x32xf32>
    %435 = arith.negf %434 : vector<2x32xf32>
    %436 = math.exp %435 : vector<2x32xf32>
    %cst_95 = arith.constant 1.000000e+00 : f32
    %437 = vector.broadcast %cst_95 : f32 to vector<2x32xf32>
    %438 = arith.addf %437, %436 : vector<2x32xf32>
    %439 = arith.divf %437, %438 : vector<2x32xf32>
    %440 = vector.extract_strided_slice %433 {offsets = [0, 32], sizes = [2, 32], strides = [1, 1]} : vector<2x128xf32> to vector<2x32xf32>
    %441 = arith.negf %440 : vector<2x32xf32>
    %442 = math.exp %441 : vector<2x32xf32>
    %cst_96 = arith.constant 1.000000e+00 : f32
    %443 = vector.broadcast %cst_96 : f32 to vector<2x32xf32>
    %444 = arith.addf %443, %442 : vector<2x32xf32>
    %445 = arith.divf %443, %444 : vector<2x32xf32>
    %446 = vector.extract_strided_slice %433 {offsets = [0, 64], sizes = [2, 32], strides = [1, 1]} : vector<2x128xf32> to vector<2x32xf32>
    %447 = math.tanh %446 : vector<2x32xf32>
    %448 = vector.extract_strided_slice %433 {offsets = [0, 96], sizes = [2, 32], strides = [1, 1]} : vector<2x128xf32> to vector<2x32xf32>
    %449 = arith.negf %448 : vector<2x32xf32>
    %450 = math.exp %449 : vector<2x32xf32>
    %cst_97 = arith.constant 1.000000e+00 : f32
    %451 = vector.broadcast %cst_97 : f32 to vector<2x32xf32>
    %452 = arith.addf %451, %450 : vector<2x32xf32>
    %453 = arith.divf %451, %452 : vector<2x32xf32>
    %454 = arith.mulf %445, %385 : vector<2x32xf32>
    %455 = arith.mulf %439, %447 : vector<2x32xf32>
    %456 = arith.addf %454, %455 : vector<2x32xf32>
    %457 = math.tanh %456 : vector<2x32xf32>
    %458 = arith.mulf %453, %457 : vector<2x32xf32>
    %c7_i32 = arith.constant 7 : i32
    %cst_98 = arith.constant dense<0.000000e+00> : vector<2x160xf32>
    %459 = tpu.matmul %458, %0, %cst_98 {dimension_numbers = #tpu.dot_dimension_numbers<[1], [0], [0], [1], [0, 0, 1, 1], [], []>} : vector<2x32xf32>, vector<32x160xf32>, vector<2x160xf32> -> vector<2x160xf32>
    %cst_99 = arith.constant dense<0.000000e+00> : vector<2x32xf32>
    %460 = tpu.matmul %456, %2, %cst_99 {dimension_numbers = #tpu.dot_dimension_numbers<[1], [0], [0], [1], [0, 0, 1, 1], [], []>} : vector<2x32xf32>, vector<32x32xf32>, vector<2x32xf32> -> vector<2x32xf32>
    %461 = vector.extract_strided_slice %459 {offsets = [0, 0], sizes = [2, 128], strides = [1, 1]} : vector<2x160xf32> to vector<2x128xf32>
    %462 = vector.extract_strided_slice %459 {offsets = [0, 128], sizes = [2, 32], strides = [1, 1]} : vector<2x160xf32> to vector<2x32xf32>
    %463 = arith.addf %462, %460 : vector<2x32xf32>
    %464 = vector.broadcast %4 : vector<1x32xf32> to vector<2x32xf32>
    %465 = arith.addf %463, %464 : vector<2x32xf32>
    %466 = vector.shape_cast %465 : vector<2x32xf32> to vector<2x1x32xf32>
    %467 = vector.broadcast %466 : vector<2x1x32xf32> to vector<2x8x32xf32>
    %468 = arith.addf %467, %27 : vector<2x8x32xf32>
    %469 = math.tanh %468 : vector<2x8x32xf32>
    %470 = arith.mulf %469, %30 : vector<2x8x32xf32>
    %cst_100 = arith.constant dense<0.000000e+00> : vector<2x8xf32>
    %471 = vector.multi_reduction <add>, %470, %cst_100 [2] : vector<2x8x32xf32> to vector<2x8xf32>
    %cst_101 = arith.constant dense<0xFF800000> : vector<2xf32>
    %472 = vector.multi_reduction <maximumf>, %471, %cst_101 [1] : vector<2x8xf32> to vector<2xf32>
    %473 = vector.shape_cast %472 : vector<2xf32> to vector<2x1xf32>
    %474 = vector.broadcast %473 : vector<2x1xf32> to vector<2x8xf32>
    %475 = arith.subf %471, %474 : vector<2x8xf32>
    %476 = math.exp %475 : vector<2x8xf32>
    %cst_102 = arith.constant dense<0.000000e+00> : vector<2xf32>
    %477 = vector.multi_reduction <add>, %476, %cst_102 [1] : vector<2x8xf32> to vector<2xf32>
    %478 = vector.shape_cast %477 : vector<2xf32> to vector<2x1xf32>
    %479 = tpu.reciprocal %478 {approx = true} : vector<2x1xf32> -> vector<2x1xf32>
    %480 = vector.broadcast %479 : vector<2x1xf32> to vector<2x8xf32>
    %481 = arith.mulf %476, %480 : vector<2x8xf32>
    %482 = vector.shape_cast %481 : vector<2x8xf32> to vector<2x8x1xf32>
    %483 = vector.broadcast %482 : vector<2x8x1xf32> to vector<2x8x32xf32>
    %484 = arith.mulf %483, %22 : vector<2x8x32xf32>
    %cst_103 = arith.constant dense<0.000000e+00> : vector<2x32xf32>
    %485 = vector.multi_reduction <add>, %484, %cst_103 [1] : vector<2x8x32xf32> to vector<2x32xf32>
    %c1_i32_104 = arith.constant 1 : i32
    %486 = arith.subi %c7_i32, %c1_i32_104 : i32
    %487 = arith.index_cast %486 : i32 to index
    %c0_105 = arith.constant 0 : index
    %c0_106 = arith.constant 0 : index
    %488 = vector.load %arg1[%487, %c0_105, %c0_106] : memref<8x2x1xf32, #tpu.memory_space<vmem>>, vector<1x2x1xf32>
    %489 = vector.shape_cast %488 : vector<1x2x1xf32> to vector<2x1xf32>
    %490 = vector.broadcast %11 : f32 to vector<2x1xf32>
    %491 = arith.mulf %489, %490 : vector<2x1xf32>
    %492 = vector.broadcast %6 : vector<1x32xf32> to vector<2x32xf32>
    %493 = arith.mulf %485, %492 : vector<2x32xf32>
    %cst_107 = arith.constant dense<0.000000e+00> : vector<2xf32>
    %494 = vector.multi_reduction <add>, %493, %cst_107 [1] : vector<2x32xf32> to vector<2xf32>
    %495 = vector.shape_cast %494 : vector<2xf32> to vector<2x1xf32>
    %496 = arith.addf %491, %495 : vector<2x1xf32>
    %497 = vector.broadcast %12 : f32 to vector<2x1xf32>
    %498 = arith.addf %496, %497 : vector<2x1xf32>
    %499 = vector.broadcast %498 : vector<2x1xf32> to vector<2x128xf32>
    %500 = vector.broadcast %8 : vector<1x128xf32> to vector<2x128xf32>
    %501 = arith.mulf %499, %500 : vector<2x128xf32>
    %502 = arith.addf %461, %501 : vector<2x128xf32>
    %503 = vector.broadcast %10 : vector<1x128xf32> to vector<2x128xf32>
    %504 = arith.addf %502, %503 : vector<2x128xf32>
    %505 = vector.extract_strided_slice %504 {offsets = [0, 0], sizes = [2, 32], strides = [1, 1]} : vector<2x128xf32> to vector<2x32xf32>
    %506 = arith.negf %505 : vector<2x32xf32>
    %507 = math.exp %506 : vector<2x32xf32>
    %cst_108 = arith.constant 1.000000e+00 : f32
    %508 = vector.broadcast %cst_108 : f32 to vector<2x32xf32>
    %509 = arith.addf %508, %507 : vector<2x32xf32>
    %510 = arith.divf %508, %509 : vector<2x32xf32>
    %511 = vector.extract_strided_slice %504 {offsets = [0, 32], sizes = [2, 32], strides = [1, 1]} : vector<2x128xf32> to vector<2x32xf32>
    %512 = arith.negf %511 : vector<2x32xf32>
    %513 = math.exp %512 : vector<2x32xf32>
    %cst_109 = arith.constant 1.000000e+00 : f32
    %514 = vector.broadcast %cst_109 : f32 to vector<2x32xf32>
    %515 = arith.addf %514, %513 : vector<2x32xf32>
    %516 = arith.divf %514, %515 : vector<2x32xf32>
    %517 = vector.extract_strided_slice %504 {offsets = [0, 64], sizes = [2, 32], strides = [1, 1]} : vector<2x128xf32> to vector<2x32xf32>
    %518 = math.tanh %517 : vector<2x32xf32>
    %519 = vector.extract_strided_slice %504 {offsets = [0, 96], sizes = [2, 32], strides = [1, 1]} : vector<2x128xf32> to vector<2x32xf32>
    %520 = arith.negf %519 : vector<2x32xf32>
    %521 = math.exp %520 : vector<2x32xf32>
    %cst_110 = arith.constant 1.000000e+00 : f32
    %522 = vector.broadcast %cst_110 : f32 to vector<2x32xf32>
    %523 = arith.addf %522, %521 : vector<2x32xf32>
    %524 = arith.divf %522, %523 : vector<2x32xf32>
    %525 = arith.mulf %516, %456 : vector<2x32xf32>
    %526 = arith.mulf %510, %518 : vector<2x32xf32>
    %527 = arith.addf %525, %526 : vector<2x32xf32>
    %528 = math.tanh %527 : vector<2x32xf32>
    %529 = arith.mulf %524, %528 : vector<2x32xf32>
    %c7_i32_111 = arith.constant 7 : i32
    %530 = vector.broadcast %7 : vector<1x32xf32> to vector<2x32xf32>
    %531 = arith.mulf %529, %530 : vector<2x32xf32>
    %532 = vector.broadcast %9 : vector<1x32xf32> to vector<2x32xf32>
    %533 = arith.mulf %527, %532 : vector<2x32xf32>
    %534 = arith.addf %531, %533 : vector<2x32xf32>
    %cst_112 = arith.constant dense<0.000000e+00> : vector<2xf32>
    %535 = vector.multi_reduction <add>, %534, %cst_112 [1] : vector<2x32xf32> to vector<2xf32>
    %536 = vector.shape_cast %535 : vector<2xf32> to vector<2x1xf32>
    %537 = vector.broadcast %13 : f32 to vector<2x1xf32>
    %538 = arith.addf %536, %537 : vector<2x1xf32>
    %c0_113 = arith.constant 0 : index
    %c0_114 = arith.constant 0 : index
    %539 = vector.load %arg4[%c0_113, %c0_114] : memref<2x1xf32, #tpu.memory_space<vmem>>, vector<2x1xf32>
    tpu.vector_store %arg4[%c0_113, %c0_114], %538 {strides = array<i32>} : memref<2x1xf32, #tpu.memory_space<vmem>>, vector<2x1xf32>,
    return
  }
}

</mosaic_0001>

<llo_original>
// kernel: tpu_custom_call.1
$region0: #{tpu_custom_call.1}
  #allocation0 [shape = 'u32[]', space=smem, size = 0x4, offset = 0x4, fixed_abs, tag = 'smem constant byte address 0x4 - core index']
  #allocation1 [shape = 'u32[144,128]{1,0:T(1,128)}', space=vmem, size = 0x12000, scoped, tag = 'internal scratch']
  %s0 = inlined_call_operand.vmem [shape: f32[16,32], index: 0, kind: input, shape index: {}]
  %s1 = inlined_call_operand.vmem [shape: f32[8,2,1], index: 1, kind: input, shape index: {}]
  %s2 = inlined_call_operand.hbm [shape: f32[67,160], index: 2, kind: input, shape index: {}]
  %s3 = inlined_call_operand.vmem [shape: f32[3], index: 3, kind: input, shape index: {}]
  %s4 = inlined_call_operand.vmem [shape: f32[2,1], index: 4, kind: output, shape index: {}]
  %s5 = sld [smem:[#allocation0]]
  $region34: #{tpu_custom_call.1} parent=0
    _
  %s7 = ssub.s32 1, %s5
  %s8 = scalar_select 0, %s7, %s5
  $region1: #{tpu_custom_call.1} parent=0
    #allocation2 [shape = 'u8[73728]{0}', space=vmem, size = 0x12000, scoped, tag = 'input window, operand 2, single buffered']
    #allocation3 [shape = 's32[1]{0}', space=sflag, size = 0x4, scoped, tag = 'scoped memory for tpu_custom_call.1']
    #allocation4 [shape = 's32[1]{0}', space=sflag, size = 0x4, scoped, tag = 'scoped memory for tpu_custom_call.1']
    #allocation5 [shape = 'u8[512]{0}', space=smem, size = 0x200, scoped, tag = 'input window, operand 3, single buffered']
    %9 = vsyncpa [#allocation3], 0
    %10 = vsyncpa [#allocation4], 0
    // Predicated region
    $region2: #{tpu_custom_call.1} parent=1 // pred_check
      _
    $region3: #{tpu_custom_call.1} parent=1 // pred_check_branch
      %12 = sbr.rel (0) target = $region5
    $region4: #{tpu_custom_call.1} parent=1 // pred_region
      _
    $region5: #{tpu_custom_call.1} parent=1 // pred_fallthru
      _
    // Predicated region
    $region6: #{tpu_custom_call.1} parent=1 // pred_check
      _
    $region7: #{tpu_custom_call.1} parent=1 // pred_check_branch
      %14 = sbr.rel (0) target = $region9
    $region8: #{tpu_custom_call.1} parent=1 // pred_region
      _
    $region9: #{tpu_custom_call.1} parent=1 // pred_fallthru
      _
    // Predicated region
    $region10: #{tpu_custom_call.1} parent=1 // pred_check
      _
    $region11: #{tpu_custom_call.1} parent=1 // pred_check_branch
      %16 = sbr.rel (0) target = $region13
    $region12: #{tpu_custom_call.1} parent=1 // pred_region
      %s18 = ssub.s32 2304, 2304
      %19 = vsyncadd [#allocation3], %s18
      %s20 = sshll.u32 [#allocation2], 4
      %s21 = int_to_ptr.vmem [resolvable:$true] %s20
      %26 = dma.hbm_to_vmem [thread:$0]  %s2, 2304, %s21, [#allocation3], 256, 256, 16
    $region13: #{tpu_custom_call.1} parent=1 // pred_fallthru
      _
    // Predicated region
    $region14: #{tpu_custom_call.1} parent=1 // pred_check
      _
    $region15: #{tpu_custom_call.1} parent=1 // pred_check_branch
      %28 = sbr.rel (0) target = $region17
    $region16: #{tpu_custom_call.1} parent=1 // pred_region
      %s30 = ssub.s32 16, 16
      %31 = vsyncadd [#allocation4], %s30
      %s33 = sshll.u32 %s3, 4
      %s34 = int_to_ptr.vmem [resolvable:$true] %s33
      %36 = dma.vmem_to_smem %s34, 16, [#allocation5], [#allocation4]
    $region17: #{tpu_custom_call.1} parent=1 // pred_fallthru
      _
    // Predicated region
    $region18: #{tpu_custom_call.1} parent=1 // pred_check
      _
    $region19: #{tpu_custom_call.1} parent=1 // pred_check_branch
      %38 = sbr.rel (0) target = $region21
    $region20: #{tpu_custom_call.1} parent=1 // pred_region
      %39 = dma.done [#allocation3], 2304
    $region21: #{tpu_custom_call.1} parent=1 // pred_fallthru
      _
    // Predicated region
    $region22: #{tpu_custom_call.1} parent=1 // pred_check
      _
    $region23: #{tpu_custom_call.1} parent=1 // pred_check_branch
      %41 = sbr.rel (0) target = $region25
    $region24: #{tpu_custom_call.1} parent=1 // pred_region
      %42 = dma.done [#allocation4], 16
    $region25: #{tpu_custom_call.1} parent=1 // pred_fallthru
      _
    %43 = sfence
    %v44 = vld [vmem:[#allocation2] sm:$0xff]
    %v45 = vld [vmem:[#allocation2 + $0x8] sm:$0xff]
    %v46 = vld [vmem:[#allocation2 + $0x10] sm:$0xff]
    %v47 = vld [vmem:[#allocation2 + $0x18] sm:$0xff]
    %v48 = vld [vmem:[#allocation2 + $0x20] sm:$0xff]
    %v49 = vld [vmem:[#allocation2 + $0x28] sm:$0xff]
    %v50 = vld [vmem:[#allocation2 + $0x30] sm:$0xff]
    %v51 = vld [vmem:[#allocation2 + $0x38] sm:$0xff]
    %v52 = vld [vmem:[#allocation2 + $0x40] sm:$0xff]
    %v53 = vld [vmem:[#allocation2 + $0x50] sm:$0xff]
    %v54 = vld [vmem:[#allocation2 + $0x60] sm:$0xff]
    %v55 = vld [vmem:[#allocation2 + $0x70] sm:$0xff]
    %v56 = vld [vmem:[#allocation2 + $0x80] ss:$0 sm:$0xff]
    %v57 = vld [vmem:[#allocation2 + $0x88] ss:$0 sm:$0xff]
    %v58 = vld [vmem:[#allocation2 + $0x81] ss:$0 sm:$0xff]
    %v59 = vld [vmem:[#allocation2 + $0x89] ss:$0 sm:$0xff]
    %v60 = vld [vmem:[#allocation2 + $0x82] ss:$0 sm:$0xff]
    %s61 = sld [smem:[#allocation5]]
    %s62 = sld [smem:[#allocation5 + $0x1]]
    %s63 = sld [smem:[#allocation5 + $0x2]]
    %v64 = vld [vmem:[%s0] sm:$0xff]
    %v65 = vld [vmem:[%s0 + $0x8] sm:$0xff]
    %vm66 = vcmask 261120
    %v68 = vsel %vm66, %v64, 0
    %v71 = vsel %vm66, %v65, 0
    %73 = vmatprep.subr.mxu0 0.0
    %74 = vmatpush1.msra.mxu0 %v52
    %75 = vmatprep.subr.mxu0 0.0
    %76 = vmatpush1.msra.mxu0 %v53
    %77 = vmatprep.subr.mxu0 0.0
    %78 = vmatpush1.msra.mxu0 %v54
    %79 = vmatprep.subr.mxu0 0.0
    %80 = vmatpush1.msra.mxu0 %v55
    %81 = vmatprep.subr.mxu0 0.0
    %82 = vmatpush1.msra.mxu0 0.0
    %83 = vmatprep.subr.mxu0 0.0
    %84 = vmatpush1.msra.mxu0 0.0
    %85 = vmatprep.subr.mxu0 0.0
    %86 = vmatpush1.msra.mxu0 0.0
    %87 = vmatprep.subr.mxu0 0.0
    %88 = vmatpush1.msra.mxu0 0.0
    %89 = vmatprep.subr.mxu0 0.0
    %90 = vmatpush1.msra.mxu0 0.0
    %91 = vmatprep.subr.mxu0 0.0
    %92 = vmatpush1.msra.mxu0 0.0
    %93 = vmatprep.subr.mxu0 0.0
    %94 = vmatpush1.msra.mxu0 0.0
    %95 = vmatprep.subr.mxu0 0.0
    %96 = vmatpush1.msra.mxu0 0.0
    %97 = vmatprep.subr.mxu0 0.0
    %98 = vmatpush1.msra.mxu0 0.0
    %99 = vmatprep.subr.mxu0 0.0
    %100 = vmatpush1.msra.mxu0 0.0
    %101 = vmatprep.subr.mxu0 0.0
    %102 = vmatpush1.msra.mxu0 0.0
    %103 = vmatprep.subr.mxu0 0.0
    %104 = vmatpush1.msra.mxu0 0.0
    %105 = vmatprep.subr.mxu0 0.0
    %106 = vmatpush1.msra.mxu0 0.0
    %107 = vmatprep.subr.mxu0 0.0
    %108 = vmatpush1.msra.mxu0 0.0
    %109 = vmatprep.subr.mxu0 0.0
    %110 = vmatpush1.msra.mxu0 0.0
    %111 = vmatprep.subr.mxu0 0.0
    %112 = vmatpush1.msra.mxu0 0.0
    %113 = vmatprep.subr.mxu0 0.0
    %114 = vmatpush1.msra.mxu0 0.0
    %115 = vmatprep.subr.mxu0 0.0
    %116 = vmatpush1.msra.mxu0 0.0
    %117 = vmatprep.subr.mxu0 0.0
    %118 = vmatpush1.msra.mxu0 0.0
    %119 = vmatprep.subr.mxu0 0.0
    %120 = vmatpush1.msra.mxu0 0.0
    %121 = vmatprep.subr.mxu0 0.0
    %122 = vmatpush1.msra.mxu0 0.0
    %123 = vmatprep.subr.mxu0 0.0
    %124 = vmatpush1.msra.mxu0 0.0
    %125 = vmatprep.subr.mxu0 0.0
    %126 = vmatpush1.msra.mxu0 0.0
    %127 = vmatprep.subr.mxu0 0.0
    %128 = vmatpush1.msra.mxu0 0.0
    %129 = vmatprep.subr.mxu0 0.0
    %130 = vmatpush1.msra.mxu0 0.0
    %131 = vmatprep.subr.mxu0 0.0
    %132 = vmatpush1.msra.mxu0 0.0
    %133 = vmatprep.subr.mxu0 0.0
    %134 = vmatpush1.msra.mxu0 0.0
    %135 = vmatprep.subr.mxu0 0.0
    %136 = vmatpush1.msra.mxu0 0.0
    %137 = vmatprep.mubr.f32.mxu0 0.0
    %138 = vmatmul.mubr.f32.gmra.mrb[0].mxu0 %v68
    %v139 = vpop.f32.mrb[0].mxu0
    %v140 = vadd.f32 %v56, %v139
    %v141 = vpop.f32.mrb[0].mxu0
    %142 = vmatprep.mubr.f32.mxu0 0.0
    %143 = vmatmul.mubr.f32.gmra.mrb[0].mxu0 %v71
    %v144 = vpop.f32.mrb[0].mxu0
    %v145 = vadd.f32 %v56, %v144
    %v146 = vpop.f32.mrb[0].mxu0
    %147 = vdwg.mxu0
    %v149 = vsel %vm66, 0.0, 0
    %151 = vmatprep.subr.mxu0 %v45
    %152 = vmatpush1.msra.mxu0 %v44
    %153 = vmatprep.subr.mxu0 %v47
    %154 = vmatpush1.msra.mxu0 %v46
    %155 = vmatprep.subr.mxu0 %v49
    %156 = vmatpush1.msra.mxu0 %v48
    %157 = vmatprep.subr.mxu0 %v51
    %158 = vmatpush1.msra.mxu0 %v50
    %159 = vmatprep.subr.mxu0 0.0
    %160 = vmatpush1.msra.mxu0 0.0
    %161 = vmatprep.subr.mxu0 0.0
    %162 = vmatpush1.msra.mxu0 0.0
    %163 = vmatprep.subr.mxu0 0.0
    %164 = vmatpush1.msra.mxu0 0.0
    %165 = vmatprep.subr.mxu0 0.0
    %166 = vmatpush1.msra.mxu0 0.0
    %167 = vmatprep.subr.mxu0 0.0
    %168 = vmatpush1.msra.mxu0 0.0
    %169 = vmatprep.subr.mxu0 0.0
    %170 = vmatpush1.msra.mxu0 0.0
    %171 = vmatprep.subr.mxu0 0.0
    %172 = vmatpush1.msra.mxu0 0.0
    %173 = vmatprep.subr.mxu0 0.0
    %174 = vmatpush1.msra.mxu0 0.0
    %175 = vmatprep.subr.mxu0 0.0
    %176 = vmatpush1.msra.mxu0 0.0
    %177 = vmatprep.subr.mxu0 0.0
    %178 = vmatpush1.msra.mxu0 0.0
    %179 = vmatprep.subr.mxu0 0.0
    %180 = vmatpush1.msra.mxu0 0.0
    %181 = vmatprep.subr.mxu0 0.0
    %182 = vmatpush1.msra.mxu0 0.0
    %183 = vmatprep.subr.mxu0 0.0
    %184 = vmatpush1.msra.mxu0 0.0
    %185 = vmatprep.subr.mxu0 0.0
    %186 = vmatpush1.msra.mxu0 0.0
    %187 = vmatprep.subr.mxu0 0.0
    %188 = vmatpush1.msra.mxu0 0.0
    %189 = vmatprep.subr.mxu0 0.0
    %190 = vmatpush1.msra.mxu0 0.0
    %191 = vmatprep.subr.mxu0 0.0
    %192 = vmatpush1.msra.mxu0 0.0
    %193 = vmatprep.subr.mxu0 0.0
    %194 = vmatpush1.msra.mxu0 0.0
    %195 = vmatprep.subr.mxu0 0.0
    %196 = vmatpush1.msra.mxu0 0.0
    %197 = vmatprep.subr.mxu0 0.0
    %198 = vmatpush1.msra.mxu0 0.0
    %199 = vmatprep.subr.mxu0 0.0
    %200 = vmatpush1.msra.mxu0 0.0
    %201 = vmatprep.subr.mxu0 0.0
    %202 = vmatpush1.msra.mxu0 0.0
    %203 = vmatprep.subr.mxu0 0.0
    %204 = vmatpush1.msra.mxu0 0.0
    %205 = vmatprep.subr.mxu0 0.0
    %206 = vmatpush1.msra.mxu0 0.0
    %207 = vmatprep.subr.mxu0 0.0
    %208 = vmatpush1.msra.mxu0 0.0
    %209 = vmatprep.subr.mxu0 0.0
    %210 = vmatpush1.msra.mxu0 0.0
    %211 = vmatprep.subr.mxu0 0.0
    %212 = vmatpush1.msra.mxu0 0.0
    %213 = vmatprep.subr.mxu0 0.0
    %214 = vmatpush1.msra.mxu0 0.0
    %215 = vmatprep.mubr.f32.mxu0 0.0
    %216 = vmatmul.mubr.f32.gmra.mrb[0].mxu0 %v149
    %v217 = vpop.f32.mrb[0].mxu0
    %v218 = vadd.f32 0.0, %v217
    %v219 = vpop.f32.mrb[0].mxu0
    %v220 = vadd.f32 0.0, %v219
    %221 = vdwg.mxu0
    %226 = vrot.lane.b32.xlu0 %v52, 96
    %v227 = vpop.permute.xlu0 %226
    %228 = vrot.lane.b32.xlu0 %v53, 96
    %v229 = vpop.permute.xlu0 %228
    %230 = vrot.lane.b32.xlu0 %v54, 96
    %v231 = vpop.permute.xlu0 %230
    %232 = vrot.lane.b32.xlu0 %v55, 96
    %v233 = vpop.permute.xlu0 %232
    %238 = vmatprep.subr.mxu0 0.0
    %239 = vmatpush1.msra.mxu0 %v227
    %240 = vmatprep.subr.mxu0 0.0
    %241 = vmatpush1.msra.mxu0 %v229
    %242 = vmatprep.subr.mxu0 0.0
    %243 = vmatpush1.msra.mxu0 %v231
    %244 = vmatprep.subr.mxu0 0.0
    %245 = vmatpush1.msra.mxu0 %v233
    %246 = vmatprep.subr.mxu0 0.0
    %247 = vmatpush1.msra.mxu0 0.0
    %248 = vmatprep.subr.mxu0 0.0
    %249 = vmatpush1.msra.mxu0 0.0
    %250 = vmatprep.subr.mxu0 0.0
    %251 = vmatpush1.msra.mxu0 0.0
    %252 = vmatprep.subr.mxu0 0.0
    %253 = vmatpush1.msra.mxu0 0.0
    %254 = vmatprep.subr.mxu0 0.0
    %255 = vmatpush1.msra.mxu0 0.0
    %256 = vmatprep.subr.mxu0 0.0
    %257 = vmatpush1.msra.mxu0 0.0
    %258 = vmatprep.subr.mxu0 0.0
    %259 = vmatpush1.msra.mxu0 0.0
    %260 = vmatprep.subr.mxu0 0.0
    %261 = vmatpush1.msra.mxu0 0.0
    %262 = vmatprep.subr.mxu0 0.0
    %263 = vmatpush1.msra.mxu0 0.0
    %264 = vmatprep.subr.mxu0 0.0
    %265 = vmatpush1.msra.mxu0 0.0
    %266 = vmatprep.subr.mxu0 0.0
    %267 = vmatpush1.msra.mxu0 0.0
    %268 = vmatprep.subr.mxu0 0.0
    %269 = vmatpush1.msra.mxu0 0.0
    %270 = vmatprep.subr.mxu0 0.0
    %271 = vmatpush1.msra.mxu0 0.0
    %272 = vmatprep.subr.mxu0 0.0
    %273 = vmatpush1.msra.mxu0 0.0
    %274 = vmatprep.subr.mxu0 0.0
    %275 = vmatpush1.msra.mxu0 0.0
    %276 = vmatprep.subr.mxu0 0.0
    %277 = vmatpush1.msra.mxu0 0.0
    %278 = vmatprep.subr.mxu0 0.0
    %279 = vmatpush1.msra.mxu0 0.0
    %280 = vmatprep.subr.mxu0 0.0
    %281 = vmatpush1.msra.mxu0 0.0
    %282 = vmatprep.subr.mxu0 0.0
    %283 = vmatpush1.msra.mxu0 0.0
    %284 = vmatprep.subr.mxu0 0.0
    %285 = vmatpush1.msra.mxu0 0.0
    %286 = vmatprep.subr.mxu0 0.0
    %287 = vmatpush1.msra.mxu0 0.0
    %288 = vmatprep.subr.mxu0 0.0
    %289 = vmatpush1.msra.mxu0 0.0
    %290 = vmatprep.subr.mxu0 0.0
    %291 = vmatpush1.msra.mxu0 0.0
    %292 = vmatprep.subr.mxu0 0.0
    %293 = vmatpush1.msra.mxu0 0.0
    %294 = vmatprep.subr.mxu0 0.0
    %295 = vmatpush1.msra.mxu0 0.0
    %296 = vmatprep.subr.mxu0 0.0
    %297 = vmatpush1.msra.mxu0 0.0
    %298 = vmatprep.subr.mxu0 0.0
    %299 = vmatpush1.msra.mxu0 0.0
    %300 = vmatprep.subr.mxu0 0.0
    %301 = vmatpush1.msra.mxu0 0.0
    %302 = vmatprep.mubr.f32.mxu0 0.0
    %303 = vmatmul.mubr.f32.gmra.mrb[0].mxu0 %v149
    %v304 = vpop.f32.mrb[0].mxu0
    %v305 = vadd.f32 0.0, %v304
    %v306 = vpop.f32.mrb[0].mxu0
    %307 = vdwg.mxu0
    %v308 = vadd.f32 %v220, %v305
    %310 = vrot.lane.b32.xlu0 %v56, 96
    %v311 = vpop.permute.xlu0 %310
    %v313 = vadd.f32 %v308, %v311
    %v316 = vunpack.c.l.s4 1966171168
    %v317 = vunpack.c.0.s8 %v316
    %v318 = vlaneseq
    %v319 = vshrl.u32 %v318, 7
    %v320 = vsub.s32 %v317, %v319
    %v321 = vrot.slane %v313, %v320
    %v322 = vcombine.high %v321, %v321
    %v324 = vunpack.c.l.s4 1966171168
    %v325 = vunpack.c.0.s8 %v324
    %v326 = vlaneseq
    %v327 = vshrl.u32 %v326, 7
    %v328 = vsub.s32 %v325, %v327
    %v329 = vrot.slane %v321, %v328
    %v331 = vunpack.c.l.s4 1966171168
    %v332 = vunpack.c.0.s8 %v331
    %v333 = vlaneseq
    %v334 = vshrl.u32 %v333, 7
    %v335 = vsub.s32 %v332, %v334
    %v336 = vrot.slane %v322, %v335
    %v337 = vlaneseq
    %v338 = vshrl.u32 %v337, 7
    %v339 = vsub.s32 0, %v338
    %v340 = vrot.slane %v329, %v339
    %v341 = vlaneseq
    %v342 = vshrl.u32 %v341, 7
    %v343 = vsub.s32 0, %v342
    %v344 = vrot.slane %v336, %v343
    %v347 = vadd.f32 %v340, %v140
    %v348 = vadd.f32 %v344, %v145
    %v349 = vtanh.pop %v347
    %v350 = vtanh.pop %v348
    %351 = vrot.lane.b32.xlu0 %v56, 64
    %v352 = vpop.permute.xlu0 %351
    %v354 = vmul.f32 %v349, %v352
    %v355 = vmul.f32 %v350, %v352
    %v356 = vsel %vm66, %v354, 0.0
    %357 = vadd.xlane.f32.xlu0 %v356
    %v358 = vpop.xlane.xlu0 %357
    %v359 = vsel %vm66, %v355, 0.0
    %360 = vadd.xlane.f32.xlu0 %v359
    %v361 = vpop.xlane.xlu0 %360
    %v364 = vlaneseq
    %v365 = vand.u32 %v364, 127
    %v366 = vlaneseq
    %v367 = vshrl.u32 %v366, 7
    %v368 = vsub.s32 %v365, %v367
    %v369 = vrot.slane %v358, %v368
    %v370 = vlaneseq
    %v371 = vshrl.u32 %v370, 7
    %v372 = vsub.s32 %v365, %v371
    %v373 = vrot.slane %v361, %v372
    %vm374 = vcmask 1041409
    %v375 = vsel %vm374, %v373, %v369
    %vm377 = vcmask 58368
    %v378 = vsel %vm377, %v375, -inf
    %379 = vmax.xlane.f32.xlu0 %v378
    %v380 = vpop.xlane.xlu0 %379
    %v382 = vlaneseq
    %v383 = vshrl.u32 %v382, 7
    %v384 = vsub.s32 0, %v383
    %v385 = vrot.slane %v380, %v384
    %v386 = vlaneseq
    %v387 = vshrl.u32 %v386, 7
    %v388 = vsub.s32 1, %v387
    %v389 = vrot.slane %v380, %v388
    %v392 = vsub.f32 %v358, %v385
    %v393 = vsub.f32 %v361, %v389
    %v394 = vmul.f32 %v392, 1.442695
    %v395 = vpow.pop %v394
    %v396 = vmul.f32 %v393, 1.442695
    %v397 = vpow.pop %v396
    %400 = vset.pattern.permute.xlu0 0
    %401 = vperm.xlu0 %400, %v395
    %v402 = vpop.permute.xlu0 %401
    %403 = vset.pattern.permute.xlu0 0
    %404 = vperm.xlu0 %403, %v397
    %v405 = vpop.permute.xlu0 %404
    %v406 = vlaneseq
    %v407 = vshrl.u32 %v406, 7
    %v408 = vsub.s32 %v365, %v407
    %v409 = vrot.slane %v402, %v408
    %v410 = vlaneseq
    %v411 = vshrl.u32 %v410, 7
    %v412 = vsub.s32 %v365, %v411
    %v413 = vrot.slane %v405, %v412
    %v414 = vsel %vm374, %v413, %v409
    %v416 = vsel %vm377, %v414, 0.0
    %417 = vadd.xlane.f32.xlu0 %v416
    %v418 = vpop.xlane.xlu0 %417
    %v419 = vrcp.pop %v418
    %v421 = vlaneseq
    %v422 = vshrl.u32 %v421, 7
    %v423 = vsub.s32 0, %v422
    %v424 = vrot.slane %v419, %v423
    %v425 = vlaneseq
    %v426 = vshrl.u32 %v425, 7
    %v427 = vsub.s32 1, %v426
    %v428 = vrot.slane %v419, %v427
    %v431 = vmul.f32 %v395, %v424
    %v432 = vmul.f32 %v397, %v428
    %434 = vset.pattern.permute.xlu0 0
    %435 = vperm.xlu0 %434, %v431
    %v436 = vpop.permute.xlu0 %435
    %439 = vset.pattern.permute.xlu0 0
    %440 = vperm.xlu0 %439, %v432
    %v441 = vpop.permute.xlu0 %440
    %v443 = vmul.f32 %v436, %v64
    %v444 = vmul.f32 %v441, %v65
    %v445 = vsel %vm66, %v443, 0.0
    %v446 = vrot.slane %v445, 4
    %v447 = vadd.f32 %v445, %v446
    %v448 = vrot.slane %v447, 2
    %v449 = vadd.f32 %v447, %v448
    %v450 = vrot.slane %v449, 1
    %v451 = vadd.f32 %v449, %v450
    %v452 = vsel %vm66, %v444, 0.0
    %v453 = vrot.slane %v452, 4
    %v454 = vadd.f32 %v452, %v453
    %v455 = vrot.slane %v454, 2
    %v456 = vadd.f32 %v454, %v455
    %v457 = vrot.slane %v456, 1
    %v458 = vadd.f32 %v456, %v457
    %v459 = vld [vmem:[%s1] sm:$0x3]
    %v460 = vstv %s61
    %v461 = vmul.f32 %v459, %v460
    %462 = vrot.lane.b32.xlu0 %v56, 32
    %v463 = vpop.permute.xlu0 %462
    %v465 = vmul.f32 %v451, %v463
    %v466 = vmul.f32 %v458, %v463
    %v469 = vrot.slane %v466, 7
    %v470 = vsel %vm374, %v469, %v465
    %vm472 = vcmask 254976
    %v473 = vsel %vm472, %v470, 0.0
    %474 = vadd.xlane.f32.xlu0 %v473
    %v475 = vpop.xlane.xlu0 %474
    %v476 = vadd.f32 %v461, %v475
    %v477 = vstv %s62
    %v478 = vadd.f32 %v476, %v477
    %480 = vset.pattern.permute.xlu0 0
    %481 = vperm.xlu0 %480, %v478
    %v482 = vpop.permute.xlu0 %481
    %v484 = vmul.f32 %v482, %v58
    %v485 = vadd.f32 %v218, %v484
    %v486 = vadd.f32 %v485, %v60
    %v487 = vxor.u32 %v486, 2147483648
    %v488 = vmul.f32 %v487, 1.442695
    %v489 = vpow.pop %v488
    %v490 = vadd.f32 %v489, 1.0
    %v491 = vrcp.pop %v490
    %v492 = vmul.f32 1.0, %v491
    %v493 = vtanh.pop %v486
    %v494 = vmul.f32 %v492, 0.0
    %496 = vrot.lane.b32.xlu0 %v493, 64
    %v497 = vpop.permute.xlu0 %496
    %v499 = vmul.f32 %v492, %v497
    %501 = vrot.lane.b32.xlu0 %v499, 32
    %v502 = vpop.permute.xlu0 %501
    %v504 = vadd.f32 %v494, %v502
    %v505 = vtanh.pop %v504
    %507 = vrot.lane.b32.xlu0 %v505, 64
    %v508 = vpop.permute.xlu0 %507
    %v510 = vmul.f32 %v492, %v508
    %512 = vrot.lane.b32.xlu0 %v510, 32
    %v513 = vpop.permute.xlu0 %512
    %v514 = vsel %vm66, %v513, 0
    %516 = vmatprep.subr.mxu0 %v45
    %517 = vmatpush1.msra.mxu0 %v44
    %518 = vmatprep.subr.mxu0 %v47
    %519 = vmatpush1.msra.mxu0 %v46
    %520 = vmatprep.subr.mxu0 %v49
    %521 = vmatpush1.msra.mxu0 %v48
    %522 = vmatprep.subr.mxu0 %v51
    %523 = vmatpush1.msra.mxu0 %v50
    %524 = vmatprep.subr.mxu0 0.0
    %525 = vmatpush1.msra.mxu0 0.0
    %526 = vmatprep.subr.mxu0 0.0
    %527 = vmatpush1.msra.mxu0 0.0
    %528 = vmatprep.subr.mxu0 0.0
    %529 = vmatpush1.msra.mxu0 0.0
    %530 = vmatprep.subr.mxu0 0.0
    %531 = vmatpush1.msra.mxu0 0.0
    %532 = vmatprep.subr.mxu0 0.0
    %533 = vmatpush1.msra.mxu0 0.0
    %534 = vmatprep.subr.mxu0 0.0
    %535 = vmatpush1.msra.mxu0 0.0
    %536 = vmatprep.subr.mxu0 0.0
    %537 = vmatpush1.msra.mxu0 0.0
    %538 = vmatprep.subr.mxu0 0.0
    %539 = vmatpush1.msra.mxu0 0.0
    %540 = vmatprep.subr.mxu0 0.0
    %541 = vmatpush1.msra.mxu0 0.0
    %542 = vmatprep.subr.mxu0 0.0
    %543 = vmatpush1.msra.mxu0 0.0
    %544 = vmatprep.subr.mxu0 0.0
    %545 = vmatpush1.msra.mxu0 0.0
    %546 = vmatprep.subr.mxu0 0.0
    %547 = vmatpush1.msra.mxu0 0.0
    %548 = vmatprep.subr.mxu0 0.0
    %549 = vmatpush1.msra.mxu0 0.0
    %550 = vmatprep.subr.mxu0 0.0
    %551 = vmatpush1.msra.mxu0 0.0
    %552 = vmatprep.subr.mxu0 0.0
    %553 = vmatpush1.msra.mxu0 0.0
    %554 = vmatprep.subr.mxu0 0.0
    %555 = vmatpush1.msra.mxu0 0.0
    %556 = vmatprep.subr.mxu0 0.0
    %557 = vmatpush1.msra.mxu0 0.0
    %558 = vmatprep.subr.mxu0 0.0
    %559 = vmatpush1.msra.mxu0 0.0
    %560 = vmatprep.subr.mxu0 0.0
    %561 = vmatpush1.msra.mxu0 0.0
    %562 = vmatprep.subr.mxu0 0.0
    %563 = vmatpush1.msra.mxu0 0.0
    %564 = vmatprep.subr.mxu0 0.0
    %565 = vmatpush1.msra.mxu0 0.0
    %566 = vmatprep.subr.mxu0 0.0
    %567 = vmatpush1.msra.mxu0 0.0
    %568 = vmatprep.subr.mxu0 0.0
    %569 = vmatpush1.msra.mxu0 0.0
    %570 = vmatprep.subr.mxu0 0.0
    %571 = vmatpush1.msra.mxu0 0.0
    %572 = vmatprep.subr.mxu0 0.0
    %573 = vmatpush1.msra.mxu0 0.0
    %574 = vmatprep.subr.mxu0 0.0
    %575 = vmatpush1.msra.mxu0 0.0
    %576 = vmatprep.subr.mxu0 0.0
    %577 = vmatpush1.msra.mxu0 0.0
    %578 = vmatprep.subr.mxu0 0.0
    %579 = vmatpush1.msra.mxu0 0.0
    %580 = vmatprep.mubr.f32.mxu0 0.0
    %581 = vmatmul.mubr.f32.gmra.mrb[0].mxu0 %v514
    %v582 = vpop.f32.mrb[0].mxu0
    %v583 = vadd.f32 0.0, %v582
    %v584 = vpop.f32.mrb[0].mxu0
    %v585 = vadd.f32 0.0, %v584
    %586 = vdwg.mxu0
    %588 = vrot.lane.b32.xlu0 %v504, 96
    %v589 = vpop.permute.xlu0 %588
    %v590 = vsel %vm66, %v589, 0
    %592 = vmatprep.subr.mxu0 0.0
    %593 = vmatpush1.msra.mxu0 %v227
    %594 = vmatprep.subr.mxu0 0.0
    %595 = vmatpush1.msra.mxu0 %v229
    %596 = vmatprep.subr.mxu0 0.0
    %597 = vmatpush1.msra.mxu0 %v231
    %598 = vmatprep.subr.mxu0 0.0
    %599 = vmatpush1.msra.mxu0 %v233
    %600 = vmatprep.subr.mxu0 0.0
    %601 = vmatpush1.msra.mxu0 0.0
    %602 = vmatprep.subr.mxu0 0.0
    %603 = vmatpush1.msra.mxu0 0.0
    %604 = vmatprep.subr.mxu0 0.0
    %605 = vmatpush1.msra.mxu0 0.0
    %606 = vmatprep.subr.mxu0 0.0
    %607 = vmatpush1.msra.mxu0 0.0
    %608 = vmatprep.subr.mxu0 0.0
    %609 = vmatpush1.msra.mxu0 0.0
    %610 = vmatprep.subr.mxu0 0.0
    %611 = vmatpush1.msra.mxu0 0.0
    %612 = vmatprep.subr.mxu0 0.0
    %613 = vmatpush1.msra.mxu0 0.0
    %614 = vmatprep.subr.mxu0 0.0
    %615 = vmatpush1.msra.mxu0 0.0
    %616 = vmatprep.subr.mxu0 0.0
    %617 = vmatpush1.msra.mxu0 0.0
    %618 = vmatprep.subr.mxu0 0.0
    %619 = vmatpush1.msra.mxu0 0.0
    %620 = vmatprep.subr.mxu0 0.0
    %621 = vmatpush1.msra.mxu0 0.0
    %622 = vmatprep.subr.mxu0 0.0
    %623 = vmatpush1.msra.mxu0 0.0
    %624 = vmatprep.subr.mxu0 0.0
    %625 = vmatpush1.msra.mxu0 0.0
    %626 = vmatprep.subr.mxu0 0.0
    %627 = vmatpush1.msra.mxu0 0.0
    %628 = vmatprep.subr.mxu0 0.0
    %629 = vmatpush1.msra.mxu0 0.0
    %630 = vmatprep.subr.mxu0 0.0
    %631 = vmatpush1.msra.mxu0 0.0
    %632 = vmatprep.subr.mxu0 0.0
    %633 = vmatpush1.msra.mxu0 0.0
    %634 = vmatprep.subr.mxu0 0.0
    %635 = vmatpush1.msra.mxu0 0.0
    %636 = vmatprep.subr.mxu0 0.0
    %637 = vmatpush1.msra.mxu0 0.0
    %638 = vmatprep.subr.mxu0 0.0
    %639 = vmatpush1.msra.mxu0 0.0
    %640 = vmatprep.subr.mxu0 0.0
    %641 = vmatpush1.msra.mxu0 0.0
    %642 = vmatprep.subr.mxu0 0.0
    %643 = vmatpush1.msra.mxu0 0.0
    %644 = vmatprep.subr.mxu0 0.0
    %645 = vmatpush1.msra.mxu0 0.0
    %646 = vmatprep.subr.mxu0 0.0
    %647 = vmatpush1.msra.mxu0 0.0
    %648 = vmatprep.subr.mxu0 0.0
    %649 = vmatpush1.msra.mxu0 0.0
    %650 = vmatprep.subr.mxu0 0.0
    %651 = vmatpush1.msra.mxu0 0.0
    %652 = vmatprep.subr.mxu0 0.0
    %653 = vmatpush1.msra.mxu0 0.0
    %654 = vmatprep.subr.mxu0 0.0
    %655 = vmatpush1.msra.mxu0 0.0
    %656 = vmatprep.mubr.f32.mxu0 0.0
    %657 = vmatmul.mubr.f32.gmra.mrb[0].mxu0 %v590
    %v658 = vpop.f32.mrb[0].mxu0
    %v659 = vadd.f32 0.0, %v658
    %v660 = vpop.f32.mrb[0].mxu0
    %661 = vdwg.mxu0
    %v662 = vadd.f32 %v585, %v659
    %v663 = vadd.f32 %v662, %v311
    %v666 = vunpack.c.l.s4 1966171168
    %v667 = vunpack.c.0.s8 %v666
    %v668 = vlaneseq
    %v669 = vshrl.u32 %v668, 7
    %v670 = vsub.s32 %v667, %v669
    %v671 = vrot.slane %v663, %v670
    %v672 = vcombine.high %v671, %v671
    %v674 = vunpack.c.l.s4 1966171168
    %v675 = vunpack.c.0.s8 %v674
    %v676 = vlaneseq
    %v677 = vshrl.u32 %v676, 7
    %v678 = vsub.s32 %v675, %v677
    %v679 = vrot.slane %v671, %v678
    %v681 = vunpack.c.l.s4 1966171168
    %v682 = vunpack.c.0.s8 %v681
    %v683 = vlaneseq
    %v684 = vshrl.u32 %v683, 7
    %v685 = vsub.s32 %v682, %v684
    %v686 = vrot.slane %v672, %v685
    %v687 = vlaneseq
    %v688 = vshrl.u32 %v687, 7
    %v689 = vsub.s32 0, %v688
    %v690 = vrot.slane %v679, %v689
    %v691 = vlaneseq
    %v692 = vshrl.u32 %v691, 7
    %v693 = vsub.s32 0, %v692
    %v694 = vrot.slane %v686, %v693
    %v697 = vadd.f32 %v690, %v140
    %v698 = vadd.f32 %v694, %v145
    %v699 = vtanh.pop %v697
    %v700 = vtanh.pop %v698
    %v701 = vmul.f32 %v699, %v352
    %v702 = vmul.f32 %v700, %v352
    %v703 = vsel %vm66, %v701, 0.0
    %704 = vadd.xlane.f32.xlu0 %v703
    %v705 = vpop.xlane.xlu0 %704
    %v706 = vsel %vm66, %v702, 0.0
    %707 = vadd.xlane.f32.xlu0 %v706
    %v708 = vpop.xlane.xlu0 %707
    %v711 = vlaneseq
    %v712 = vshrl.u32 %v711, 7
    %v713 = vsub.s32 %v365, %v712
    %v714 = vrot.slane %v705, %v713
    %v715 = vlaneseq
    %v716 = vshrl.u32 %v715, 7
    %v717 = vsub.s32 %v365, %v716
    %v718 = vrot.slane %v708, %v717
    %v719 = vsel %vm374, %v718, %v714
    %v721 = vsel %vm377, %v719, -inf
    %722 = vmax.xlane.f32.xlu0 %v721
    %v723 = vpop.xlane.xlu0 %722
    %v725 = vlaneseq
    %v726 = vshrl.u32 %v725, 7
    %v727 = vsub.s32 0, %v726
    %v728 = vrot.slane %v723, %v727
    %v729 = vlaneseq
    %v730 = vshrl.u32 %v729, 7
    %v731 = vsub.s32 1, %v730
    %v732 = vrot.slane %v723, %v731
    %v735 = vsub.f32 %v705, %v728
    %v736 = vsub.f32 %v708, %v732
    %v737 = vmul.f32 %v735, 1.442695
    %v738 = vpow.pop %v737
    %v739 = vmul.f32 %v736, 1.442695
    %v740 = vpow.pop %v739
    %743 = vset.pattern.permute.xlu0 0
    %744 = vperm.xlu0 %743, %v738
    %v745 = vpop.permute.xlu0 %744
    %746 = vset.pattern.permute.xlu0 0
    %747 = vperm.xlu0 %746, %v740
    %v748 = vpop.permute.xlu0 %747
    %v749 = vlaneseq
    %v750 = vshrl.u32 %v749, 7
    %v751 = vsub.s32 %v365, %v750
    %v752 = vrot.slane %v745, %v751
    %v753 = vlaneseq
    %v754 = vshrl.u32 %v753, 7
    %v755 = vsub.s32 %v365, %v754
    %v756 = vrot.slane %v748, %v755
    %v757 = vsel %vm374, %v756, %v752
    %v759 = vsel %vm377, %v757, 0.0
    %760 = vadd.xlane.f32.xlu0 %v759
    %v761 = vpop.xlane.xlu0 %760
    %v762 = vrcp.pop %v761
    %v764 = vlaneseq
    %v765 = vshrl.u32 %v764, 7
    %v766 = vsub.s32 0, %v765
    %v767 = vrot.slane %v762, %v766
    %v768 = vlaneseq
    %v769 = vshrl.u32 %v768, 7
    %v770 = vsub.s32 1, %v769
    %v771 = vrot.slane %v762, %v770
    %v774 = vmul.f32 %v738, %v767
    %v775 = vmul.f32 %v740, %v771
    %777 = vset.pattern.permute.xlu0 0
    %778 = vperm.xlu0 %777, %v774
    %v779 = vpop.permute.xlu0 %778
    %782 = vset.pattern.permute.xlu0 0
    %783 = vperm.xlu0 %782, %v775
    %v784 = vpop.permute.xlu0 %783
    %v786 = vmul.f32 %v779, %v64
    %v787 = vmul.f32 %v784, %v65
    %v788 = vsel %vm66, %v786, 0.0
    %v789 = vrot.slane %v788, 4
    %v790 = vadd.f32 %v788, %v789
    %v791 = vrot.slane %v790, 2
    %v792 = vadd.f32 %v790, %v791
    %v793 = vrot.slane %v792, 1
    %v794 = vadd.f32 %v792, %v793
    %v795 = vsel %vm66, %v787, 0.0
    %v796 = vrot.slane %v795, 4
    %v797 = vadd.f32 %v795, %v796
    %v798 = vrot.slane %v797, 2
    %v799 = vadd.f32 %v797, %v798
    %v800 = vrot.slane %v799, 1
    %v801 = vadd.f32 %v799, %v800
    %s802 = scalar_lea.vmem %s1, 2
    %v803 = vld [vmem:[%s802] sm:$0x3]
    %v804 = vmul.f32 %v803, %v460
    %v805 = vmul.f32 %v794, %v463
    %v806 = vmul.f32 %v801, %v463
    %v809 = vrot.slane %v806, 7
    %v810 = vsel %vm374, %v809, %v805
    %v812 = vsel %vm472, %v810, 0.0
    %813 = vadd.xlane.f32.xlu0 %v812
    %v814 = vpop.xlane.xlu0 %813
    %v815 = vadd.f32 %v804, %v814
    %v816 = vadd.f32 %v815, %v477
    %818 = vset.pattern.permute.xlu0 0
    %819 = vperm.xlu0 %818, %v816
    %v820 = vpop.permute.xlu0 %819
    %v822 = vmul.f32 %v820, %v58
    %v823 = vadd.f32 %v583, %v822
    %v824 = vadd.f32 %v823, %v60
    %v825 = vxor.u32 %v824, 2147483648
    %v826 = vmul.f32 %v825, 1.442695
    %v827 = vpow.pop %v826
    %v828 = vadd.f32 %v827, 1.0
    %v829 = vrcp.pop %v828
    %v830 = vmul.f32 1.0, %v829
    %v831 = vtanh.pop %v824
    %v832 = vmul.f32 %v830, %v504
    %834 = vrot.lane.b32.xlu0 %v831, 64
    %v835 = vpop.permute.xlu0 %834
    %v837 = vmul.f32 %v830, %v835
    %839 = vrot.lane.b32.xlu0 %v837, 32
    %v840 = vpop.permute.xlu0 %839
    %v842 = vadd.f32 %v832, %v840
    %v843 = vtanh.pop %v842
    %845 = vrot.lane.b32.xlu0 %v843, 64
    %v846 = vpop.permute.xlu0 %845
    %v848 = vmul.f32 %v830, %v846
    %850 = vrot.lane.b32.xlu0 %v848, 32
    %v851 = vpop.permute.xlu0 %850
    %v852 = vsel %vm66, %v851, 0
    %854 = vmatprep.subr.mxu0 %v45
    %855 = vmatpush1.msra.mxu0 %v44
    %856 = vmatprep.subr.mxu0 %v47
    %857 = vmatpush1.msra.mxu0 %v46
    %858 = vmatprep.subr.mxu0 %v49
    %859 = vmatpush1.msra.mxu0 %v48
    %860 = vmatprep.subr.mxu0 %v51
    %861 = vmatpush1.msra.mxu0 %v50
    %862 = vmatprep.subr.mxu0 0.0
    %863 = vmatpush1.msra.mxu0 0.0
    %864 = vmatprep.subr.mxu0 0.0
    %865 = vmatpush1.msra.mxu0 0.0
    %866 = vmatprep.subr.mxu0 0.0
    %867 = vmatpush1.msra.mxu0 0.0
    %868 = vmatprep.subr.mxu0 0.0
    %869 = vmatpush1.msra.mxu0 0.0
    %870 = vmatprep.subr.mxu0 0.0
    %871 = vmatpush1.msra.mxu0 0.0
    %872 = vmatprep.subr.mxu0 0.0
    %873 = vmatpush1.msra.mxu0 0.0
    %874 = vmatprep.subr.mxu0 0.0
    %875 = vmatpush1.msra.mxu0 0.0
    %876 = vmatprep.subr.mxu0 0.0
    %877 = vmatpush1.msra.mxu0 0.0
    %878 = vmatprep.subr.mxu0 0.0
    %879 = vmatpush1.msra.mxu0 0.0
    %880 = vmatprep.subr.mxu0 0.0
    %881 = vmatpush1.msra.mxu0 0.0
    %882 = vmatprep.subr.mxu0 0.0
    %883 = vmatpush1.msra.mxu0 0.0
    %884 = vmatprep.subr.mxu0 0.0
    %885 = vmatpush1.msra.mxu0 0.0
    %886 = vmatprep.subr.mxu0 0.0
    %887 = vmatpush1.msra.mxu0 0.0
    %888 = vmatprep.subr.mxu0 0.0
    %889 = vmatpush1.msra.mxu0 0.0
    %890 = vmatprep.subr.mxu0 0.0
    %891 = vmatpush1.msra.mxu0 0.0
    %892 = vmatprep.subr.mxu0 0.0
    %893 = vmatpush1.msra.mxu0 0.0
    %894 = vmatprep.subr.mxu0 0.0
    %895 = vmatpush1.msra.mxu0 0.0
    %896 = vmatprep.subr.mxu0 0.0
    %897 = vmatpush1.msra.mxu0 0.0
    %898 = vmatprep.subr.mxu0 0.0
    %899 = vmatpush1.msra.mxu0 0.0
    %900 = vmatprep.subr.mxu0 0.0
    %901 = vmatpush1.msra.mxu0 0.0
    %902 = vmatprep.subr.mxu0 0.0
    %903 = vmatpush1.msra.mxu0 0.0
    %904 = vmatprep.subr.mxu0 0.0
    %905 = vmatpush1.msra.mxu0 0.0
    %906 = vmatprep.subr.mxu0 0.0
    %907 = vmatpush1.msra.mxu0 0.0
    %908 = vmatprep.subr.mxu0 0.0
    %909 = vmatpush1.msra.mxu0 0.0
    %910 = vmatprep.subr.mxu0 0.0
    %911 = vmatpush1.msra.mxu0 0.0
    %912 = vmatprep.subr.mxu0 0.0
    %913 = vmatpush1.msra.mxu0 0.0
    %914 = vmatprep.subr.mxu0 0.0
    %915 = vmatpush1.msra.mxu0 0.0
    %916 = vmatprep.subr.mxu0 0.0
    %917 = vmatpush1.msra.mxu0 0.0
    %918 = vmatprep.mubr.f32.mxu0 0.0
    %919 = vmatmul.mubr.f32.gmra.mrb[0].mxu0 %v852
    %v920 = vpop.f32.mrb[0].mxu0
    %v921 = vadd.f32 0.0, %v920
    %v922 = vpop.f32.mrb[0].mxu0
    %v923 = vadd.f32 0.0, %v922
    %924 = vdwg.mxu0
    %926 = vrot.lane.b32.xlu0 %v842, 96
    %v927 = vpop.permute.xlu0 %926
    %v928 = vsel %vm66, %v927, 0
    %930 = vmatprep.subr.mxu0 0.0
    %931 = vmatpush1.msra.mxu0 %v227
    %932 = vmatprep.subr.mxu0 0.0
    %933 = vmatpush1.msra.mxu0 %v229
    %934 = vmatprep.subr.mxu0 0.0
    %935 = vmatpush1.msra.mxu0 %v231
    %936 = vmatprep.subr.mxu0 0.0
    %937 = vmatpush1.msra.mxu0 %v233
    %938 = vmatprep.subr.mxu0 0.0
    %939 = vmatpush1.msra.mxu0 0.0
    %940 = vmatprep.subr.mxu0 0.0
    %941 = vmatpush1.msra.mxu0 0.0
    %942 = vmatprep.subr.mxu0 0.0
    %943 = vmatpush1.msra.mxu0 0.0
    %944 = vmatprep.subr.mxu0 0.0
    %945 = vmatpush1.msra.mxu0 0.0
    %946 = vmatprep.subr.mxu0 0.0
    %947 = vmatpush1.msra.mxu0 0.0
    %948 = vmatprep.subr.mxu0 0.0
    %949 = vmatpush1.msra.mxu0 0.0
    %950 = vmatprep.subr.mxu0 0.0
    %951 = vmatpush1.msra.mxu0 0.0
    %952 = vmatprep.subr.mxu0 0.0
    %953 = vmatpush1.msra.mxu0 0.0
    %954 = vmatprep.subr.mxu0 0.0
    %955 = vmatpush1.msra.mxu0 0.0
    %956 = vmatprep.subr.mxu0 0.0
    %957 = vmatpush1.msra.mxu0 0.0
    %958 = vmatprep.subr.mxu0 0.0
    %959 = vmatpush1.msra.mxu0 0.0
    %960 = vmatprep.subr.mxu0 0.0
    %961 = vmatpush1.msra.mxu0 0.0
    %962 = vmatprep.subr.mxu0 0.0
    %963 = vmatpush1.msra.mxu0 0.0
    %964 = vmatprep.subr.mxu0 0.0
    %965 = vmatpush1.msra.mxu0 0.0
    %966 = vmatprep.subr.mxu0 0.0
    %967 = vmatpush1.msra.mxu0 0.0
    %968 = vmatprep.subr.mxu0 0.0
    %969 = vmatpush1.msra.mxu0 0.0
    %970 = vmatprep.subr.mxu0 0.0
    %971 = vmatpush1.msra.mxu0 0.0
    %972 = vmatprep.subr.mxu0 0.0
    %973 = vmatpush1.msra.mxu0 0.0
    %974 = vmatprep.subr.mxu0 0.0
    %975 = vmatpush1.msra.mxu0 0.0
    %976 = vmatprep.subr.mxu0 0.0
    %977 = vmatpush1.msra.mxu0 0.0
    %978 = vmatprep.subr.mxu0 0.0
    %979 = vmatpush1.msra.mxu0 0.0
    %980 = vmatprep.subr.mxu0 0.0
    %981 = vmatpush1.msra.mxu0 0.0
    %982 = vmatprep.subr.mxu0 0.0
    %983 = vmatpush1.msra.mxu0 0.0
    %984 = vmatprep.subr.mxu0 0.0
    %985 = vmatpush1.msra.mxu0 0.0
    %986 = vmatprep.subr.mxu0 0.0
    %987 = vmatpush1.msra.mxu0 0.0
    %988 = vmatprep.subr.mxu0 0.0
    %989 = vmatpush1.msra.mxu0 0.0
    %990 = vmatprep.subr.mxu0 0.0
    %991 = vmatpush1.msra.mxu0 0.0
    %992 = vmatprep.subr.mxu0 0.0
    %993 = vmatpush1.msra.mxu0 0.0
    %994 = vmatprep.mubr.f32.mxu0 0.0
    %995 = vmatmul.mubr.f32.gmra.mrb[0].mxu0 %v928
    %v996 = vpop.f32.mrb[0].mxu0
    %v997 = vadd.f32 0.0, %v996
    %v998 = vpop.f32.mrb[0].mxu0
    %999 = vdwg.mxu0
    %v1000 = vadd.f32 %v923, %v997
    %v1001 = vadd.f32 %v1000, %v311
    %v1004 = vunpack.c.l.s4 1966171168
    %v1005 = vunpack.c.0.s8 %v1004
    %v1006 = vlaneseq
    %v1007 = vshrl.u32 %v1006, 7
    %v1008 = vsub.s32 %v1005, %v1007
    %v1009 = vrot.slane %v1001, %v1008
    %v1010 = vcombine.high %v1009, %v1009
    %v1012 = vunpack.c.l.s4 1966171168
    %v1013 = vunpack.c.0.s8 %v1012
    %v1014 = vlaneseq
    %v1015 = vshrl.u32 %v1014, 7
    %v1016 = vsub.s32 %v1013, %v1015
    %v1017 = vrot.slane %v1009, %v1016
    %v1019 = vunpack.c.l.s4 1966171168
    %v1020 = vunpack.c.0.s8 %v1019
    %v1021 = vlaneseq
    %v1022 = vshrl.u32 %v1021, 7
    %v1023 = vsub.s32 %v1020, %v1022
    %v1024 = vrot.slane %v1010, %v1023
    %v1025 = vlaneseq
    %v1026 = vshrl.u32 %v1025, 7
    %v1027 = vsub.s32 0, %v1026
    %v1028 = vrot.slane %v1017, %v1027
    %v1029 = vlaneseq
    %v1030 = vshrl.u32 %v1029, 7
    %v1031 = vsub.s32 0, %v1030
    %v1032 = vrot.slane %v1024, %v1031
    %v1035 = vadd.f32 %v1028, %v140
    %v1036 = vadd.f32 %v1032, %v145
    %v1037 = vtanh.pop %v1035
    %v1038 = vtanh.pop %v1036
    %v1039 = vmul.f32 %v1037, %v352
    %v1040 = vmul.f32 %v1038, %v352
    %v1041 = vsel %vm66, %v1039, 0.0
    %1042 = vadd.xlane.f32.xlu0 %v1041
    %v1043 = vpop.xlane.xlu0 %1042
    %v1044 = vsel %vm66, %v1040, 0.0
    %1045 = vadd.xlane.f32.xlu0 %v1044
    %v1046 = vpop.xlane.xlu0 %1045
    %v1049 = vlaneseq
    %v1050 = vshrl.u32 %v1049, 7
    %v1051 = vsub.s32 %v365, %v1050
    %v1052 = vrot.slane %v1043, %v1051
    %v1053 = vlaneseq
    %v1054 = vshrl.u32 %v1053, 7
    %v1055 = vsub.s32 %v365, %v1054
    %v1056 = vrot.slane %v1046, %v1055
    %v1057 = vsel %vm374, %v1056, %v1052
    %v1059 = vsel %vm377, %v1057, -inf
    %1060 = vmax.xlane.f32.xlu0 %v1059
    %v1061 = vpop.xlane.xlu0 %1060
    %v1063 = vlaneseq
    %v1064 = vshrl.u32 %v1063, 7
    %v1065 = vsub.s32 0, %v1064
    %v1066 = vrot.slane %v1061, %v1065
    %v1067 = vlaneseq
    %v1068 = vshrl.u32 %v1067, 7
    %v1069 = vsub.s32 1, %v1068
    %v1070 = vrot.slane %v1061, %v1069
    %v1073 = vsub.f32 %v1043, %v1066
    %v1074 = vsub.f32 %v1046, %v1070
    %v1075 = vmul.f32 %v1073, 1.442695
    %v1076 = vpow.pop %v1075
    %v1077 = vmul.f32 %v1074, 1.442695
    %v1078 = vpow.pop %v1077
    %1081 = vset.pattern.permute.xlu0 0
    %1082 = vperm.xlu0 %1081, %v1076
    %v1083 = vpop.permute.xlu0 %1082
    %1084 = vset.pattern.permute.xlu0 0
    %1085 = vperm.xlu0 %1084, %v1078
    %v1086 = vpop.permute.xlu0 %1085
    %v1087 = vlaneseq
    %v1088 = vshrl.u32 %v1087, 7
    %v1089 = vsub.s32 %v365, %v1088
    %v1090 = vrot.slane %v1083, %v1089
    %v1091 = vlaneseq
    %v1092 = vshrl.u32 %v1091, 7
    %v1093 = vsub.s32 %v365, %v1092
    %v1094 = vrot.slane %v1086, %v1093
    %v1095 = vsel %vm374, %v1094, %v1090
    %v1097 = vsel %vm377, %v1095, 0.0
    %1098 = vadd.xlane.f32.xlu0 %v1097
    %v1099 = vpop.xlane.xlu0 %1098
    %v1100 = vrcp.pop %v1099
    %v1102 = vlaneseq
    %v1103 = vshrl.u32 %v1102, 7
    %v1104 = vsub.s32 0, %v1103
    %v1105 = vrot.slane %v1100, %v1104
    %v1106 = vlaneseq
    %v1107 = vshrl.u32 %v1106, 7
    %v1108 = vsub.s32 1, %v1107
    %v1109 = vrot.slane %v1100, %v1108
    %v1112 = vmul.f32 %v1076, %v1105
    %v1113 = vmul.f32 %v1078, %v1109
    %1115 = vset.pattern.permute.xlu0 0
    %1116 = vperm.xlu0 %1115, %v1112
    %v1117 = vpop.permute.xlu0 %1116
    %1120 = vset.pattern.permute.xlu0 0
    %1121 = vperm.xlu0 %1120, %v1113
    %v1122 = vpop.permute.xlu0 %1121
    %v1124 = vmul.f32 %v1117, %v64
    %v1125 = vmul.f32 %v1122, %v65
    %v1126 = vsel %vm66, %v1124, 0.0
    %v1127 = vrot.slane %v1126, 4
    %v1128 = vadd.f32 %v1126, %v1127
    %v1129 = vrot.slane %v1128, 2
    %v1130 = vadd.f32 %v1128, %v1129
    %v1131 = vrot.slane %v1130, 1
    %v1132 = vadd.f32 %v1130, %v1131
    %v1133 = vsel %vm66, %v1125, 0.0
    %v1134 = vrot.slane %v1133, 4
    %v1135 = vadd.f32 %v1133, %v1134
    %v1136 = vrot.slane %v1135, 2
    %v1137 = vadd.f32 %v1135, %v1136
    %v1138 = vrot.slane %v1137, 1
    %v1139 = vadd.f32 %v1137, %v1138
    %s1140 = scalar_lea.vmem %s1, 4
    %v1141 = vld [vmem:[%s1140] sm:$0x3]
    %v1142 = vmul.f32 %v1141, %v460
    %v1143 = vmul.f32 %v1132, %v463
    %v1144 = vmul.f32 %v1139, %v463
    %v1147 = vrot.slane %v1144, 7
    %v1148 = vsel %vm374, %v1147, %v1143
    %v1150 = vsel %vm472, %v1148, 0.0
    %1151 = vadd.xlane.f32.xlu0 %v1150
    %v1152 = vpop.xlane.xlu0 %1151
    %v1153 = vadd.f32 %v1142, %v1152
    %v1154 = vadd.f32 %v1153, %v477
    %1156 = vset.pattern.permute.xlu0 0
    %1157 = vperm.xlu0 %1156, %v1154
    %v1158 = vpop.permute.xlu0 %1157
    %v1160 = vmul.f32 %v1158, %v58
    %v1161 = vadd.f32 %v921, %v1160
    %v1162 = vadd.f32 %v1161, %v60
    %v1163 = vxor.u32 %v1162, 2147483648
    %v1164 = vmul.f32 %v1163, 1.442695
    %v1165 = vpow.pop %v1164
    %v1166 = vadd.f32 %v1165, 1.0
    %v1167 = vrcp.pop %v1166
    %v1168 = vmul.f32 1.0, %v1167
    %v1169 = vtanh.pop %v1162
    %v1170 = vmul.f32 %v1168, %v842
    %1172 = vrot.lane.b32.xlu0 %v1169, 64
    %v1173 = vpop.permute.xlu0 %1172
    %v1175 = vmul.f32 %v1168, %v1173
    %1177 = vrot.lane.b32.xlu0 %v1175, 32
    %v1178 = vpop.permute.xlu0 %1177
    %v1180 = vadd.f32 %v1170, %v1178
    %v1181 = vtanh.pop %v1180
    %1183 = vrot.lane.b32.xlu0 %v1181, 64
    %v1184 = vpop.permute.xlu0 %1183
    %v1186 = vmul.f32 %v1168, %v1184
    %1188 = vrot.lane.b32.xlu0 %v1186, 32
    %v1189 = vpop.permute.xlu0 %1188
    %v1190 = vsel %vm66, %v1189, 0
    %1192 = vmatprep.subr.mxu0 %v45
    %1193 = vmatpush1.msra.mxu0 %v44
    %1194 = vmatprep.subr.mxu0 %v47
    %1195 = vmatpush1.msra.mxu0 %v46
    %1196 = vmatprep.subr.mxu0 %v49
    %1197 = vmatpush1.msra.mxu0 %v48
    %1198 = vmatprep.subr.mxu0 %v51
    %1199 = vmatpush1.msra.mxu0 %v50
    %1200 = vmatprep.subr.mxu0 0.0
    %1201 = vmatpush1.msra.mxu0 0.0
    %1202 = vmatprep.subr.mxu0 0.0
    %1203 = vmatpush1.msra.mxu0 0.0
    %1204 = vmatprep.subr.mxu0 0.0
    %1205 = vmatpush1.msra.mxu0 0.0
    %1206 = vmatprep.subr.mxu0 0.0
    %1207 = vmatpush1.msra.mxu0 0.0
    %1208 = vmatprep.subr.mxu0 0.0
    %1209 = vmatpush1.msra.mxu0 0.0
    %1210 = vmatprep.subr.mxu0 0.0
    %1211 = vmatpush1.msra.mxu0 0.0
    %1212 = vmatprep.subr.mxu0 0.0
    %1213 = vmatpush1.msra.mxu0 0.0
    %1214 = vmatprep.subr.mxu0 0.0
    %1215 = vmatpush1.msra.mxu0 0.0
    %1216 = vmatprep.subr.mxu0 0.0
    %1217 = vmatpush1.msra.mxu0 0.0
    %1218 = vmatprep.subr.mxu0 0.0
    %1219 = vmatpush1.msra.mxu0 0.0
    %1220 = vmatprep.subr.mxu0 0.0
    %1221 = vmatpush1.msra.mxu0 0.0
    %1222 = vmatprep.subr.mxu0 0.0
    %1223 = vmatpush1.msra.mxu0 0.0
    %1224 = vmatprep.subr.mxu0 0.0
    %1225 = vmatpush1.msra.mxu0 0.0
    %1226 = vmatprep.subr.mxu0 0.0
    %1227 = vmatpush1.msra.mxu0 0.0
    %1228 = vmatprep.subr.mxu0 0.0
    %1229 = vmatpush1.msra.mxu0 0.0
    %1230 = vmatprep.subr.mxu0 0.0
    %1231 = vmatpush1.msra.mxu0 0.0
    %1232 = vmatprep.subr.mxu0 0.0
    %1233 = vmatpush1.msra.mxu0 0.0
    %1234 = vmatprep.subr.mxu0 0.0
    %1235 = vmatpush1.msra.mxu0 0.0
    %1236 = vmatprep.subr.mxu0 0.0
    %1237 = vmatpush1.msra.mxu0 0.0
    %1238 = vmatprep.subr.mxu0 0.0
    %1239 = vmatpush1.msra.mxu0 0.0
    %1240 = vmatprep.subr.mxu0 0.0
    %1241 = vmatpush1.msra.mxu0 0.0
    %1242 = vmatprep.subr.mxu0 0.0
    %1243 = vmatpush1.msra.mxu0 0.0
    %1244 = vmatprep.subr.mxu0 0.0
    %1245 = vmatpush1.msra.mxu0 0.0
    %1246 = vmatprep.subr.mxu0 0.0
    %1247 = vmatpush1.msra.mxu0 0.0
    %1248 = vmatprep.subr.mxu0 0.0
    %1249 = vmatpush1.msra.mxu0 0.0
    %1250 = vmatprep.subr.mxu0 0.0
    %1251 = vmatpush1.msra.mxu0 0.0
    %1252 = vmatprep.subr.mxu0 0.0
    %1253 = vmatpush1.msra.mxu0 0.0
    %1254 = vmatprep.subr.mxu0 0.0
    %1255 = vmatpush1.msra.mxu0 0.0
    %1256 = vmatprep.mubr.f32.mxu0 0.0
    %1257 = vmatmul.mubr.f32.gmra.mrb[0].mxu0 %v1190
    %v1258 = vpop.f32.mrb[0].mxu0
    %v1259 = vadd.f32 0.0, %v1258
    %v1260 = vpop.f32.mrb[0].mxu0
    %v1261 = vadd.f32 0.0, %v1260
    %1262 = vdwg.mxu0
    %1264 = vrot.lane.b32.xlu0 %v1180, 96
    %v1265 = vpop.permute.xlu0 %1264
    %v1266 = vsel %vm66, %v1265, 0
    %1268 = vmatprep.subr.mxu0 0.0
    %1269 = vmatpush1.msra.mxu0 %v227
    %1270 = vmatprep.subr.mxu0 0.0
    %1271 = vmatpush1.msra.mxu0 %v229
    %1272 = vmatprep.subr.mxu0 0.0
    %1273 = vmatpush1.msra.mxu0 %v231
    %1274 = vmatprep.subr.mxu0 0.0
    %1275 = vmatpush1.msra.mxu0 %v233
    %1276 = vmatprep.subr.mxu0 0.0
    %1277 = vmatpush1.msra.mxu0 0.0
    %1278 = vmatprep.subr.mxu0 0.0
    %1279 = vmatpush1.msra.mxu0 0.0
    %1280 = vmatprep.subr.mxu0 0.0
    %1281 = vmatpush1.msra.mxu0 0.0
    %1282 = vmatprep.subr.mxu0 0.0
    %1283 = vmatpush1.msra.mxu0 0.0
    %1284 = vmatprep.subr.mxu0 0.0
    %1285 = vmatpush1.msra.mxu0 0.0
    %1286 = vmatprep.subr.mxu0 0.0
    %1287 = vmatpush1.msra.mxu0 0.0
    %1288 = vmatprep.subr.mxu0 0.0
    %1289 = vmatpush1.msra.mxu0 0.0
    %1290 = vmatprep.subr.mxu0 0.0
    %1291 = vmatpush1.msra.mxu0 0.0
    %1292 = vmatprep.subr.mxu0 0.0
    %1293 = vmatpush1.msra.mxu0 0.0
    %1294 = vmatprep.subr.mxu0 0.0
    %1295 = vmatpush1.msra.mxu0 0.0
    %1296 = vmatprep.subr.mxu0 0.0
    %1297 = vmatpush1.msra.mxu0 0.0
    %1298 = vmatprep.subr.mxu0 0.0
    %1299 = vmatpush1.msra.mxu0 0.0
    %1300 = vmatprep.subr.mxu0 0.0
    %1301 = vmatpush1.msra.mxu0 0.0
    %1302 = vmatprep.subr.mxu0 0.0
    %1303 = vmatpush1.msra.mxu0 0.0
    %1304 = vmatprep.subr.mxu0 0.0
    %1305 = vmatpush1.msra.mxu0 0.0
    %1306 = vmatprep.subr.mxu0 0.0
    %1307 = vmatpush1.msra.mxu0 0.0
    %1308 = vmatprep.subr.mxu0 0.0
    %1309 = vmatpush1.msra.mxu0 0.0
    %1310 = vmatprep.subr.mxu0 0.0
    %1311 = vmatpush1.msra.mxu0 0.0
    %1312 = vmatprep.subr.mxu0 0.0
    %1313 = vmatpush1.msra.mxu0 0.0
    %1314 = vmatprep.subr.mxu0 0.0
    %1315 = vmatpush1.msra.mxu0 0.0
    %1316 = vmatprep.subr.mxu0 0.0
    %1317 = vmatpush1.msra.mxu0 0.0
    %1318 = vmatprep.subr.mxu0 0.0
    %1319 = vmatpush1.msra.mxu0 0.0
    %1320 = vmatprep.subr.mxu0 0.0
    %1321 = vmatpush1.msra.mxu0 0.0
    %1322 = vmatprep.subr.mxu0 0.0
    %1323 = vmatpush1.msra.mxu0 0.0
    %1324 = vmatprep.subr.mxu0 0.0
    %1325 = vmatpush1.msra.mxu0 0.0
    %1326 = vmatprep.subr.mxu0 0.0
    %1327 = vmatpush1.msra.mxu0 0.0
    %1328 = vmatprep.subr.mxu0 0.0
    %1329 = vmatpush1.msra.mxu0 0.0
    %1330 = vmatprep.subr.mxu0 0.0
    %1331 = vmatpush1.msra.mxu0 0.0
    %1332 = vmatprep.mubr.f32.mxu0 0.0
    %1333 = vmatmul.mubr.f32.gmra.mrb[0].mxu0 %v1266
    %v1334 = vpop.f32.mrb[0].mxu0
    %v1335 = vadd.f32 0.0, %v1334
    %v1336 = vpop.f32.mrb[0].mxu0
    %1337 = vdwg.mxu0
    %v1338 = vadd.f32 %v1261, %v1335
    %v1339 = vadd.f32 %v1338, %v311
    %v1342 = vunpack.c.l.s4 1966171168
    %v1343 = vunpack.c.0.s8 %v1342
    %v1344 = vlaneseq
    %v1345 = vshrl.u32 %v1344, 7
    %v1346 = vsub.s32 %v1343, %v1345
    %v1347 = vrot.slane %v1339, %v1346
    %v1348 = vcombine.high %v1347, %v1347
    %v1350 = vunpack.c.l.s4 1966171168
    %v1351 = vunpack.c.0.s8 %v1350
    %v1352 = vlaneseq
    %v1353 = vshrl.u32 %v1352, 7
    %v1354 = vsub.s32 %v1351, %v1353
    %v1355 = vrot.slane %v1347, %v1354
    %v1357 = vunpack.c.l.s4 1966171168
    %v1358 = vunpack.c.0.s8 %v1357
    %v1359 = vlaneseq
    %v1360 = vshrl.u32 %v1359, 7
    %v1361 = vsub.s32 %v1358, %v1360
    %v1362 = vrot.slane %v1348, %v1361
    %v1363 = vlaneseq
    %v1364 = vshrl.u32 %v1363, 7
    %v1365 = vsub.s32 0, %v1364
    %v1366 = vrot.slane %v1355, %v1365
    %v1367 = vlaneseq
    %v1368 = vshrl.u32 %v1367, 7
    %v1369 = vsub.s32 0, %v1368
    %v1370 = vrot.slane %v1362, %v1369
    %v1373 = vadd.f32 %v1366, %v140
    %v1374 = vadd.f32 %v1370, %v145
    %v1375 = vtanh.pop %v1373
    %v1376 = vtanh.pop %v1374
    %v1377 = vmul.f32 %v1375, %v352
    %v1378 = vmul.f32 %v1376, %v352
    %v1379 = vsel %vm66, %v1377, 0.0
    %1380 = vadd.xlane.f32.xlu0 %v1379
    %v1381 = vpop.xlane.xlu0 %1380
    %v1382 = vsel %vm66, %v1378, 0.0
    %1383 = vadd.xlane.f32.xlu0 %v1382
    %v1384 = vpop.xlane.xlu0 %1383
    %v1387 = vlaneseq
    %v1388 = vshrl.u32 %v1387, 7
    %v1389 = vsub.s32 %v365, %v1388
    %v1390 = vrot.slane %v1381, %v1389
    %v1391 = vlaneseq
    %v1392 = vshrl.u32 %v1391, 7
    %v1393 = vsub.s32 %v365, %v1392
    %v1394 = vrot.slane %v1384, %v1393
    %v1395 = vsel %vm374, %v1394, %v1390
    %v1397 = vsel %vm377, %v1395, -inf
    %1398 = vmax.xlane.f32.xlu0 %v1397
    %v1399 = vpop.xlane.xlu0 %1398
    %v1401 = vlaneseq
    %v1402 = vshrl.u32 %v1401, 7
    %v1403 = vsub.s32 0, %v1402
    %v1404 = vrot.slane %v1399, %v1403
    %v1405 = vlaneseq
    %v1406 = vshrl.u32 %v1405, 7
    %v1407 = vsub.s32 1, %v1406
    %v1408 = vrot.slane %v1399, %v1407
    %v1411 = vsub.f32 %v1381, %v1404
    %v1412 = vsub.f32 %v1384, %v1408
    %v1413 = vmul.f32 %v1411, 1.442695
    %v1414 = vpow.pop %v1413
    %v1415 = vmul.f32 %v1412, 1.442695
    %v1416 = vpow.pop %v1415
    %1419 = vset.pattern.permute.xlu0 0
    %1420 = vperm.xlu0 %1419, %v1414
    %v1421 = vpop.permute.xlu0 %1420
    %1422 = vset.pattern.permute.xlu0 0
    %1423 = vperm.xlu0 %1422, %v1416
    %v1424 = vpop.permute.xlu0 %1423
    %v1425 = vlaneseq
    %v1426 = vshrl.u32 %v1425, 7
    %v1427 = vsub.s32 %v365, %v1426
    %v1428 = vrot.slane %v1421, %v1427
    %v1429 = vlaneseq
    %v1430 = vshrl.u32 %v1429, 7
    %v1431 = vsub.s32 %v365, %v1430
    %v1432 = vrot.slane %v1424, %v1431
    %v1433 = vsel %vm374, %v1432, %v1428
    %v1435 = vsel %vm377, %v1433, 0.0
    %1436 = vadd.xlane.f32.xlu0 %v1435
    %v1437 = vpop.xlane.xlu0 %1436
    %v1438 = vrcp.pop %v1437
    %v1440 = vlaneseq
    %v1441 = vshrl.u32 %v1440, 7
    %v1442 = vsub.s32 0, %v1441
    %v1443 = vrot.slane %v1438, %v1442
    %v1444 = vlaneseq
    %v1445 = vshrl.u32 %v1444, 7
    %v1446 = vsub.s32 1, %v1445
    %v1447 = vrot.slane %v1438, %v1446
    %v1450 = vmul.f32 %v1414, %v1443
    %v1451 = vmul.f32 %v1416, %v1447
    %1453 = vset.pattern.permute.xlu0 0
    %1454 = vperm.xlu0 %1453, %v1450
    %v1455 = vpop.permute.xlu0 %1454
    %1458 = vset.pattern.permute.xlu0 0
    %1459 = vperm.xlu0 %1458, %v1451
    %v1460 = vpop.permute.xlu0 %1459
    %v1462 = vmul.f32 %v1455, %v64
    %v1463 = vmul.f32 %v1460, %v65
    %v1464 = vsel %vm66, %v1462, 0.0
    %v1465 = vrot.slane %v1464, 4
    %v1466 = vadd.f32 %v1464, %v1465
    %v1467 = vrot.slane %v1466, 2
    %v1468 = vadd.f32 %v1466, %v1467
    %v1469 = vrot.slane %v1468, 1
    %v1470 = vadd.f32 %v1468, %v1469
    %v1471 = vsel %vm66, %v1463, 0.0
    %v1472 = vrot.slane %v1471, 4
    %v1473 = vadd.f32 %v1471, %v1472
    %v1474 = vrot.slane %v1473, 2
    %v1475 = vadd.f32 %v1473, %v1474
    %v1476 = vrot.slane %v1475, 1
    %v1477 = vadd.f32 %v1475, %v1476
    %s1478 = scalar_lea.vmem %s1, 6
    %v1479 = vld [vmem:[%s1478] sm:$0x3]
    %v1480 = vmul.f32 %v1479, %v460
    %v1481 = vmul.f32 %v1470, %v463
    %v1482 = vmul.f32 %v1477, %v463
    %v1485 = vrot.slane %v1482, 7
    %v1486 = vsel %vm374, %v1485, %v1481
    %v1488 = vsel %vm472, %v1486, 0.0
    %1489 = vadd.xlane.f32.xlu0 %v1488
    %v1490 = vpop.xlane.xlu0 %1489
    %v1491 = vadd.f32 %v1480, %v1490
    %v1492 = vadd.f32 %v1491, %v477
    %1494 = vset.pattern.permute.xlu0 0
    %1495 = vperm.xlu0 %1494, %v1492
    %v1496 = vpop.permute.xlu0 %1495
    %v1498 = vmul.f32 %v1496, %v58
    %v1499 = vadd.f32 %v1259, %v1498
    %v1500 = vadd.f32 %v1499, %v60
    %v1501 = vxor.u32 %v1500, 2147483648
    %v1502 = vmul.f32 %v1501, 1.442695
    %v1503 = vpow.pop %v1502
    %v1504 = vadd.f32 %v1503, 1.0
    %v1505 = vrcp.pop %v1504
    %v1506 = vmul.f32 1.0, %v1505
    %v1507 = vtanh.pop %v1500
    %v1508 = vmul.f32 %v1506, %v1180
    %1510 = vrot.lane.b32.xlu0 %v1507, 64
    %v1511 = vpop.permute.xlu0 %1510
    %v1513 = vmul.f32 %v1506, %v1511
    %1515 = vrot.lane.b32.xlu0 %v1513, 32
    %v1516 = vpop.permute.xlu0 %1515
    %v1518 = vadd.f32 %v1508, %v1516
    %v1519 = vtanh.pop %v1518
    %1521 = vrot.lane.b32.xlu0 %v1519, 64
    %v1522 = vpop.permute.xlu0 %1521
    %v1524 = vmul.f32 %v1506, %v1522
    %1526 = vrot.lane.b32.xlu0 %v1524, 32
    %v1527 = vpop.permute.xlu0 %1526
    %v1528 = vsel %vm66, %v1527, 0
    %1530 = vmatprep.subr.mxu0 %v45
    %1531 = vmatpush1.msra.mxu0 %v44
    %1532 = vmatprep.subr.mxu0 %v47
    %1533 = vmatpush1.msra.mxu0 %v46
    %1534 = vmatprep.subr.mxu0 %v49
    %1535 = vmatpush1.msra.mxu0 %v48
    %1536 = vmatprep.subr.mxu0 %v51
    %1537 = vmatpush1.msra.mxu0 %v50
    %1538 = vmatprep.subr.mxu0 0.0
    %1539 = vmatpush1.msra.mxu0 0.0
    %1540 = vmatprep.subr.mxu0 0.0
    %1541 = vmatpush1.msra.mxu0 0.0
    %1542 = vmatprep.subr.mxu0 0.0
    %1543 = vmatpush1.msra.mxu0 0.0
    %1544 = vmatprep.subr.mxu0 0.0
    %1545 = vmatpush1.msra.mxu0 0.0
    %1546 = vmatprep.subr.mxu0 0.0
    %1547 = vmatpush1.msra.mxu0 0.0
    %1548 = vmatprep.subr.mxu0 0.0
    %1549 = vmatpush1.msra.mxu0 0.0
    %1550 = vmatprep.subr.mxu0 0.0
    %1551 = vmatpush1.msra.mxu0 0.0
    %1552 = vmatprep.subr.mxu0 0.0
    %1553 = vmatpush1.msra.mxu0 0.0
    %1554 = vmatprep.subr.mxu0 0.0
    %1555 = vmatpush1.msra.mxu0 0.0
    %1556 = vmatprep.subr.mxu0 0.0
    %1557 = vmatpush1.msra.mxu0 0.0
    %1558 = vmatprep.subr.mxu0 0.0
    %1559 = vmatpush1.msra.mxu0 0.0
    %1560 = vmatprep.subr.mxu0 0.0
    %1561 = vmatpush1.msra.mxu0 0.0
    %1562 = vmatprep.subr.mxu0 0.0
    %1563 = vmatpush1.msra.mxu0 0.0
    %1564 = vmatprep.subr.mxu0 0.0
    %1565 = vmatpush1.msra.mxu0 0.0
    %1566 = vmatprep.subr.mxu0 0.0
    %1567 = vmatpush1.msra.mxu0 0.0
    %1568 = vmatprep.subr.mxu0 0.0
    %1569 = vmatpush1.msra.mxu0 0.0
    %1570 = vmatprep.subr.mxu0 0.0
    %1571 = vmatpush1.msra.mxu0 0.0
    %1572 = vmatprep.subr.mxu0 0.0
    %1573 = vmatpush1.msra.mxu0 0.0
    %1574 = vmatprep.subr.mxu0 0.0
    %1575 = vmatpush1.msra.mxu0 0.0
    %1576 = vmatprep.subr.mxu0 0.0
    %1577 = vmatpush1.msra.mxu0 0.0
    %1578 = vmatprep.subr.mxu0 0.0
    %1579 = vmatpush1.msra.mxu0 0.0
    %1580 = vmatprep.subr.mxu0 0.0
    %1581 = vmatpush1.msra.mxu0 0.0
    %1582 = vmatprep.subr.mxu0 0.0
    %1583 = vmatpush1.msra.mxu0 0.0
    %1584 = vmatprep.subr.mxu0 0.0
    %1585 = vmatpush1.msra.mxu0 0.0
    %1586 = vmatprep.subr.mxu0 0.0
    %1587 = vmatpush1.msra.mxu0 0.0
    %1588 = vmatprep.subr.mxu0 0.0
    %1589 = vmatpush1.msra.mxu0 0.0
    %1590 = vmatprep.subr.mxu0 0.0
    %1591 = vmatpush1.msra.mxu0 0.0
    %1592 = vmatprep.subr.mxu0 0.0
    %1593 = vmatpush1.msra.mxu0 0.0
    %1594 = vmatprep.mubr.f32.mxu0 0.0
    %1595 = vmatmul.mubr.f32.gmra.mrb[0].mxu0 %v1528
    %v1596 = vpop.f32.mrb[0].mxu0
    %v1597 = vadd.f32 0.0, %v1596
    %v1598 = vpop.f32.mrb[0].mxu0
    %v1599 = vadd.f32 0.0, %v1598
    %1600 = vdwg.mxu0
    %1602 = vrot.lane.b32.xlu0 %v1518, 96
    %v1603 = vpop.permute.xlu0 %1602
    %v1604 = vsel %vm66, %v1603, 0
    %1606 = vmatprep.subr.mxu0 0.0
    %1607 = vmatpush1.msra.mxu0 %v227
    %1608 = vmatprep.subr.mxu0 0.0
    %1609 = vmatpush1.msra.mxu0 %v229
    %1610 = vmatprep.subr.mxu0 0.0
    %1611 = vmatpush1.msra.mxu0 %v231
    %1612 = vmatprep.subr.mxu0 0.0
    %1613 = vmatpush1.msra.mxu0 %v233
    %1614 = vmatprep.subr.mxu0 0.0
    %1615 = vmatpush1.msra.mxu0 0.0
    %1616 = vmatprep.subr.mxu0 0.0
    %1617 = vmatpush1.msra.mxu0 0.0
    %1618 = vmatprep.subr.mxu0 0.0
    %1619 = vmatpush1.msra.mxu0 0.0
    %1620 = vmatprep.subr.mxu0 0.0
    %1621 = vmatpush1.msra.mxu0 0.0
    %1622 = vmatprep.subr.mxu0 0.0
    %1623 = vmatpush1.msra.mxu0 0.0
    %1624 = vmatprep.subr.mxu0 0.0
    %1625 = vmatpush1.msra.mxu0 0.0
    %1626 = vmatprep.subr.mxu0 0.0
    %1627 = vmatpush1.msra.mxu0 0.0
    %1628 = vmatprep.subr.mxu0 0.0
    %1629 = vmatpush1.msra.mxu0 0.0
    %1630 = vmatprep.subr.mxu0 0.0
    %1631 = vmatpush1.msra.mxu0 0.0
    %1632 = vmatprep.subr.mxu0 0.0
    %1633 = vmatpush1.msra.mxu0 0.0
    %1634 = vmatprep.subr.mxu0 0.0
    %1635 = vmatpush1.msra.mxu0 0.0
    %1636 = vmatprep.subr.mxu0 0.0
    %1637 = vmatpush1.msra.mxu0 0.0
    %1638 = vmatprep.subr.mxu0 0.0
    %1639 = vmatpush1.msra.mxu0 0.0
    %1640 = vmatprep.subr.mxu0 0.0
    %1641 = vmatpush1.msra.mxu0 0.0
    %1642 = vmatprep.subr.mxu0 0.0
    %1643 = vmatpush1.msra.mxu0 0.0
    %1644 = vmatprep.subr.mxu0 0.0
    %1645 = vmatpush1.msra.mxu0 0.0
    %1646 = vmatprep.subr.mxu0 0.0
    %1647 = vmatpush1.msra.mxu0 0.0
    %1648 = vmatprep.subr.mxu0 0.0
    %1649 = vmatpush1.msra.mxu0 0.0
    %1650 = vmatprep.subr.mxu0 0.0
    %1651 = vmatpush1.msra.mxu0 0.0
    %1652 = vmatprep.subr.mxu0 0.0
    %1653 = vmatpush1.msra.mxu0 0.0
    %1654 = vmatprep.subr.mxu0 0.0
    %1655 = vmatpush1.msra.mxu0 0.0
    %1656 = vmatprep.subr.mxu0 0.0
    %1657 = vmatpush1.msra.mxu0 0.0
    %1658 = vmatprep.subr.mxu0 0.0
    %1659 = vmatpush1.msra.mxu0 0.0
    %1660 = vmatprep.subr.mxu0 0.0
    %1661 = vmatpush1.msra.mxu0 0.0
    %1662 = vmatprep.subr.mxu0 0.0
    %1663 = vmatpush1.msra.mxu0 0.0
    %1664 = vmatprep.subr.mxu0 0.0
    %1665 = vmatpush1.msra.mxu0 0.0
    %1666 = vmatprep.subr.mxu0 0.0
    %1667 = vmatpush1.msra.mxu0 0.0
    %1668 = vmatprep.subr.mxu0 0.0
    %1669 = vmatpush1.msra.mxu0 0.0
    %1670 = vmatprep.mubr.f32.mxu0 0.0
    %1671 = vmatmul.mubr.f32.gmra.mrb[0].mxu0 %v1604
    %v1672 = vpop.f32.mrb[0].mxu0
    %v1673 = vadd.f32 0.0, %v1672
    %v1674 = vpop.f32.mrb[0].mxu0
    %1675 = vdwg.mxu0
    %v1676 = vadd.f32 %v1599, %v1673
    %v1677 = vadd.f32 %v1676, %v311
    %v1680 = vunpack.c.l.s4 1966171168
    %v1681 = vunpack.c.0.s8 %v1680
    %v1682 = vlaneseq
    %v1683 = vshrl.u32 %v1682, 7
    %v1684 = vsub.s32 %v1681, %v1683
    %v1685 = vrot.slane %v1677, %v1684
    %v1686 = vcombine.high %v1685, %v1685
    %v1688 = vunpack.c.l.s4 1966171168
    %v1689 = vunpack.c.0.s8 %v1688
    %v1690 = vlaneseq
    %v1691 = vshrl.u32 %v1690, 7
    %v1692 = vsub.s32 %v1689, %v1691
    %v1693 = vrot.slane %v1685, %v1692
    %v1695 = vunpack.c.l.s4 1966171168
    %v1696 = vunpack.c.0.s8 %v1695
    %v1697 = vlaneseq
    %v1698 = vshrl.u32 %v1697, 7
    %v1699 = vsub.s32 %v1696, %v1698
    %v1700 = vrot.slane %v1686, %v1699
    %v1701 = vlaneseq
    %v1702 = vshrl.u32 %v1701, 7
    %v1703 = vsub.s32 0, %v1702
    %v1704 = vrot.slane %v1693, %v1703
    %v1705 = vlaneseq
    %v1706 = vshrl.u32 %v1705, 7
    %v1707 = vsub.s32 0, %v1706
    %v1708 = vrot.slane %v1700, %v1707
    %v1711 = vadd.f32 %v1704, %v140
    %v1712 = vadd.f32 %v1708, %v145
    %v1713 = vtanh.pop %v1711
    %v1714 = vtanh.pop %v1712
    %v1715 = vmul.f32 %v1713, %v352
    %v1716 = vmul.f32 %v1714, %v352
    %v1717 = vsel %vm66, %v1715, 0.0
    %1718 = vadd.xlane.f32.xlu0 %v1717
    %v1719 = vpop.xlane.xlu0 %1718
    %v1720 = vsel %vm66, %v1716, 0.0
    %1721 = vadd.xlane.f32.xlu0 %v1720
    %v1722 = vpop.xlane.xlu0 %1721
    %v1725 = vlaneseq
    %v1726 = vshrl.u32 %v1725, 7
    %v1727 = vsub.s32 %v365, %v1726
    %v1728 = vrot.slane %v1719, %v1727
    %v1729 = vlaneseq
    %v1730 = vshrl.u32 %v1729, 7
    %v1731 = vsub.s32 %v365, %v1730
    %v1732 = vrot.slane %v1722, %v1731
    %v1733 = vsel %vm374, %v1732, %v1728
    %v1735 = vsel %vm377, %v1733, -inf
    %1736 = vmax.xlane.f32.xlu0 %v1735
    %v1737 = vpop.xlane.xlu0 %1736
    %v1739 = vlaneseq
    %v1740 = vshrl.u32 %v1739, 7
    %v1741 = vsub.s32 0, %v1740
    %v1742 = vrot.slane %v1737, %v1741
    %v1743 = vlaneseq
    %v1744 = vshrl.u32 %v1743, 7
    %v1745 = vsub.s32 1, %v1744
    %v1746 = vrot.slane %v1737, %v1745
    %v1749 = vsub.f32 %v1719, %v1742
    %v1750 = vsub.f32 %v1722, %v1746
    %v1751 = vmul.f32 %v1749, 1.442695
    %v1752 = vpow.pop %v1751
    %v1753 = vmul.f32 %v1750, 1.442695
    %v1754 = vpow.pop %v1753
    %1757 = vset.pattern.permute.xlu0 0
    %1758 = vperm.xlu0 %1757, %v1752
    %v1759 = vpop.permute.xlu0 %1758
    %1760 = vset.pattern.permute.xlu0 0
    %1761 = vperm.xlu0 %1760, %v1754
    %v1762 = vpop.permute.xlu0 %1761
    %v1763 = vlaneseq
    %v1764 = vshrl.u32 %v1763, 7
    %v1765 = vsub.s32 %v365, %v1764
    %v1766 = vrot.slane %v1759, %v1765
    %v1767 = vlaneseq
    %v1768 = vshrl.u32 %v1767, 7
    %v1769 = vsub.s32 %v365, %v1768
    %v1770 = vrot.slane %v1762, %v1769
    %v1771 = vsel %vm374, %v1770, %v1766
    %v1773 = vsel %vm377, %v1771, 0.0
    %1774 = vadd.xlane.f32.xlu0 %v1773
    %v1775 = vpop.xlane.xlu0 %1774
    %v1776 = vrcp.pop %v1775
    %v1778 = vlaneseq
    %v1779 = vshrl.u32 %v1778, 7
    %v1780 = vsub.s32 0, %v1779
    %v1781 = vrot.slane %v1776, %v1780
    %v1782 = vlaneseq
    %v1783 = vshrl.u32 %v1782, 7
    %v1784 = vsub.s32 1, %v1783
    %v1785 = vrot.slane %v1776, %v1784
    %v1788 = vmul.f32 %v1752, %v1781
    %v1789 = vmul.f32 %v1754, %v1785
    %1791 = vset.pattern.permute.xlu0 0
    %1792 = vperm.xlu0 %1791, %v1788
    %v1793 = vpop.permute.xlu0 %1792
    %1796 = vset.pattern.permute.xlu0 0
    %1797 = vperm.xlu0 %1796, %v1789
    %v1798 = vpop.permute.xlu0 %1797
    %v1800 = vmul.f32 %v1793, %v64
    %v1801 = vmul.f32 %v1798, %v65
    %v1802 = vsel %vm66, %v1800, 0.0
    %v1803 = vrot.slane %v1802, 4
    %v1804 = vadd.f32 %v1802, %v1803
    %v1805 = vrot.slane %v1804, 2
    %v1806 = vadd.f32 %v1804, %v1805
    %v1807 = vrot.slane %v1806, 1
    %v1808 = vadd.f32 %v1806, %v1807
    %v1809 = vsel %vm66, %v1801, 0.0
    %v1810 = vrot.slane %v1809, 4
    %v1811 = vadd.f32 %v1809, %v1810
    %v1812 = vrot.slane %v1811, 2
    %v1813 = vadd.f32 %v1811, %v1812
    %v1814 = vrot.slane %v1813, 1
    %v1815 = vadd.f32 %v1813, %v1814
    %s1816 = scalar_lea.vmem %s1, 8
    %v1817 = vld [vmem:[%s1816] sm:$0x3]
    %v1818 = vmul.f32 %v1817, %v460
    %v1819 = vmul.f32 %v1808, %v463
    %v1820 = vmul.f32 %v1815, %v463
    %v1823 = vrot.slane %v1820, 7
    %v1824 = vsel %vm374, %v1823, %v1819
    %v1826 = vsel %vm472, %v1824, 0.0
    %1827 = vadd.xlane.f32.xlu0 %v1826
    %v1828 = vpop.xlane.xlu0 %1827
    %v1829 = vadd.f32 %v1818, %v1828
    %v1830 = vadd.f32 %v1829, %v477
    %1832 = vset.pattern.permute.xlu0 0
    %1833 = vperm.xlu0 %1832, %v1830
    %v1834 = vpop.permute.xlu0 %1833
    %v1836 = vmul.f32 %v1834, %v58
    %v1837 = vadd.f32 %v1597, %v1836
    %v1838 = vadd.f32 %v1837, %v60
    %v1839 = vxor.u32 %v1838, 2147483648
    %v1840 = vmul.f32 %v1839, 1.442695
    %v1841 = vpow.pop %v1840
    %v1842 = vadd.f32 %v1841, 1.0
    %v1843 = vrcp.pop %v1842
    %v1844 = vmul.f32 1.0, %v1843
    %v1845 = vtanh.pop %v1838
    %v1846 = vmul.f32 %v1844, %v1518
    %1848 = vrot.lane.b32.xlu0 %v1845, 64
    %v1849 = vpop.permute.xlu0 %1848
    %v1851 = vmul.f32 %v1844, %v1849
    %1853 = vrot.lane.b32.xlu0 %v1851, 32
    %v1854 = vpop.permute.xlu0 %1853
    %v1856 = vadd.f32 %v1846, %v1854
    %v1857 = vtanh.pop %v1856
    %1859 = vrot.lane.b32.xlu0 %v1857, 64
    %v1860 = vpop.permute.xlu0 %1859
    %v1862 = vmul.f32 %v1844, %v1860
    %1864 = vrot.lane.b32.xlu0 %v1862, 32
    %v1865 = vpop.permute.xlu0 %1864
    %v1866 = vsel %vm66, %v1865, 0
    %1868 = vmatprep.subr.mxu0 %v45
    %1869 = vmatpush1.msra.mxu0 %v44
    %1870 = vmatprep.subr.mxu0 %v47
    %1871 = vmatpush1.msra.mxu0 %v46
    %1872 = vmatprep.subr.mxu0 %v49
    %1873 = vmatpush1.msra.mxu0 %v48
    %1874 = vmatprep.subr.mxu0 %v51
    %1875 = vmatpush1.msra.mxu0 %v50
    %1876 = vmatprep.subr.mxu0 0.0
    %1877 = vmatpush1.msra.mxu0 0.0
    %1878 = vmatprep.subr.mxu0 0.0
    %1879 = vmatpush1.msra.mxu0 0.0
    %1880 = vmatprep.subr.mxu0 0.0
    %1881 = vmatpush1.msra.mxu0 0.0
    %1882 = vmatprep.subr.mxu0 0.0
    %1883 = vmatpush1.msra.mxu0 0.0
    %1884 = vmatprep.subr.mxu0 0.0
    %1885 = vmatpush1.msra.mxu0 0.0
    %1886 = vmatprep.subr.mxu0 0.0
    %1887 = vmatpush1.msra.mxu0 0.0
    %1888 = vmatprep.subr.mxu0 0.0
    %1889 = vmatpush1.msra.mxu0 0.0
    %1890 = vmatprep.subr.mxu0 0.0
    %1891 = vmatpush1.msra.mxu0 0.0
    %1892 = vmatprep.subr.mxu0 0.0
    %1893 = vmatpush1.msra.mxu0 0.0
    %1894 = vmatprep.subr.mxu0 0.0
    %1895 = vmatpush1.msra.mxu0 0.0
    %1896 = vmatprep.subr.mxu0 0.0
    %1897 = vmatpush1.msra.mxu0 0.0
    %1898 = vmatprep.subr.mxu0 0.0
    %1899 = vmatpush1.msra.mxu0 0.0
    %1900 = vmatprep.subr.mxu0 0.0
    %1901 = vmatpush1.msra.mxu0 0.0
    %1902 = vmatprep.subr.mxu0 0.0
    %1903 = vmatpush1.msra.mxu0 0.0
    %1904 = vmatprep.subr.mxu0 0.0
    %1905 = vmatpush1.msra.mxu0 0.0
    %1906 = vmatprep.subr.mxu0 0.0
    %1907 = vmatpush1.msra.mxu0 0.0
    %1908 = vmatprep.subr.mxu0 0.0
    %1909 = vmatpush1.msra.mxu0 0.0
    %1910 = vmatprep.subr.mxu0 0.0
    %1911 = vmatpush1.msra.mxu0 0.0
    %1912 = vmatprep.subr.mxu0 0.0
    %1913 = vmatpush1.msra.mxu0 0.0
    %1914 = vmatprep.subr.mxu0 0.0
    %1915 = vmatpush1.msra.mxu0 0.0
    %1916 = vmatprep.subr.mxu0 0.0
    %1917 = vmatpush1.msra.mxu0 0.0
    %1918 = vmatprep.subr.mxu0 0.0
    %1919 = vmatpush1.msra.mxu0 0.0
    %1920 = vmatprep.subr.mxu0 0.0
    %1921 = vmatpush1.msra.mxu0 0.0
    %1922 = vmatprep.subr.mxu0 0.0
    %1923 = vmatpush1.msra.mxu0 0.0
    %1924 = vmatprep.subr.mxu0 0.0
    %1925 = vmatpush1.msra.mxu0 0.0
    %1926 = vmatprep.subr.mxu0 0.0
    %1927 = vmatpush1.msra.mxu0 0.0
    %1928 = vmatprep.subr.mxu0 0.0
    %1929 = vmatpush1.msra.mxu0 0.0
    %1930 = vmatprep.subr.mxu0 0.0
    %1931 = vmatpush1.msra.mxu0 0.0
    %1932 = vmatprep.mubr.f32.mxu0 0.0
    %1933 = vmatmul.mubr.f32.gmra.mrb[0].mxu0 %v1866
    %v1934 = vpop.f32.mrb[0].mxu0
    %v1935 = vadd.f32 0.0, %v1934
    %v1936 = vpop.f32.mrb[0].mxu0
    %v1937 = vadd.f32 0.0, %v1936
    %1938 = vdwg.mxu0
    %1940 = vrot.lane.b32.xlu0 %v1856, 96
    %v1941 = vpop.permute.xlu0 %1940
    %v1942 = vsel %vm66, %v1941, 0
    %1944 = vmatprep.subr.mxu0 0.0
    %1945 = vmatpush1.msra.mxu0 %v227
    %1946 = vmatprep.subr.mxu0 0.0
    %1947 = vmatpush1.msra.mxu0 %v229
    %1948 = vmatprep.subr.mxu0 0.0
    %1949 = vmatpush1.msra.mxu0 %v231
    %1950 = vmatprep.subr.mxu0 0.0
    %1951 = vmatpush1.msra.mxu0 %v233
    %1952 = vmatprep.subr.mxu0 0.0
    %1953 = vmatpush1.msra.mxu0 0.0
    %1954 = vmatprep.subr.mxu0 0.0
    %1955 = vmatpush1.msra.mxu0 0.0
    %1956 = vmatprep.subr.mxu0 0.0
    %1957 = vmatpush1.msra.mxu0 0.0
    %1958 = vmatprep.subr.mxu0 0.0
    %1959 = vmatpush1.msra.mxu0 0.0
    %1960 = vmatprep.subr.mxu0 0.0
    %1961 = vmatpush1.msra.mxu0 0.0
    %1962 = vmatprep.subr.mxu0 0.0
    %1963 = vmatpush1.msra.mxu0 0.0
    %1964 = vmatprep.subr.mxu0 0.0
    %1965 = vmatpush1.msra.mxu0 0.0
    %1966 = vmatprep.subr.mxu0 0.0
    %1967 = vmatpush1.msra.mxu0 0.0
    %1968 = vmatprep.subr.mxu0 0.0
    %1969 = vmatpush1.msra.mxu0 0.0
    %1970 = vmatprep.subr.mxu0 0.0
    %1971 = vmatpush1.msra.mxu0 0.0
    %1972 = vmatprep.subr.mxu0 0.0
    %1973 = vmatpush1.msra.mxu0 0.0
    %1974 = vmatprep.subr.mxu0 0.0
    %1975 = vmatpush1.msra.mxu0 0.0
    %1976 = vmatprep.subr.mxu0 0.0
    %1977 = vmatpush1.msra.mxu0 0.0
    %1978 = vmatprep.subr.mxu0 0.0
    %1979 = vmatpush1.msra.mxu0 0.0
    %1980 = vmatprep.subr.mxu0 0.0
    %1981 = vmatpush1.msra.mxu0 0.0
    %1982 = vmatprep.subr.mxu0 0.0
    %1983 = vmatpush1.msra.mxu0 0.0
    %1984 = vmatprep.subr.mxu0 0.0
    %1985 = vmatpush1.msra.mxu0 0.0
    %1986 = vmatprep.subr.mxu0 0.0
    %1987 = vmatpush1.msra.mxu0 0.0
    %1988 = vmatprep.subr.mxu0 0.0
    %1989 = vmatpush1.msra.mxu0 0.0
    %1990 = vmatprep.subr.mxu0 0.0
    %1991 = vmatpush1.msra.mxu0 0.0
    %1992 = vmatprep.subr.mxu0 0.0
    %1993 = vmatpush1.msra.mxu0 0.0
    %1994 = vmatprep.subr.mxu0 0.0
    %1995 = vmatpush1.msra.mxu0 0.0
    %1996 = vmatprep.subr.mxu0 0.0
    %1997 = vmatpush1.msra.mxu0 0.0
    %1998 = vmatprep.subr.mxu0 0.0
    %1999 = vmatpush1.msra.mxu0 0.0
    %2000 = vmatprep.subr.mxu0 0.0
    %2001 = vmatpush1.msra.mxu0 0.0
    %2002 = vmatprep.subr.mxu0 0.0
    %2003 = vmatpush1.msra.mxu0 0.0
    %2004 = vmatprep.subr.mxu0 0.0
    %2005 = vmatpush1.msra.mxu0 0.0
    %2006 = vmatprep.subr.mxu0 0.0
    %2007 = vmatpush1.msra.mxu0 0.0
    %2008 = vmatprep.mubr.f32.mxu0 0.0
    %2009 = vmatmul.mubr.f32.gmra.mrb[0].mxu0 %v1942
    %v2010 = vpop.f32.mrb[0].mxu0
    %v2011 = vadd.f32 0.0, %v2010
    %v2012 = vpop.f32.mrb[0].mxu0
    %2013 = vdwg.mxu0
    %v2014 = vadd.f32 %v1937, %v2011
    %v2015 = vadd.f32 %v2014, %v311
    %v2018 = vunpack.c.l.s4 1966171168
    %v2019 = vunpack.c.0.s8 %v2018
    %v2020 = vlaneseq
    %v2021 = vshrl.u32 %v2020, 7
    %v2022 = vsub.s32 %v2019, %v2021
    %v2023 = vrot.slane %v2015, %v2022
    %v2024 = vcombine.high %v2023, %v2023
    %v2026 = vunpack.c.l.s4 1966171168
    %v2027 = vunpack.c.0.s8 %v2026
    %v2028 = vlaneseq
    %v2029 = vshrl.u32 %v2028, 7
    %v2030 = vsub.s32 %v2027, %v2029
    %v2031 = vrot.slane %v2023, %v2030
    %v2033 = vunpack.c.l.s4 1966171168
    %v2034 = vunpack.c.0.s8 %v2033
    %v2035 = vlaneseq
    %v2036 = vshrl.u32 %v2035, 7
    %v2037 = vsub.s32 %v2034, %v2036
    %v2038 = vrot.slane %v2024, %v2037
    %v2039 = vlaneseq
    %v2040 = vshrl.u32 %v2039, 7
    %v2041 = vsub.s32 0, %v2040
    %v2042 = vrot.slane %v2031, %v2041
    %v2043 = vlaneseq
    %v2044 = vshrl.u32 %v2043, 7
    %v2045 = vsub.s32 0, %v2044
    %v2046 = vrot.slane %v2038, %v2045
    %v2049 = vadd.f32 %v2042, %v140
    %v2050 = vadd.f32 %v2046, %v145
    %v2051 = vtanh.pop %v2049
    %v2052 = vtanh.pop %v2050
    %v2053 = vmul.f32 %v2051, %v352
    %v2054 = vmul.f32 %v2052, %v352
    %v2055 = vsel %vm66, %v2053, 0.0
    %2056 = vadd.xlane.f32.xlu0 %v2055
    %v2057 = vpop.xlane.xlu0 %2056
    %v2058 = vsel %vm66, %v2054, 0.0
    %2059 = vadd.xlane.f32.xlu0 %v2058
    %v2060 = vpop.xlane.xlu0 %2059
    %v2063 = vlaneseq
    %v2064 = vshrl.u32 %v2063, 7
    %v2065 = vsub.s32 %v365, %v2064
    %v2066 = vrot.slane %v2057, %v2065
    %v2067 = vlaneseq
    %v2068 = vshrl.u32 %v2067, 7
    %v2069 = vsub.s32 %v365, %v2068
    %v2070 = vrot.slane %v2060, %v2069
    %v2071 = vsel %vm374, %v2070, %v2066
    %v2073 = vsel %vm377, %v2071, -inf
    %2074 = vmax.xlane.f32.xlu0 %v2073
    %v2075 = vpop.xlane.xlu0 %2074
    %v2077 = vlaneseq
    %v2078 = vshrl.u32 %v2077, 7
    %v2079 = vsub.s32 0, %v2078
    %v2080 = vrot.slane %v2075, %v2079
    %v2081 = vlaneseq
    %v2082 = vshrl.u32 %v2081, 7
    %v2083 = vsub.s32 1, %v2082
    %v2084 = vrot.slane %v2075, %v2083
    %v2087 = vsub.f32 %v2057, %v2080
    %v2088 = vsub.f32 %v2060, %v2084
    %v2089 = vmul.f32 %v2087, 1.442695
    %v2090 = vpow.pop %v2089
    %v2091 = vmul.f32 %v2088, 1.442695
    %v2092 = vpow.pop %v2091
    %2095 = vset.pattern.permute.xlu0 0
    %2096 = vperm.xlu0 %2095, %v2090
    %v2097 = vpop.permute.xlu0 %2096
    %2098 = vset.pattern.permute.xlu0 0
    %2099 = vperm.xlu0 %2098, %v2092
    %v2100 = vpop.permute.xlu0 %2099
    %v2101 = vlaneseq
    %v2102 = vshrl.u32 %v2101, 7
    %v2103 = vsub.s32 %v365, %v2102
    %v2104 = vrot.slane %v2097, %v2103
    %v2105 = vlaneseq
    %v2106 = vshrl.u32 %v2105, 7
    %v2107 = vsub.s32 %v365, %v2106
    %v2108 = vrot.slane %v2100, %v2107
    %v2109 = vsel %vm374, %v2108, %v2104
    %v2111 = vsel %vm377, %v2109, 0.0
    %2112 = vadd.xlane.f32.xlu0 %v2111
    %v2113 = vpop.xlane.xlu0 %2112
    %v2114 = vrcp.pop %v2113
    %v2116 = vlaneseq
    %v2117 = vshrl.u32 %v2116, 7
    %v2118 = vsub.s32 0, %v2117
    %v2119 = vrot.slane %v2114, %v2118
    %v2120 = vlaneseq
    %v2121 = vshrl.u32 %v2120, 7
    %v2122 = vsub.s32 1, %v2121
    %v2123 = vrot.slane %v2114, %v2122
    %v2126 = vmul.f32 %v2090, %v2119
    %v2127 = vmul.f32 %v2092, %v2123
    %2129 = vset.pattern.permute.xlu0 0
    %2130 = vperm.xlu0 %2129, %v2126
    %v2131 = vpop.permute.xlu0 %2130
    %2134 = vset.pattern.permute.xlu0 0
    %2135 = vperm.xlu0 %2134, %v2127
    %v2136 = vpop.permute.xlu0 %2135
    %v2138 = vmul.f32 %v2131, %v64
    %v2139 = vmul.f32 %v2136, %v65
    %v2140 = vsel %vm66, %v2138, 0.0
    %v2141 = vrot.slane %v2140, 4
    %v2142 = vadd.f32 %v2140, %v2141
    %v2143 = vrot.slane %v2142, 2
    %v2144 = vadd.f32 %v2142, %v2143
    %v2145 = vrot.slane %v2144, 1
    %v2146 = vadd.f32 %v2144, %v2145
    %v2147 = vsel %vm66, %v2139, 0.0
    %v2148 = vrot.slane %v2147, 4
    %v2149 = vadd.f32 %v2147, %v2148
    %v2150 = vrot.slane %v2149, 2
    %v2151 = vadd.f32 %v2149, %v2150
    %v2152 = vrot.slane %v2151, 1
    %v2153 = vadd.f32 %v2151, %v2152
    %s2154 = scalar_lea.vmem %s1, 10
    %v2155 = vld [vmem:[%s2154] sm:$0x3]
    %v2156 = vmul.f32 %v2155, %v460
    %v2157 = vmul.f32 %v2146, %v463
    %v2158 = vmul.f32 %v2153, %v463
    %v2161 = vrot.slane %v2158, 7
    %v2162 = vsel %vm374, %v2161, %v2157
    %v2164 = vsel %vm472, %v2162, 0.0
    %2165 = vadd.xlane.f32.xlu0 %v2164
    %v2166 = vpop.xlane.xlu0 %2165
    %v2167 = vadd.f32 %v2156, %v2166
    %v2168 = vadd.f32 %v2167, %v477
    %2170 = vset.pattern.permute.xlu0 0
    %2171 = vperm.xlu0 %2170, %v2168
    %v2172 = vpop.permute.xlu0 %2171
    %v2174 = vmul.f32 %v2172, %v58
    %v2175 = vadd.f32 %v1935, %v2174
    %v2176 = vadd.f32 %v2175, %v60
    %v2177 = vxor.u32 %v2176, 2147483648
    %v2178 = vmul.f32 %v2177, 1.442695
    %v2179 = vpow.pop %v2178
    %v2180 = vadd.f32 %v2179, 1.0
    %v2181 = vrcp.pop %v2180
    %v2182 = vmul.f32 1.0, %v2181
    %v2183 = vtanh.pop %v2176
    %v2184 = vmul.f32 %v2182, %v1856
    %2186 = vrot.lane.b32.xlu0 %v2183, 64
    %v2187 = vpop.permute.xlu0 %2186
    %v2189 = vmul.f32 %v2182, %v2187
    %2191 = vrot.lane.b32.xlu0 %v2189, 32
    %v2192 = vpop.permute.xlu0 %2191
    %v2194 = vadd.f32 %v2184, %v2192
    %v2195 = vtanh.pop %v2194
    %2197 = vrot.lane.b32.xlu0 %v2195, 64
    %v2198 = vpop.permute.xlu0 %2197
    %v2200 = vmul.f32 %v2182, %v2198
    %2202 = vrot.lane.b32.xlu0 %v2200, 32
    %v2203 = vpop.permute.xlu0 %2202
    %v2204 = vsel %vm66, %v2203, 0
    %2206 = vmatprep.subr.mxu0 %v45
    %2207 = vmatpush1.msra.mxu0 %v44
    %2208 = vmatprep.subr.mxu0 %v47
    %2209 = vmatpush1.msra.mxu0 %v46
    %2210 = vmatprep.subr.mxu0 %v49
    %2211 = vmatpush1.msra.mxu0 %v48
    %2212 = vmatprep.subr.mxu0 %v51
    %2213 = vmatpush1.msra.mxu0 %v50
    %2214 = vmatprep.subr.mxu0 0.0
    %2215 = vmatpush1.msra.mxu0 0.0
    %2216 = vmatprep.subr.mxu0 0.0
    %2217 = vmatpush1.msra.mxu0 0.0
    %2218 = vmatprep.subr.mxu0 0.0
    %2219 = vmatpush1.msra.mxu0 0.0
    %2220 = vmatprep.subr.mxu0 0.0
    %2221 = vmatpush1.msra.mxu0 0.0
    %2222 = vmatprep.subr.mxu0 0.0
    %2223 = vmatpush1.msra.mxu0 0.0
    %2224 = vmatprep.subr.mxu0 0.0
    %2225 = vmatpush1.msra.mxu0 0.0
    %2226 = vmatprep.subr.mxu0 0.0
    %2227 = vmatpush1.msra.mxu0 0.0
    %2228 = vmatprep.subr.mxu0 0.0
    %2229 = vmatpush1.msra.mxu0 0.0
    %2230 = vmatprep.subr.mxu0 0.0
    %2231 = vmatpush1.msra.mxu0 0.0
    %2232 = vmatprep.subr.mxu0 0.0
    %2233 = vmatpush1.msra.mxu0 0.0
    %2234 = vmatprep.subr.mxu0 0.0
    %2235 = vmatpush1.msra.mxu0 0.0
    %2236 = vmatprep.subr.mxu0 0.0
    %2237 = vmatpush1.msra.mxu0 0.0
    %2238 = vmatprep.subr.mxu0 0.0
    %2239 = vmatpush1.msra.mxu0 0.0
    %2240 = vmatprep.subr.mxu0 0.0
    %2241 = vmatpush1.msra.mxu0 0.0
    %2242 = vmatprep.subr.mxu0 0.0
    %2243 = vmatpush1.msra.mxu0 0.0
    %2244 = vmatprep.subr.mxu0 0.0
    %2245 = vmatpush1.msra.mxu0 0.0
    %2246 = vmatprep.subr.mxu0 0.0
    %2247 = vmatpush1.msra.mxu0 0.0
    %2248 = vmatprep.subr.mxu0 0.0
    %2249 = vmatpush1.msra.mxu0 0.0
    %2250 = vmatprep.subr.mxu0 0.0
    %2251 = vmatpush1.msra.mxu0 0.0
    %2252 = vmatprep.subr.mxu0 0.0
    %2253 = vmatpush1.msra.mxu0 0.0
    %2254 = vmatprep.subr.mxu0 0.0
    %2255 = vmatpush1.msra.mxu0 0.0
    %2256 = vmatprep.subr.mxu0 0.0
    %2257 = vmatpush1.msra.mxu0 0.0
    %2258 = vmatprep.subr.mxu0 0.0
    %2259 = vmatpush1.msra.mxu0 0.0
    %2260 = vmatprep.subr.mxu0 0.0
    %2261 = vmatpush1.msra.mxu0 0.0
    %2262 = vmatprep.subr.mxu0 0.0
    %2263 = vmatpush1.msra.mxu0 0.0
    %2264 = vmatprep.subr.mxu0 0.0
    %2265 = vmatpush1.msra.mxu0 0.0
    %2266 = vmatprep.subr.mxu0 0.0
    %2267 = vmatpush1.msra.mxu0 0.0
    %2268 = vmatprep.subr.mxu0 0.0
    %2269 = vmatpush1.msra.mxu0 0.0
    %2270 = vmatprep.mubr.f32.mxu0 0.0
    %2271 = vmatmul.mubr.f32.gmra.mrb[0].mxu0 %v2204
    %v2272 = vpop.f32.mrb[0].mxu0
    %v2273 = vadd.f32 0.0, %v2272
    %v2274 = vpop.f32.mrb[0].mxu0
    %v2275 = vadd.f32 0.0, %v2274
    %2276 = vdwg.mxu0
    %2278 = vrot.lane.b32.xlu0 %v2194, 96
    %v2279 = vpop.permute.xlu0 %2278
    %v2280 = vsel %vm66, %v2279, 0
    %2282 = vmatprep.subr.mxu0 0.0
    %2283 = vmatpush1.msra.mxu0 %v227
    %2284 = vmatprep.subr.mxu0 0.0
    %2285 = vmatpush1.msra.mxu0 %v229
    %2286 = vmatprep.subr.mxu0 0.0
    %2287 = vmatpush1.msra.mxu0 %v231
    %2288 = vmatprep.subr.mxu0 0.0
    %2289 = vmatpush1.msra.mxu0 %v233
    %2290 = vmatprep.subr.mxu0 0.0
    %2291 = vmatpush1.msra.mxu0 0.0
    %2292 = vmatprep.subr.mxu0 0.0
    %2293 = vmatpush1.msra.mxu0 0.0
    %2294 = vmatprep.subr.mxu0 0.0
    %2295 = vmatpush1.msra.mxu0 0.0
    %2296 = vmatprep.subr.mxu0 0.0
    %2297 = vmatpush1.msra.mxu0 0.0
    %2298 = vmatprep.subr.mxu0 0.0
    %2299 = vmatpush1.msra.mxu0 0.0
    %2300 = vmatprep.subr.mxu0 0.0
    %2301 = vmatpush1.msra.mxu0 0.0
    %2302 = vmatprep.subr.mxu0 0.0
    %2303 = vmatpush1.msra.mxu0 0.0
    %2304 = vmatprep.subr.mxu0 0.0
    %2305 = vmatpush1.msra.mxu0 0.0
    %2306 = vmatprep.subr.mxu0 0.0
    %2307 = vmatpush1.msra.mxu0 0.0
    %2308 = vmatprep.subr.mxu0 0.0
    %2309 = vmatpush1.msra.mxu0 0.0
    %2310 = vmatprep.subr.mxu0 0.0
    %2311 = vmatpush1.msra.mxu0 0.0
    %2312 = vmatprep.subr.mxu0 0.0
    %2313 = vmatpush1.msra.mxu0 0.0
    %2314 = vmatprep.subr.mxu0 0.0
    %2315 = vmatpush1.msra.mxu0 0.0
    %2316 = vmatprep.subr.mxu0 0.0
    %2317 = vmatpush1.msra.mxu0 0.0
    %2318 = vmatprep.subr.mxu0 0.0
    %2319 = vmatpush1.msra.mxu0 0.0
    %2320 = vmatprep.subr.mxu0 0.0
    %2321 = vmatpush1.msra.mxu0 0.0
    %2322 = vmatprep.subr.mxu0 0.0
    %2323 = vmatpush1.msra.mxu0 0.0
    %2324 = vmatprep.subr.mxu0 0.0
    %2325 = vmatpush1.msra.mxu0 0.0
    %2326 = vmatprep.subr.mxu0 0.0
    %2327 = vmatpush1.msra.mxu0 0.0
    %2328 = vmatprep.subr.mxu0 0.0
    %2329 = vmatpush1.msra.mxu0 0.0
    %2330 = vmatprep.subr.mxu0 0.0
    %2331 = vmatpush1.msra.mxu0 0.0
    %2332 = vmatprep.subr.mxu0 0.0
    %2333 = vmatpush1.msra.mxu0 0.0
    %2334 = vmatprep.subr.mxu0 0.0
    %2335 = vmatpush1.msra.mxu0 0.0
    %2336 = vmatprep.subr.mxu0 0.0
    %2337 = vmatpush1.msra.mxu0 0.0
    %2338 = vmatprep.subr.mxu0 0.0
    %2339 = vmatpush1.msra.mxu0 0.0
    %2340 = vmatprep.subr.mxu0 0.0
    %2341 = vmatpush1.msra.mxu0 0.0
    %2342 = vmatprep.subr.mxu0 0.0
    %2343 = vmatpush1.msra.mxu0 0.0
    %2344 = vmatprep.subr.mxu0 0.0
    %2345 = vmatpush1.msra.mxu0 0.0
    %2346 = vmatprep.mubr.f32.mxu0 0.0
    %2347 = vmatmul.mubr.f32.gmra.mrb[0].mxu0 %v2280
    %v2348 = vpop.f32.mrb[0].mxu0
    %v2349 = vadd.f32 0.0, %v2348
    %v2350 = vpop.f32.mrb[0].mxu0
    %2351 = vdwg.mxu0
    %v2352 = vadd.f32 %v2275, %v2349
    %v2353 = vadd.f32 %v2352, %v311
    %v2356 = vunpack.c.l.s4 1966171168
    %v2357 = vunpack.c.0.s8 %v2356
    %v2358 = vlaneseq
    %v2359 = vshrl.u32 %v2358, 7
    %v2360 = vsub.s32 %v2357, %v2359
    %v2361 = vrot.slane %v2353, %v2360
    %v2362 = vcombine.high %v2361, %v2361
    %v2364 = vunpack.c.l.s4 1966171168
    %v2365 = vunpack.c.0.s8 %v2364
    %v2366 = vlaneseq
    %v2367 = vshrl.u32 %v2366, 7
    %v2368 = vsub.s32 %v2365, %v2367
    %v2369 = vrot.slane %v2361, %v2368
    %v2371 = vunpack.c.l.s4 1966171168
    %v2372 = vunpack.c.0.s8 %v2371
    %v2373 = vlaneseq
    %v2374 = vshrl.u32 %v2373, 7
    %v2375 = vsub.s32 %v2372, %v2374
    %v2376 = vrot.slane %v2362, %v2375
    %v2377 = vlaneseq
    %v2378 = vshrl.u32 %v2377, 7
    %v2379 = vsub.s32 0, %v2378
    %v2380 = vrot.slane %v2369, %v2379
    %v2381 = vlaneseq
    %v2382 = vshrl.u32 %v2381, 7
    %v2383 = vsub.s32 0, %v2382
    %v2384 = vrot.slane %v2376, %v2383
    %v2387 = vadd.f32 %v2380, %v140
    %v2388 = vadd.f32 %v2384, %v145
    %v2389 = vtanh.pop %v2387
    %v2390 = vtanh.pop %v2388
    %v2391 = vmul.f32 %v2389, %v352
    %v2392 = vmul.f32 %v2390, %v352
    %v2393 = vsel %vm66, %v2391, 0.0
    %2394 = vadd.xlane.f32.xlu0 %v2393
    %v2395 = vpop.xlane.xlu0 %2394
    %v2396 = vsel %vm66, %v2392, 0.0
    %2397 = vadd.xlane.f32.xlu0 %v2396
    %v2398 = vpop.xlane.xlu0 %2397
    %v2401 = vlaneseq
    %v2402 = vshrl.u32 %v2401, 7
    %v2403 = vsub.s32 %v365, %v2402
    %v2404 = vrot.slane %v2395, %v2403
    %v2405 = vlaneseq
    %v2406 = vshrl.u32 %v2405, 7
    %v2407 = vsub.s32 %v365, %v2406
    %v2408 = vrot.slane %v2398, %v2407
    %v2409 = vsel %vm374, %v2408, %v2404
    %v2411 = vsel %vm377, %v2409, -inf
    %2412 = vmax.xlane.f32.xlu0 %v2411
    %v2413 = vpop.xlane.xlu0 %2412
    %v2415 = vlaneseq
    %v2416 = vshrl.u32 %v2415, 7
    %v2417 = vsub.s32 0, %v2416
    %v2418 = vrot.slane %v2413, %v2417
    %v2419 = vlaneseq
    %v2420 = vshrl.u32 %v2419, 7
    %v2421 = vsub.s32 1, %v2420
    %v2422 = vrot.slane %v2413, %v2421
    %v2425 = vsub.f32 %v2395, %v2418
    %v2426 = vsub.f32 %v2398, %v2422
    %v2427 = vmul.f32 %v2425, 1.442695
    %v2428 = vpow.pop %v2427
    %v2429 = vmul.f32 %v2426, 1.442695
    %v2430 = vpow.pop %v2429
    %2433 = vset.pattern.permute.xlu0 0
    %2434 = vperm.xlu0 %2433, %v2428
    %v2435 = vpop.permute.xlu0 %2434
    %2436 = vset.pattern.permute.xlu0 0
    %2437 = vperm.xlu0 %2436, %v2430
    %v2438 = vpop.permute.xlu0 %2437
    %v2439 = vlaneseq
    %v2440 = vshrl.u32 %v2439, 7
    %v2441 = vsub.s32 %v365, %v2440
    %v2442 = vrot.slane %v2435, %v2441
    %v2443 = vlaneseq
    %v2444 = vshrl.u32 %v2443, 7
    %v2445 = vsub.s32 %v365, %v2444
    %v2446 = vrot.slane %v2438, %v2445
    %v2447 = vsel %vm374, %v2446, %v2442
    %v2449 = vsel %vm377, %v2447, 0.0
    %2450 = vadd.xlane.f32.xlu0 %v2449
    %v2451 = vpop.xlane.xlu0 %2450
    %v2452 = vrcp.pop %v2451
    %v2454 = vlaneseq
    %v2455 = vshrl.u32 %v2454, 7
    %v2456 = vsub.s32 0, %v2455
    %v2457 = vrot.slane %v2452, %v2456
    %v2458 = vlaneseq
    %v2459 = vshrl.u32 %v2458, 7
    %v2460 = vsub.s32 1, %v2459
    %v2461 = vrot.slane %v2452, %v2460
    %v2464 = vmul.f32 %v2428, %v2457
    %v2465 = vmul.f32 %v2430, %v2461
    %2467 = vset.pattern.permute.xlu0 0
    %2468 = vperm.xlu0 %2467, %v2464
    %v2469 = vpop.permute.xlu0 %2468
    %2472 = vset.pattern.permute.xlu0 0
    %2473 = vperm.xlu0 %2472, %v2465
    %v2474 = vpop.permute.xlu0 %2473
    %v2476 = vmul.f32 %v2469, %v64
    %v2477 = vmul.f32 %v2474, %v65
    %v2478 = vsel %vm66, %v2476, 0.0
    %v2479 = vrot.slane %v2478, 4
    %v2480 = vadd.f32 %v2478, %v2479
    %v2481 = vrot.slane %v2480, 2
    %v2482 = vadd.f32 %v2480, %v2481
    %v2483 = vrot.slane %v2482, 1
    %v2484 = vadd.f32 %v2482, %v2483
    %v2485 = vsel %vm66, %v2477, 0.0
    %v2486 = vrot.slane %v2485, 4
    %v2487 = vadd.f32 %v2485, %v2486
    %v2488 = vrot.slane %v2487, 2
    %v2489 = vadd.f32 %v2487, %v2488
    %v2490 = vrot.slane %v2489, 1
    %v2491 = vadd.f32 %v2489, %v2490
    %s2492 = scalar_lea.vmem %s1, 12
    %v2493 = vld [vmem:[%s2492] sm:$0x3]
    %v2494 = vmul.f32 %v2493, %v460
    %v2495 = vmul.f32 %v2484, %v463
    %v2496 = vmul.f32 %v2491, %v463
    %v2499 = vrot.slane %v2496, 7
    %v2500 = vsel %vm374, %v2499, %v2495
    %v2502 = vsel %vm472, %v2500, 0.0
    %2503 = vadd.xlane.f32.xlu0 %v2502
    %v2504 = vpop.xlane.xlu0 %2503
    %v2505 = vadd.f32 %v2494, %v2504
    %v2506 = vadd.f32 %v2505, %v477
    %2508 = vset.pattern.permute.xlu0 0
    %2509 = vperm.xlu0 %2508, %v2506
    %v2510 = vpop.permute.xlu0 %2509
    %v2512 = vmul.f32 %v2510, %v58
    %v2513 = vadd.f32 %v2273, %v2512
    %v2514 = vadd.f32 %v2513, %v60
    %v2515 = vxor.u32 %v2514, 2147483648
    %v2516 = vmul.f32 %v2515, 1.442695
    %v2517 = vpow.pop %v2516
    %v2518 = vadd.f32 %v2517, 1.0
    %v2519 = vrcp.pop %v2518
    %v2520 = vmul.f32 1.0, %v2519
    %v2521 = vtanh.pop %v2514
    %v2522 = vmul.f32 %v2520, %v2194
    %2524 = vrot.lane.b32.xlu0 %v2521, 64
    %v2525 = vpop.permute.xlu0 %2524
    %v2527 = vmul.f32 %v2520, %v2525
    %2529 = vrot.lane.b32.xlu0 %v2527, 32
    %v2530 = vpop.permute.xlu0 %2529
    %v2532 = vadd.f32 %v2522, %v2530
    %v2533 = vtanh.pop %v2532
    %2535 = vrot.lane.b32.xlu0 %v2533, 64
    %v2536 = vpop.permute.xlu0 %2535
    %v2538 = vmul.f32 %v2520, %v2536
    %2540 = vrot.lane.b32.xlu0 %v57, 96
    %v2541 = vpop.permute.xlu0 %2540
    %v2543 = vmul.f32 %v2538, %v2541
    %2545 = vrot.lane.b32.xlu0 %v59, 32
    %v2546 = vpop.permute.xlu0 %2545
    %v2548 = vmul.f32 %v2532, %v2546
    %2550 = vrot.lane.b32.xlu0 %v2548, 64
    %v2551 = vpop.permute.xlu0 %2550
    %v2553 = vadd.f32 %v2543, %v2551
    %2555 = vrot.lane.b32.xlu0 %v2553, 32
    %v2556 = vpop.permute.xlu0 %2555
    %v2558 = vsel %vm472, %v2556, 0.0
    %2559 = vadd.xlane.f32.xlu0 %v2558
    %v2560 = vpop.xlane.xlu0 %2559
    %v2561 = vstv %s63
    %v2562 = vadd.f32 %v2560, %v2561
    %vm2563 = vcmask 1024
    %2564 = vst.msk [vmem:[%s4] sm:$0x3] %vm2563, %v2562
    // Predicated region
    $region26: #{tpu_custom_call.1} parent=1 // pred_check
      _
    $region27: #{tpu_custom_call.1} parent=1 // pred_check_branch
      %2566 = sbr.rel (0) target = $region29
    $region28: #{tpu_custom_call.1} parent=1 // pred_region
      _
    $region29: #{tpu_custom_call.1} parent=1 // pred_fallthru
      _
    // Predicated region
    $region30: #{tpu_custom_call.1} parent=1 // pred_check
      _
    $region31: #{tpu_custom_call.1} parent=1 // pred_check_branch
      %2568 = sbr.rel (0) target = $region33
    $region32: #{tpu_custom_call.1} parent=1 // pred_region
      _
    $region33: #{tpu_custom_call.1} parent=1 // pred_fallthru
      _
    %2569 = vsyncpa [#allocation3], 1
    %2570 = vsyncpa [#allocation4], 1

</llo_original>
